<compile_context>
chip_gen: v6e
topology: v6e:2x2x1
jax: 0.10.0
libtpu: 0.0.40
codegen_flags: <defaults>
</compile_context>

<pallas_src>
import functools

import jax
import jax.numpy as jnp
from jax.experimental import pallas as pl
from jax.experimental.pallas import tpu as pltpu

HIDDEN = 128   # fixed by the module (all internal convs are 128 channels)
OUT_CH = 4     # end_conv2 output channels
LANE = 128


def _gelu(x):
    # exact (erf-based) gelu, matching F.gelu default
    return 0.5 * x * (1.0 + jax.lax.erf(x * 0.7071067811865476))


# ----------------------------------------------------------------------------
# Fused kernel: start_conv + full WaveNet stack + head for one batch tile.
# ----------------------------------------------------------------------------
def fused_wavenet_kernel(x_ref, w_start_ref, b_start_ref,
                         w_fg0_ref, w_fg1_ref, b_fg_ref,
                         w_sr_ref, b_sr_ref,
                         w_end1_ref, b_end1_ref, w_end2_ref, b_end2_ref,
                         o_ref, *, tile_b, seq_len, dilations):
    C = HIDDEN
    M = tile_b * seq_len

    # --- start conv (1x1): (M, Dpad) @ (Dpad, 128) + b ----------------------
    x = x_ref[...].reshape(M, x_ref.shape[-1])                    # bf16, lane-dense
    h = jnp.dot(x, w_start_ref[...],
                preferred_element_type=jnp.float32) + b_start_ref[...]
    skip = jnp.zeros((M, C), jnp.float32)

    # position-within-sequence index + causal masks, hoisted out of the layer
    # loop (only num_layers distinct dilations exist).
    t_idx = jax.lax.broadcasted_iota(jnp.int32, (M, 1), 0) % seq_len
    masks = {d: (t_idx >= d) for d in sorted(set(dilations))}

    # --- WaveNet layers (statically unrolled; dilations are compile-time) ---
    for l, d in enumerate(dilations):
        # causal dilated shift: rows with t < d must be zero.  Rolling the
        # flattened (tile_b*T) sublane axis by d is correct for t >= d, and
        # rows contaminated across sequence boundaries are exactly the masked
        # t < d rows, so the mask fixes both at once.
        h_shift = jnp.where(masks[d], pltpu.roll(h, shift=d, axis=0), 0.0)

        # fused filter/gate: two (M,128)@(128,256) MXU passes accumulated
        # (cols 0:128 -> filter, 128:256 -> gate); operands bf16, accum f32.
        pre = (jnp.dot(h_shift.astype(jnp.bfloat16), w_fg0_ref[l],
                       preferred_element_type=jnp.float32)
               + jnp.dot(h.astype(jnp.bfloat16), w_fg1_ref[l],
                         preferred_element_type=jnp.float32)
               + b_fg_ref[l])
        gated = jnp.tanh(pre[:, :C]) * jax.nn.sigmoid(pre[:, C:])

        # fused skip | residual 1x1 convs: one (M,128)@(128,256) MXU pass
        sr = jnp.dot(gated.astype(jnp.bfloat16), w_sr_ref[l],
                     preferred_element_type=jnp.float32) + b_sr_ref[l]
        skip = skip + sr[:, :C]                                   # running skip sum
        h = h + sr[:, C:]                                         # residual connection

    # --- head (fused so skip_sum never touches HBM) --------------------------
    hh = _gelu(skip)                                              # gelu(skip_sum)
    hh = _gelu(jnp.dot(hh.astype(jnp.bfloat16), w_end1_ref[...],
                       preferred_element_type=jnp.float32) + b_end1_ref[...])
    # end_conv2 with weights zero-padded to 128 output lanes -> lane-dense
    y = jnp.dot(hh.astype(jnp.bfloat16), w_end2_ref[...],
                preferred_element_type=jnp.float32) + b_end2_ref[...]   # (M, 128)
    # adaptive_avg_pool1d over T (whole sequences live in this tile)
    o_ref[...] = jnp.mean(y.reshape(tile_b, seq_len, C), axis=1, keepdims=True)


# ----------------------------------------------------------------------------
# One-time parameter packing (outside the per-call path)
# ----------------------------------------------------------------------------
def pack_params(params, *, input_dim):
    """Stack per-layer weights into fused, MXU-friendly bf16 arrays (once)."""
    d_pad = -(-input_dim // LANE) * LANE
    layers = params["layers"]
    w_fg0 = jnp.stack([jnp.concatenate([lp["wf0"], lp["wg0"]], axis=1)
                       for lp in layers]).astype(jnp.bfloat16)       # (L,128,256) shifted tap
    w_fg1 = jnp.stack([jnp.concatenate([lp["wf1"], lp["wg1"]], axis=1)
                       for lp in layers]).astype(jnp.bfloat16)       # (L,128,256) current tap
    b_fg = jnp.stack([jnp.concatenate([lp["bf"], lp["bg"]], axis=1)
                      for lp in layers])                             # (L,1,256) f32
    w_sr = jnp.stack([jnp.concatenate([lp["ws"], lp["wr"]], axis=1)
                      for lp in layers]).astype(jnp.bfloat16)        # (L,128,256)
    b_sr = jnp.stack([jnp.concatenate([lp["bs"], lp["br"]], axis=1)
                      for lp in layers])                             # (L,1,256) f32
    return {
        "w_start": jnp.pad(params["w_start"],
                           ((0, d_pad - input_dim), (0, 0))).astype(jnp.bfloat16),
        "b_start": params["b_start"],
        "w_fg0": w_fg0, "w_fg1": w_fg1, "b_fg": b_fg,
        "w_sr": w_sr, "b_sr": b_sr,
        "w_end1": params["w_end1"].astype(jnp.bfloat16),
        "b_end1": params["b_end1"],
        "w_end2": jnp.pad(params["w_end2"],
                          ((0, 0), (0, HIDDEN - OUT_CH))).astype(jnp.bfloat16),
        "b_end2": jnp.pad(params["b_end2"], ((0, 0), (0, HIDDEN - OUT_CH))),
    }


def _choose_tile_b(batch, seq_len, target_rows=2048):
    """Largest divisor of batch with tile_b*T <= target_rows; prefer >= 2 grid
    steps so v7x's second TensorCore gets work.  target_rows ~ 2-4K keeps the
    f32 activation working set well under v7x's 64 MiB VMEM."""
    best = 1
    for tb in range(1, batch + 1):
        if batch % tb == 0 and tb * seq_len <= target_rows:
            best = tb
    if best == batch and batch > 1:
        for tb in range(batch - 1, 0, -1):
            if batch % tb == 0 and tb * seq_len <= target_rows:
                return tb
    return best


# ----------------------------------------------------------------------------
# Wrapper
# ----------------------------------------------------------------------------
def quantum_wavenet_forward(x, packed, *, num_blocks, num_layers, tile_b=None):
    B, T, din = x.shape
    L = num_blocks * num_layers
    dilations = tuple(2 ** (i % num_layers) for i in range(L))
    d_pad = packed["w_start"].shape[0]

    if tile_b is None:
        tile_b = _choose_tile_b(B, T)
    assert B % tile_b == 0, "batch must be divisible by tile_b"
    num_tiles = B // tile_b

    # lane-dense bf16 input: pad channels to a multiple of 128
    x_p = jnp.pad(x, ((0, 0), (0, 0), (0, d_pad - din))).astype(jnp.bfloat16)

    weight_names = ("w_start", "b_start", "w_fg0", "w_fg1", "b_fg",
                    "w_sr", "b_sr", "w_end1", "b_end1", "w_end2", "b_end2")

    def _const_map(ndim):
        zeros = (0,) * ndim
        return lambda i: zeros

    # full-array weight blocks with constant index maps: DMA'd once, resident
    # in VMEM across all batch-tile grid steps.
    weight_specs = [pl.BlockSpec(tuple(packed[n].shape), _const_map(packed[n].ndim))
                    for n in weight_names]

    pooled = pl.pallas_call(
        functools.partial(fused_wavenet_kernel,
                          tile_b=tile_b, seq_len=T, dilations=dilations),
        out_shape=jax.ShapeDtypeStruct((B, 1, HIDDEN), jnp.float32),
        grid=(num_tiles,),
        in_specs=[pl.BlockSpec((tile_b, T, d_pad), lambda i: (i, 0, 0))]
                 + weight_specs,
        out_specs=pl.BlockSpec((tile_b, 1, HIDDEN), lambda i: (i, 0, 0)),
        compiler_params=pltpu.CompilerParams(
            dimension_semantics=("parallel",),        # megacore sharding on v7x
            vmem_limit_bytes=48 * 1024 * 1024),       # safe on v7x's 64 MiB VMEM
    )(x_p, *[packed[n] for n in weight_names])

    # final per-column heads on the tiny (B, 4) tensor stay in plain JAX
    out = pooled[:, 0, :OUT_CH]
    return (out[:, 0],
            jax.nn.sigmoid(out[:, 1]),
            jax.nn.softplus(out[:, 2]),
            jax.nn.softplus(out[:, 3]))


# ----------------------------------------------------------------------------
# Deterministic parameter init (synthetic; shapes from the module __init__)
# ----------------------------------------------------------------------------
def init_params(key, input_dim, num_layers, num_blocks):
    scale = 0.05
    n_layers_total = num_blocks * num_layers
    keys = iter(jax.random.split(key, 6 + 10 * n_layers_total))

    def w(shape):
        return scale * jax.random.normal(next(keys), shape, jnp.float32)

    params = {
        "w_start": w((input_dim, HIDDEN)),
        "b_start": w((1, HIDDEN)),
        "layers": [],
    }
    for _ in range(n_layers_total):
        params["layers"].append({
            "wf0": w((HIDDEN, HIDDEN)), "wf1": w((HIDDEN, HIDDEN)), "bf": w((1, HIDDEN)),
            "wg0": w((HIDDEN, HIDDEN)), "wg1": w((HIDDEN, HIDDEN)), "bg": w((1, HIDDEN)),
            "ws": w((HIDDEN, HIDDEN)), "bs": w((1, HIDDEN)),
            "wr": w((HIDDEN, HIDDEN)), "br": w((1, HIDDEN)),
        })
    params["w_end1"] = w((HIDDEN, HIDDEN))
    params["b_end1"] = w((1, HIDDEN))
    params["w_end2"] = w((HIDDEN, OUT_CH))
    params["b_end2"] = w((1, OUT_CH))
    return params


if __name__ == "__main__":
    B, T, DIN = 2, 16, 32          # small shapes: batch=2, seq=16, input_dim=32
    NUM_LAYERS, NUM_BLOCKS = 3, 2  # scaled-down stack (dilations 1,2,4 per block)

    key = jax.random.PRNGKey(0)
    kx, kp = jax.random.split(key)
    x = jax.random.normal(kx, (B, T, DIN), jnp.float32)
    params = init_params(kp, DIN, NUM_LAYERS, NUM_BLOCKS)

    # one-time packing, hoisted out of the per-call path
    packed = pack_params(params, input_dim=DIN)

    fwd = jax.jit(functools.partial(quantum_wavenet_forward,
                                    num_blocks=NUM_BLOCKS,
                                    num_layers=NUM_LAYERS))
    mean, prob, sp1, sp2 = fwd(x, packed)
    jax.block_until_ready((mean, prob, sp1, sp2))

    assert mean.shape == (B,) and prob.shape == (B,)
    assert sp1.shape == (B,) and sp2.shape == (B,)
    print("KERNEL_OK")
</pallas_src>

<mosaic_0001>
module attributes {stable_mosaic.version = 11 : i64} {
  func.func @fused_wavenet_kernel(%arg0: i32, %arg1: memref<1x16x128xbf16, #tpu.memory_space<vmem>>, %arg2: memref<128x128xbf16, #tpu.memory_space<vmem>>, %arg3: memref<1x128xf32, #tpu.memory_space<vmem>>, %arg4: memref<6x128x256xbf16, #tpu.memory_space<vmem>>, %arg5: memref<6x128x256xbf16, #tpu.memory_space<vmem>>, %arg6: memref<6x1x256xf32, #tpu.memory_space<vmem>>, %arg7: memref<6x128x256xbf16, #tpu.memory_space<vmem>>, %arg8: memref<6x1x256xf32, #tpu.memory_space<vmem>>, %arg9: memref<128x128xbf16, #tpu.memory_space<vmem>>, %arg10: memref<1x128xf32, #tpu.memory_space<vmem>>, %arg11: memref<128x128xbf16, #tpu.memory_space<vmem>>, %arg12: memref<1x128xf32, #tpu.memory_space<vmem>>, %arg13: memref<1x1x128xf32, #tpu.memory_space<vmem>>) attributes {dimension_semantics = [#tpu.dimension_semantics<parallel>], iteration_bounds = array<i64: 2>, scalar_prefetch = 0 : i64, scratch_operands = 0 : i64, tpu.core_type = #tpu.core_type<tc>, window_params = [{transform_indices = @transform_0, window_bounds = array<i64: 1, 16, 128>}, {pipeline_mode = #tpu.pipeline_mode<synchronous>, transform_indices = @transform_1, window_bounds = array<i64: 128, 128>}, {pipeline_mode = #tpu.pipeline_mode<synchronous>, transform_indices = @transform_2, window_bounds = array<i64: 1, 128>}, {pipeline_mode = #tpu.pipeline_mode<synchronous>, transform_indices = @transform_3, window_bounds = array<i64: 6, 128, 256>}, {pipeline_mode = #tpu.pipeline_mode<synchronous>, transform_indices = @transform_4, window_bounds = array<i64: 6, 128, 256>}, {pipeline_mode = #tpu.pipeline_mode<synchronous>, transform_indices = @transform_5, window_bounds = array<i64: 6, 1, 256>}, {pipeline_mode = #tpu.pipeline_mode<synchronous>, transform_indices = @transform_6, window_bounds = array<i64: 6, 128, 256>}, {pipeline_mode = #tpu.pipeline_mode<synchronous>, transform_indices = @transform_7, window_bounds = array<i64: 6, 1, 256>}, {pipeline_mode = #tpu.pipeline_mode<synchronous>, transform_indices = @transform_8, window_bounds = array<i64: 128, 128>}, {pipeline_mode = #tpu.pipeline_mode<synchronous>, transform_indices = @transform_9, window_bounds = array<i64: 1, 128>}, {pipeline_mode = #tpu.pipeline_mode<synchronous>, transform_indices = @transform_10, window_bounds = array<i64: 128, 128>}, {pipeline_mode = #tpu.pipeline_mode<synchronous>, transform_indices = @transform_11, window_bounds = array<i64: 1, 128>}, {transform_indices = @transform_12, window_bounds = array<i64: 1, 1, 128>}]} {
    %c0 = arith.constant 0 : index
    %c0_0 = arith.constant 0 : index
    %c0_1 = arith.constant 0 : index
    %0 = vector.load %arg1[%c0, %c0_0, %c0_1] : memref<1x16x128xbf16, #tpu.memory_space<vmem>>, vector<1x16x128xbf16>
    %1 = vector.shape_cast %0 : vector<1x16x128xbf16> to vector<16x128xbf16>
    %c0_2 = arith.constant 0 : index
    %c0_3 = arith.constant 0 : index
    %2 = vector.load %arg2[%c0_2, %c0_3] : memref<128x128xbf16, #tpu.memory_space<vmem>>, vector<128x128xbf16>
    %cst = arith.constant dense<0.000000e+00> : vector<16x128xf32>
    %3 = tpu.matmul %1, %2, %cst {dimension_numbers = #tpu.dot_dimension_numbers<[1], [0], [0], [1], [0, 0, 1, 1], [], []>} : vector<16x128xbf16>, vector<128x128xbf16>, vector<16x128xf32> -> vector<16x128xf32>
    %c0_4 = arith.constant 0 : index
    %c0_5 = arith.constant 0 : index
    %4 = vector.load %arg3[%c0_4, %c0_5] : memref<1x128xf32, #tpu.memory_space<vmem>>, vector<1x128xf32>
    %5 = vector.broadcast %4 : vector<1x128xf32> to vector<16x128xf32>
    %6 = arith.addf %3, %5 : vector<16x128xf32>
    %cst_6 = arith.constant 0.000000e+00 : f32
    %7 = vector.broadcast %cst_6 : f32 to vector<16x128xf32>
    %8 = tpu.iota {dimensions = array<i32: 0>} : vector<16x1xi32>
    %c16_i32 = arith.constant 16 : i32
    %c0_i32 = arith.constant 0 : i32
    %9 = arith.cmpi eq, %c16_i32, %c0_i32 : i32
    %c1_i32 = arith.constant 1 : i32
    %10 = arith.select %9, %c1_i32, %c16_i32 : i32
    %11 = vector.broadcast %10 : i32 to vector<16x1xi32>
    %12 = arith.remsi %8, %11 : vector<16x1xi32>
    %c0_i32_7 = arith.constant 0 : i32
    %13 = vector.broadcast %c0_i32_7 : i32 to vector<16x1xi32>
    %14 = arith.cmpi ne, %12, %13 : vector<16x1xi32>
    %c0_i32_8 = arith.constant 0 : i32
    %15 = vector.broadcast %c0_i32_8 : i32 to vector<16x1xi32>
    %16 = arith.cmpi slt, %12, %15 : vector<16x1xi32>
    %c0_i32_9 = arith.constant 0 : i32
    %17 = arith.cmpi slt, %10, %c0_i32_9 : i32
    %18 = vector.broadcast %17 : i1 to vector<16x1xi1>
    %19 = vector.broadcast %18 : vector<16x1xi1> to vector<16x1xi1>
    %20 = arith.xori %16, %19 : vector<16x1xi1>
    %21 = arith.andi %20, %14 : vector<16x1xi1>
    %22 = vector.broadcast %10 : i32 to vector<16x1xi32>
    %23 = arith.addi %12, %22 : vector<16x1xi32>
    %24 = arith.select %21, %23, %12 : vector<16x1xi1>, vector<16x1xi32>
    %c1_i32_10 = arith.constant 1 : i32
    %25 = vector.broadcast %c1_i32_10 : i32 to vector<16x1xi32>
    %26 = arith.cmpi sge, %24, %25 : vector<16x1xi32>
    %c2_i32 = arith.constant 2 : i32
    %27 = vector.broadcast %c2_i32 : i32 to vector<16x1xi32>
    %28 = arith.cmpi sge, %24, %27 : vector<16x1xi32>
    %c4_i32 = arith.constant 4 : i32
    %29 = vector.broadcast %c4_i32 : i32 to vector<16x1xi32>
    %30 = arith.cmpi sge, %24, %29 : vector<16x1xi32>
    %c1_i32_11 = arith.constant 1 : i32
    %31 = tpu.dynamic_rotate %6 by %c1_i32_11 dim 0 : vector<16x128xf32>, i32 -> vector<16x128xf32>
    %cst_12 = arith.constant 0.000000e+00 : f32
    %32 = vector.shape_cast %26 : vector<16x1xi1> to vector<16x1xi1>
    %33 = vector.broadcast %32 : vector<16x1xi1> to vector<16x128xi1>
    %34 = vector.broadcast %cst_12 : f32 to vector<16x128xf32>
    %35 = arith.select %33, %31, %34 : vector<16x128xi1>, vector<16x128xf32>
    %36 = arith.truncf %35 : vector<16x128xf32> to vector<16x128xbf16>
    %c0_13 = arith.constant 0 : index
    %c0_14 = arith.constant 0 : index
    %c0_15 = arith.constant 0 : index
    %37 = vector.load %arg4[%c0_13, %c0_14, %c0_15] : memref<6x128x256xbf16, #tpu.memory_space<vmem>>, vector<1x128x256xbf16>
    %38 = vector.shape_cast %37 : vector<1x128x256xbf16> to vector<128x256xbf16>
    %cst_16 = arith.constant dense<0.000000e+00> : vector<16x256xf32>
    %39 = tpu.matmul %36, %38, %cst_16 {dimension_numbers = #tpu.dot_dimension_numbers<[1], [0], [0], [1], [0, 0, 1, 1], [], []>} : vector<16x128xbf16>, vector<128x256xbf16>, vector<16x256xf32> -> vector<16x256xf32>
    %40 = arith.truncf %6 : vector<16x128xf32> to vector<16x128xbf16>
    %c0_17 = arith.constant 0 : index
    %c0_18 = arith.constant 0 : index
    %c0_19 = arith.constant 0 : index
    %41 = vector.load %arg5[%c0_17, %c0_18, %c0_19] : memref<6x128x256xbf16, #tpu.memory_space<vmem>>, vector<1x128x256xbf16>
    %42 = vector.shape_cast %41 : vector<1x128x256xbf16> to vector<128x256xbf16>
    %cst_20 = arith.constant dense<0.000000e+00> : vector<16x256xf32>
    %43 = tpu.matmul %40, %42, %cst_20 {dimension_numbers = #tpu.dot_dimension_numbers<[1], [0], [0], [1], [0, 0, 1, 1], [], []>} : vector<16x128xbf16>, vector<128x256xbf16>, vector<16x256xf32> -> vector<16x256xf32>
    %44 = arith.addf %39, %43 : vector<16x256xf32>
    %c0_21 = arith.constant 0 : index
    %c0_22 = arith.constant 0 : index
    %c0_23 = arith.constant 0 : index
    %45 = vector.load %arg6[%c0_21, %c0_22, %c0_23] : memref<6x1x256xf32, #tpu.memory_space<vmem>>, vector<1x1x256xf32>
    %46 = vector.shape_cast %45 : vector<1x1x256xf32> to vector<1x256xf32>
    %47 = vector.broadcast %46 : vector<1x256xf32> to vector<16x256xf32>
    %48 = arith.addf %44, %47 : vector<16x256xf32>
    %49 = vector.extract_strided_slice %48 {offsets = [0, 0], sizes = [16, 128], strides = [1, 1]} : vector<16x256xf32> to vector<16x128xf32>
    %50 = math.tanh %49 : vector<16x128xf32>
    %51 = vector.extract_strided_slice %48 {offsets = [0, 128], sizes = [16, 128], strides = [1, 1]} : vector<16x256xf32> to vector<16x128xf32>
    %52 = arith.negf %51 : vector<16x128xf32>
    %53 = math.exp %52 : vector<16x128xf32>
    %cst_24 = arith.constant 1.000000e+00 : f32
    %54 = vector.broadcast %cst_24 : f32 to vector<16x128xf32>
    %55 = arith.addf %54, %53 : vector<16x128xf32>
    %56 = arith.divf %54, %55 : vector<16x128xf32>
    %57 = arith.mulf %50, %56 : vector<16x128xf32>
    %58 = arith.truncf %57 : vector<16x128xf32> to vector<16x128xbf16>
    %c0_25 = arith.constant 0 : index
    %c0_26 = arith.constant 0 : index
    %c0_27 = arith.constant 0 : index
    %59 = vector.load %arg7[%c0_25, %c0_26, %c0_27] : memref<6x128x256xbf16, #tpu.memory_space<vmem>>, vector<1x128x256xbf16>
    %60 = vector.shape_cast %59 : vector<1x128x256xbf16> to vector<128x256xbf16>
    %cst_28 = arith.constant dense<0.000000e+00> : vector<16x256xf32>
    %61 = tpu.matmul %58, %60, %cst_28 {dimension_numbers = #tpu.dot_dimension_numbers<[1], [0], [0], [1], [0, 0, 1, 1], [], []>} : vector<16x128xbf16>, vector<128x256xbf16>, vector<16x256xf32> -> vector<16x256xf32>
    %c0_29 = arith.constant 0 : index
    %c0_30 = arith.constant 0 : index
    %c0_31 = arith.constant 0 : index
    %62 = vector.load %arg8[%c0_29, %c0_30, %c0_31] : memref<6x1x256xf32, #tpu.memory_space<vmem>>, vector<1x1x256xf32>
    %63 = vector.shape_cast %62 : vector<1x1x256xf32> to vector<1x256xf32>
    %64 = vector.broadcast %63 : vector<1x256xf32> to vector<16x256xf32>
    %65 = arith.addf %61, %64 : vector<16x256xf32>
    %66 = vector.extract_strided_slice %65 {offsets = [0, 0], sizes = [16, 128], strides = [1, 1]} : vector<16x256xf32> to vector<16x128xf32>
    %67 = arith.addf %7, %66 : vector<16x128xf32>
    %68 = vector.extract_strided_slice %65 {offsets = [0, 128], sizes = [16, 128], strides = [1, 1]} : vector<16x256xf32> to vector<16x128xf32>
    %69 = arith.addf %6, %68 : vector<16x128xf32>
    %c2_i32_32 = arith.constant 2 : i32
    %70 = tpu.dynamic_rotate %69 by %c2_i32_32 dim 0 : vector<16x128xf32>, i32 -> vector<16x128xf32>
    %cst_33 = arith.constant 0.000000e+00 : f32
    %71 = vector.shape_cast %28 : vector<16x1xi1> to vector<16x1xi1>
    %72 = vector.broadcast %71 : vector<16x1xi1> to vector<16x128xi1>
    %73 = vector.broadcast %cst_33 : f32 to vector<16x128xf32>
    %74 = arith.select %72, %70, %73 : vector<16x128xi1>, vector<16x128xf32>
    %75 = arith.truncf %74 : vector<16x128xf32> to vector<16x128xbf16>
    %c1 = arith.constant 1 : index
    %c0_34 = arith.constant 0 : index
    %c0_35 = arith.constant 0 : index
    %76 = vector.load %arg4[%c1, %c0_34, %c0_35] : memref<6x128x256xbf16, #tpu.memory_space<vmem>>, vector<1x128x256xbf16>
    %77 = vector.shape_cast %76 : vector<1x128x256xbf16> to vector<128x256xbf16>
    %cst_36 = arith.constant dense<0.000000e+00> : vector<16x256xf32>
    %78 = tpu.matmul %75, %77, %cst_36 {dimension_numbers = #tpu.dot_dimension_numbers<[1], [0], [0], [1], [0, 0, 1, 1], [], []>} : vector<16x128xbf16>, vector<128x256xbf16>, vector<16x256xf32> -> vector<16x256xf32>
    %79 = arith.truncf %69 : vector<16x128xf32> to vector<16x128xbf16>
    %c1_37 = arith.constant 1 : index
    %c0_38 = arith.constant 0 : index
    %c0_39 = arith.constant 0 : index
    %80 = vector.load %arg5[%c1_37, %c0_38, %c0_39] : memref<6x128x256xbf16, #tpu.memory_space<vmem>>, vector<1x128x256xbf16>
    %81 = vector.shape_cast %80 : vector<1x128x256xbf16> to vector<128x256xbf16>
    %cst_40 = arith.constant dense<0.000000e+00> : vector<16x256xf32>
    %82 = tpu.matmul %79, %81, %cst_40 {dimension_numbers = #tpu.dot_dimension_numbers<[1], [0], [0], [1], [0, 0, 1, 1], [], []>} : vector<16x128xbf16>, vector<128x256xbf16>, vector<16x256xf32> -> vector<16x256xf32>
    %83 = arith.addf %78, %82 : vector<16x256xf32>
    %c1_41 = arith.constant 1 : index
    %c0_42 = arith.constant 0 : index
    %c0_43 = arith.constant 0 : index
    %84 = vector.load %arg6[%c1_41, %c0_42, %c0_43] : memref<6x1x256xf32, #tpu.memory_space<vmem>>, vector<1x1x256xf32>
    %85 = vector.shape_cast %84 : vector<1x1x256xf32> to vector<1x256xf32>
    %86 = vector.broadcast %85 : vector<1x256xf32> to vector<16x256xf32>
    %87 = arith.addf %83, %86 : vector<16x256xf32>
    %88 = vector.extract_strided_slice %87 {offsets = [0, 0], sizes = [16, 128], strides = [1, 1]} : vector<16x256xf32> to vector<16x128xf32>
    %89 = math.tanh %88 : vector<16x128xf32>
    %90 = vector.extract_strided_slice %87 {offsets = [0, 128], sizes = [16, 128], strides = [1, 1]} : vector<16x256xf32> to vector<16x128xf32>
    %91 = arith.negf %90 : vector<16x128xf32>
    %92 = math.exp %91 : vector<16x128xf32>
    %cst_44 = arith.constant 1.000000e+00 : f32
    %93 = vector.broadcast %cst_44 : f32 to vector<16x128xf32>
    %94 = arith.addf %93, %92 : vector<16x128xf32>
    %95 = arith.divf %93, %94 : vector<16x128xf32>
    %96 = arith.mulf %89, %95 : vector<16x128xf32>
    %97 = arith.truncf %96 : vector<16x128xf32> to vector<16x128xbf16>
    %c1_45 = arith.constant 1 : index
    %c0_46 = arith.constant 0 : index
    %c0_47 = arith.constant 0 : index
    %98 = vector.load %arg7[%c1_45, %c0_46, %c0_47] : memref<6x128x256xbf16, #tpu.memory_space<vmem>>, vector<1x128x256xbf16>
    %99 = vector.shape_cast %98 : vector<1x128x256xbf16> to vector<128x256xbf16>
    %cst_48 = arith.constant dense<0.000000e+00> : vector<16x256xf32>
    %100 = tpu.matmul %97, %99, %cst_48 {dimension_numbers = #tpu.dot_dimension_numbers<[1], [0], [0], [1], [0, 0, 1, 1], [], []>} : vector<16x128xbf16>, vector<128x256xbf16>, vector<16x256xf32> -> vector<16x256xf32>
    %c1_49 = arith.constant 1 : index
    %c0_50 = arith.constant 0 : index
    %c0_51 = arith.constant 0 : index
    %101 = vector.load %arg8[%c1_49, %c0_50, %c0_51] : memref<6x1x256xf32, #tpu.memory_space<vmem>>, vector<1x1x256xf32>
    %102 = vector.shape_cast %101 : vector<1x1x256xf32> to vector<1x256xf32>
    %103 = vector.broadcast %102 : vector<1x256xf32> to vector<16x256xf32>
    %104 = arith.addf %100, %103 : vector<16x256xf32>
    %105 = vector.extract_strided_slice %104 {offsets = [0, 0], sizes = [16, 128], strides = [1, 1]} : vector<16x256xf32> to vector<16x128xf32>
    %106 = arith.addf %67, %105 : vector<16x128xf32>
    %107 = vector.extract_strided_slice %104 {offsets = [0, 128], sizes = [16, 128], strides = [1, 1]} : vector<16x256xf32> to vector<16x128xf32>
    %108 = arith.addf %69, %107 : vector<16x128xf32>
    %c4_i32_52 = arith.constant 4 : i32
    %109 = tpu.dynamic_rotate %108 by %c4_i32_52 dim 0 : vector<16x128xf32>, i32 -> vector<16x128xf32>
    %cst_53 = arith.constant 0.000000e+00 : f32
    %110 = vector.shape_cast %30 : vector<16x1xi1> to vector<16x1xi1>
    %111 = vector.broadcast %110 : vector<16x1xi1> to vector<16x128xi1>
    %112 = vector.broadcast %cst_53 : f32 to vector<16x128xf32>
    %113 = arith.select %111, %109, %112 : vector<16x128xi1>, vector<16x128xf32>
    %114 = arith.truncf %113 : vector<16x128xf32> to vector<16x128xbf16>
    %c2 = arith.constant 2 : index
    %c0_54 = arith.constant 0 : index
    %c0_55 = arith.constant 0 : index
    %115 = vector.load %arg4[%c2, %c0_54, %c0_55] : memref<6x128x256xbf16, #tpu.memory_space<vmem>>, vector<1x128x256xbf16>
    %116 = vector.shape_cast %115 : vector<1x128x256xbf16> to vector<128x256xbf16>
    %cst_56 = arith.constant dense<0.000000e+00> : vector<16x256xf32>
    %117 = tpu.matmul %114, %116, %cst_56 {dimension_numbers = #tpu.dot_dimension_numbers<[1], [0], [0], [1], [0, 0, 1, 1], [], []>} : vector<16x128xbf16>, vector<128x256xbf16>, vector<16x256xf32> -> vector<16x256xf32>
    %118 = arith.truncf %108 : vector<16x128xf32> to vector<16x128xbf16>
    %c2_57 = arith.constant 2 : index
    %c0_58 = arith.constant 0 : index
    %c0_59 = arith.constant 0 : index
    %119 = vector.load %arg5[%c2_57, %c0_58, %c0_59] : memref<6x128x256xbf16, #tpu.memory_space<vmem>>, vector<1x128x256xbf16>
    %120 = vector.shape_cast %119 : vector<1x128x256xbf16> to vector<128x256xbf16>
    %cst_60 = arith.constant dense<0.000000e+00> : vector<16x256xf32>
    %121 = tpu.matmul %118, %120, %cst_60 {dimension_numbers = #tpu.dot_dimension_numbers<[1], [0], [0], [1], [0, 0, 1, 1], [], []>} : vector<16x128xbf16>, vector<128x256xbf16>, vector<16x256xf32> -> vector<16x256xf32>
    %122 = arith.addf %117, %121 : vector<16x256xf32>
    %c2_61 = arith.constant 2 : index
    %c0_62 = arith.constant 0 : index
    %c0_63 = arith.constant 0 : index
    %123 = vector.load %arg6[%c2_61, %c0_62, %c0_63] : memref<6x1x256xf32, #tpu.memory_space<vmem>>, vector<1x1x256xf32>
    %124 = vector.shape_cast %123 : vector<1x1x256xf32> to vector<1x256xf32>
    %125 = vector.broadcast %124 : vector<1x256xf32> to vector<16x256xf32>
    %126 = arith.addf %122, %125 : vector<16x256xf32>
    %127 = vector.extract_strided_slice %126 {offsets = [0, 0], sizes = [16, 128], strides = [1, 1]} : vector<16x256xf32> to vector<16x128xf32>
    %128 = math.tanh %127 : vector<16x128xf32>
    %129 = vector.extract_strided_slice %126 {offsets = [0, 128], sizes = [16, 128], strides = [1, 1]} : vector<16x256xf32> to vector<16x128xf32>
    %130 = arith.negf %129 : vector<16x128xf32>
    %131 = math.exp %130 : vector<16x128xf32>
    %cst_64 = arith.constant 1.000000e+00 : f32
    %132 = vector.broadcast %cst_64 : f32 to vector<16x128xf32>
    %133 = arith.addf %132, %131 : vector<16x128xf32>
    %134 = arith.divf %132, %133 : vector<16x128xf32>
    %135 = arith.mulf %128, %134 : vector<16x128xf32>
    %136 = arith.truncf %135 : vector<16x128xf32> to vector<16x128xbf16>
    %c2_65 = arith.constant 2 : index
    %c0_66 = arith.constant 0 : index
    %c0_67 = arith.constant 0 : index
    %137 = vector.load %arg7[%c2_65, %c0_66, %c0_67] : memref<6x128x256xbf16, #tpu.memory_space<vmem>>, vector<1x128x256xbf16>
    %138 = vector.shape_cast %137 : vector<1x128x256xbf16> to vector<128x256xbf16>
    %cst_68 = arith.constant dense<0.000000e+00> : vector<16x256xf32>
    %139 = tpu.matmul %136, %138, %cst_68 {dimension_numbers = #tpu.dot_dimension_numbers<[1], [0], [0], [1], [0, 0, 1, 1], [], []>} : vector<16x128xbf16>, vector<128x256xbf16>, vector<16x256xf32> -> vector<16x256xf32>
    %c2_69 = arith.constant 2 : index
    %c0_70 = arith.constant 0 : index
    %c0_71 = arith.constant 0 : index
    %140 = vector.load %arg8[%c2_69, %c0_70, %c0_71] : memref<6x1x256xf32, #tpu.memory_space<vmem>>, vector<1x1x256xf32>
    %141 = vector.shape_cast %140 : vector<1x1x256xf32> to vector<1x256xf32>
    %142 = vector.broadcast %141 : vector<1x256xf32> to vector<16x256xf32>
    %143 = arith.addf %139, %142 : vector<16x256xf32>
    %144 = vector.extract_strided_slice %143 {offsets = [0, 0], sizes = [16, 128], strides = [1, 1]} : vector<16x256xf32> to vector<16x128xf32>
    %145 = arith.addf %106, %144 : vector<16x128xf32>
    %146 = vector.extract_strided_slice %143 {offsets = [0, 128], sizes = [16, 128], strides = [1, 1]} : vector<16x256xf32> to vector<16x128xf32>
    %147 = arith.addf %108, %146 : vector<16x128xf32>
    %c1_i32_72 = arith.constant 1 : i32
    %148 = tpu.dynamic_rotate %147 by %c1_i32_72 dim 0 : vector<16x128xf32>, i32 -> vector<16x128xf32>
    %cst_73 = arith.constant 0.000000e+00 : f32
    %149 = vector.shape_cast %26 : vector<16x1xi1> to vector<16x1xi1>
    %150 = vector.broadcast %149 : vector<16x1xi1> to vector<16x128xi1>
    %151 = vector.broadcast %cst_73 : f32 to vector<16x128xf32>
    %152 = arith.select %150, %148, %151 : vector<16x128xi1>, vector<16x128xf32>
    %153 = arith.truncf %152 : vector<16x128xf32> to vector<16x128xbf16>
    %c3 = arith.constant 3 : index
    %c0_74 = arith.constant 0 : index
    %c0_75 = arith.constant 0 : index
    %154 = vector.load %arg4[%c3, %c0_74, %c0_75] : memref<6x128x256xbf16, #tpu.memory_space<vmem>>, vector<1x128x256xbf16>
    %155 = vector.shape_cast %154 : vector<1x128x256xbf16> to vector<128x256xbf16>
    %cst_76 = arith.constant dense<0.000000e+00> : vector<16x256xf32>
    %156 = tpu.matmul %153, %155, %cst_76 {dimension_numbers = #tpu.dot_dimension_numbers<[1], [0], [0], [1], [0, 0, 1, 1], [], []>} : vector<16x128xbf16>, vector<128x256xbf16>, vector<16x256xf32> -> vector<16x256xf32>
    %157 = arith.truncf %147 : vector<16x128xf32> to vector<16x128xbf16>
    %c3_77 = arith.constant 3 : index
    %c0_78 = arith.constant 0 : index
    %c0_79 = arith.constant 0 : index
    %158 = vector.load %arg5[%c3_77, %c0_78, %c0_79] : memref<6x128x256xbf16, #tpu.memory_space<vmem>>, vector<1x128x256xbf16>
    %159 = vector.shape_cast %158 : vector<1x128x256xbf16> to vector<128x256xbf16>
    %cst_80 = arith.constant dense<0.000000e+00> : vector<16x256xf32>
    %160 = tpu.matmul %157, %159, %cst_80 {dimension_numbers = #tpu.dot_dimension_numbers<[1], [0], [0], [1], [0, 0, 1, 1], [], []>} : vector<16x128xbf16>, vector<128x256xbf16>, vector<16x256xf32> -> vector<16x256xf32>
    %161 = arith.addf %156, %160 : vector<16x256xf32>
    %c3_81 = arith.constant 3 : index
    %c0_82 = arith.constant 0 : index
    %c0_83 = arith.constant 0 : index
    %162 = vector.load %arg6[%c3_81, %c0_82, %c0_83] : memref<6x1x256xf32, #tpu.memory_space<vmem>>, vector<1x1x256xf32>
    %163 = vector.shape_cast %162 : vector<1x1x256xf32> to vector<1x256xf32>
    %164 = vector.broadcast %163 : vector<1x256xf32> to vector<16x256xf32>
    %165 = arith.addf %161, %164 : vector<16x256xf32>
    %166 = vector.extract_strided_slice %165 {offsets = [0, 0], sizes = [16, 128], strides = [1, 1]} : vector<16x256xf32> to vector<16x128xf32>
    %167 = math.tanh %166 : vector<16x128xf32>
    %168 = vector.extract_strided_slice %165 {offsets = [0, 128], sizes = [16, 128], strides = [1, 1]} : vector<16x256xf32> to vector<16x128xf32>
    %169 = arith.negf %168 : vector<16x128xf32>
    %170 = math.exp %169 : vector<16x128xf32>
    %cst_84 = arith.constant 1.000000e+00 : f32
    %171 = vector.broadcast %cst_84 : f32 to vector<16x128xf32>
    %172 = arith.addf %171, %170 : vector<16x128xf32>
    %173 = arith.divf %171, %172 : vector<16x128xf32>
    %174 = arith.mulf %167, %173 : vector<16x128xf32>
    %175 = arith.truncf %174 : vector<16x128xf32> to vector<16x128xbf16>
    %c3_85 = arith.constant 3 : index
    %c0_86 = arith.constant 0 : index
    %c0_87 = arith.constant 0 : index
    %176 = vector.load %arg7[%c3_85, %c0_86, %c0_87] : memref<6x128x256xbf16, #tpu.memory_space<vmem>>, vector<1x128x256xbf16>
    %177 = vector.shape_cast %176 : vector<1x128x256xbf16> to vector<128x256xbf16>
    %cst_88 = arith.constant dense<0.000000e+00> : vector<16x256xf32>
    %178 = tpu.matmul %175, %177, %cst_88 {dimension_numbers = #tpu.dot_dimension_numbers<[1], [0], [0], [1], [0, 0, 1, 1], [], []>} : vector<16x128xbf16>, vector<128x256xbf16>, vector<16x256xf32> -> vector<16x256xf32>
    %c3_89 = arith.constant 3 : index
    %c0_90 = arith.constant 0 : index
    %c0_91 = arith.constant 0 : index
    %179 = vector.load %arg8[%c3_89, %c0_90, %c0_91] : memref<6x1x256xf32, #tpu.memory_space<vmem>>, vector<1x1x256xf32>
    %180 = vector.shape_cast %179 : vector<1x1x256xf32> to vector<1x256xf32>
    %181 = vector.broadcast %180 : vector<1x256xf32> to vector<16x256xf32>
    %182 = arith.addf %178, %181 : vector<16x256xf32>
    %183 = vector.extract_strided_slice %182 {offsets = [0, 0], sizes = [16, 128], strides = [1, 1]} : vector<16x256xf32> to vector<16x128xf32>
    %184 = arith.addf %145, %183 : vector<16x128xf32>
    %185 = vector.extract_strided_slice %182 {offsets = [0, 128], sizes = [16, 128], strides = [1, 1]} : vector<16x256xf32> to vector<16x128xf32>
    %186 = arith.addf %147, %185 : vector<16x128xf32>
    %c2_i32_92 = arith.constant 2 : i32
    %187 = tpu.dynamic_rotate %186 by %c2_i32_92 dim 0 : vector<16x128xf32>, i32 -> vector<16x128xf32>
    %cst_93 = arith.constant 0.000000e+00 : f32
    %188 = vector.shape_cast %28 : vector<16x1xi1> to vector<16x1xi1>
    %189 = vector.broadcast %188 : vector<16x1xi1> to vector<16x128xi1>
    %190 = vector.broadcast %cst_93 : f32 to vector<16x128xf32>
    %191 = arith.select %189, %187, %190 : vector<16x128xi1>, vector<16x128xf32>
    %192 = arith.truncf %191 : vector<16x128xf32> to vector<16x128xbf16>
    %c4 = arith.constant 4 : index
    %c0_94 = arith.constant 0 : index
    %c0_95 = arith.constant 0 : index
    %193 = vector.load %arg4[%c4, %c0_94, %c0_95] : memref<6x128x256xbf16, #tpu.memory_space<vmem>>, vector<1x128x256xbf16>
    %194 = vector.shape_cast %193 : vector<1x128x256xbf16> to vector<128x256xbf16>
    %cst_96 = arith.constant dense<0.000000e+00> : vector<16x256xf32>
    %195 = tpu.matmul %192, %194, %cst_96 {dimension_numbers = #tpu.dot_dimension_numbers<[1], [0], [0], [1], [0, 0, 1, 1], [], []>} : vector<16x128xbf16>, vector<128x256xbf16>, vector<16x256xf32> -> vector<16x256xf32>
    %196 = arith.truncf %186 : vector<16x128xf32> to vector<16x128xbf16>
    %c4_97 = arith.constant 4 : index
    %c0_98 = arith.constant 0 : index
    %c0_99 = arith.constant 0 : index
    %197 = vector.load %arg5[%c4_97, %c0_98, %c0_99] : memref<6x128x256xbf16, #tpu.memory_space<vmem>>, vector<1x128x256xbf16>
    %198 = vector.shape_cast %197 : vector<1x128x256xbf16> to vector<128x256xbf16>
    %cst_100 = arith.constant dense<0.000000e+00> : vector<16x256xf32>
    %199 = tpu.matmul %196, %198, %cst_100 {dimension_numbers = #tpu.dot_dimension_numbers<[1], [0], [0], [1], [0, 0, 1, 1], [], []>} : vector<16x128xbf16>, vector<128x256xbf16>, vector<16x256xf32> -> vector<16x256xf32>
    %200 = arith.addf %195, %199 : vector<16x256xf32>
    %c4_101 = arith.constant 4 : index
    %c0_102 = arith.constant 0 : index
    %c0_103 = arith.constant 0 : index
    %201 = vector.load %arg6[%c4_101, %c0_102, %c0_103] : memref<6x1x256xf32, #tpu.memory_space<vmem>>, vector<1x1x256xf32>
    %202 = vector.shape_cast %201 : vector<1x1x256xf32> to vector<1x256xf32>
    %203 = vector.broadcast %202 : vector<1x256xf32> to vector<16x256xf32>
    %204 = arith.addf %200, %203 : vector<16x256xf32>
    %205 = vector.extract_strided_slice %204 {offsets = [0, 0], sizes = [16, 128], strides = [1, 1]} : vector<16x256xf32> to vector<16x128xf32>
    %206 = math.tanh %205 : vector<16x128xf32>
    %207 = vector.extract_strided_slice %204 {offsets = [0, 128], sizes = [16, 128], strides = [1, 1]} : vector<16x256xf32> to vector<16x128xf32>
    %208 = arith.negf %207 : vector<16x128xf32>
    %209 = math.exp %208 : vector<16x128xf32>
    %cst_104 = arith.constant 1.000000e+00 : f32
    %210 = vector.broadcast %cst_104 : f32 to vector<16x128xf32>
    %211 = arith.addf %210, %209 : vector<16x128xf32>
    %212 = arith.divf %210, %211 : vector<16x128xf32>
    %213 = arith.mulf %206, %212 : vector<16x128xf32>
    %214 = arith.truncf %213 : vector<16x128xf32> to vector<16x128xbf16>
    %c4_105 = arith.constant 4 : index
    %c0_106 = arith.constant 0 : index
    %c0_107 = arith.constant 0 : index
    %215 = vector.load %arg7[%c4_105, %c0_106, %c0_107] : memref<6x128x256xbf16, #tpu.memory_space<vmem>>, vector<1x128x256xbf16>
    %216 = vector.shape_cast %215 : vector<1x128x256xbf16> to vector<128x256xbf16>
    %cst_108 = arith.constant dense<0.000000e+00> : vector<16x256xf32>
    %217 = tpu.matmul %214, %216, %cst_108 {dimension_numbers = #tpu.dot_dimension_numbers<[1], [0], [0], [1], [0, 0, 1, 1], [], []>} : vector<16x128xbf16>, vector<128x256xbf16>, vector<16x256xf32> -> vector<16x256xf32>
    %c4_109 = arith.constant 4 : index
    %c0_110 = arith.constant 0 : index
    %c0_111 = arith.constant 0 : index
    %218 = vector.load %arg8[%c4_109, %c0_110, %c0_111] : memref<6x1x256xf32, #tpu.memory_space<vmem>>, vector<1x1x256xf32>
    %219 = vector.shape_cast %218 : vector<1x1x256xf32> to vector<1x256xf32>
    %220 = vector.broadcast %219 : vector<1x256xf32> to vector<16x256xf32>
    %221 = arith.addf %217, %220 : vector<16x256xf32>
    %222 = vector.extract_strided_slice %221 {offsets = [0, 0], sizes = [16, 128], strides = [1, 1]} : vector<16x256xf32> to vector<16x128xf32>
    %223 = arith.addf %184, %222 : vector<16x128xf32>
    %224 = vector.extract_strided_slice %221 {offsets = [0, 128], sizes = [16, 128], strides = [1, 1]} : vector<16x256xf32> to vector<16x128xf32>
    %225 = arith.addf %186, %224 : vector<16x128xf32>
    %c4_i32_112 = arith.constant 4 : i32
    %226 = tpu.dynamic_rotate %225 by %c4_i32_112 dim 0 : vector<16x128xf32>, i32 -> vector<16x128xf32>
    %cst_113 = arith.constant 0.000000e+00 : f32
    %227 = vector.shape_cast %30 : vector<16x1xi1> to vector<16x1xi1>
    %228 = vector.broadcast %227 : vector<16x1xi1> to vector<16x128xi1>
    %229 = vector.broadcast %cst_113 : f32 to vector<16x128xf32>
    %230 = arith.select %228, %226, %229 : vector<16x128xi1>, vector<16x128xf32>
    %231 = arith.truncf %230 : vector<16x128xf32> to vector<16x128xbf16>
    %c5 = arith.constant 5 : index
    %c0_114 = arith.constant 0 : index
    %c0_115 = arith.constant 0 : index
    %232 = vector.load %arg4[%c5, %c0_114, %c0_115] : memref<6x128x256xbf16, #tpu.memory_space<vmem>>, vector<1x128x256xbf16>
    %233 = vector.shape_cast %232 : vector<1x128x256xbf16> to vector<128x256xbf16>
    %cst_116 = arith.constant dense<0.000000e+00> : vector<16x256xf32>
    %234 = tpu.matmul %231, %233, %cst_116 {dimension_numbers = #tpu.dot_dimension_numbers<[1], [0], [0], [1], [0, 0, 1, 1], [], []>} : vector<16x128xbf16>, vector<128x256xbf16>, vector<16x256xf32> -> vector<16x256xf32>
    %235 = arith.truncf %225 : vector<16x128xf32> to vector<16x128xbf16>
    %c5_117 = arith.constant 5 : index
    %c0_118 = arith.constant 0 : index
    %c0_119 = arith.constant 0 : index
    %236 = vector.load %arg5[%c5_117, %c0_118, %c0_119] : memref<6x128x256xbf16, #tpu.memory_space<vmem>>, vector<1x128x256xbf16>
    %237 = vector.shape_cast %236 : vector<1x128x256xbf16> to vector<128x256xbf16>
    %cst_120 = arith.constant dense<0.000000e+00> : vector<16x256xf32>
    %238 = tpu.matmul %235, %237, %cst_120 {dimension_numbers = #tpu.dot_dimension_numbers<[1], [0], [0], [1], [0, 0, 1, 1], [], []>} : vector<16x128xbf16>, vector<128x256xbf16>, vector<16x256xf32> -> vector<16x256xf32>
    %239 = arith.addf %234, %238 : vector<16x256xf32>
    %c5_121 = arith.constant 5 : index
    %c0_122 = arith.constant 0 : index
    %c0_123 = arith.constant 0 : index
    %240 = vector.load %arg6[%c5_121, %c0_122, %c0_123] : memref<6x1x256xf32, #tpu.memory_space<vmem>>, vector<1x1x256xf32>
    %241 = vector.shape_cast %240 : vector<1x1x256xf32> to vector<1x256xf32>
    %242 = vector.broadcast %241 : vector<1x256xf32> to vector<16x256xf32>
    %243 = arith.addf %239, %242 : vector<16x256xf32>
    %244 = vector.extract_strided_slice %243 {offsets = [0, 0], sizes = [16, 128], strides = [1, 1]} : vector<16x256xf32> to vector<16x128xf32>
    %245 = math.tanh %244 : vector<16x128xf32>
    %246 = vector.extract_strided_slice %243 {offsets = [0, 128], sizes = [16, 128], strides = [1, 1]} : vector<16x256xf32> to vector<16x128xf32>
    %247 = arith.negf %246 : vector<16x128xf32>
    %248 = math.exp %247 : vector<16x128xf32>
    %cst_124 = arith.constant 1.000000e+00 : f32
    %249 = vector.broadcast %cst_124 : f32 to vector<16x128xf32>
    %250 = arith.addf %249, %248 : vector<16x128xf32>
    %251 = arith.divf %249, %250 : vector<16x128xf32>
    %252 = arith.mulf %245, %251 : vector<16x128xf32>
    %253 = arith.truncf %252 : vector<16x128xf32> to vector<16x128xbf16>
    %c5_125 = arith.constant 5 : index
    %c0_126 = arith.constant 0 : index
    %c0_127 = arith.constant 0 : index
    %254 = vector.load %arg7[%c5_125, %c0_126, %c0_127] : memref<6x128x256xbf16, #tpu.memory_space<vmem>>, vector<1x128x256xbf16>
    %255 = vector.shape_cast %254 : vector<1x128x256xbf16> to vector<128x256xbf16>
    %cst_128 = arith.constant dense<0.000000e+00> : vector<16x256xf32>
    %256 = tpu.matmul %253, %255, %cst_128 {dimension_numbers = #tpu.dot_dimension_numbers<[1], [0], [0], [1], [0, 0, 1, 1], [], []>} : vector<16x128xbf16>, vector<128x256xbf16>, vector<16x256xf32> -> vector<16x256xf32>
    %c5_129 = arith.constant 5 : index
    %c0_130 = arith.constant 0 : index
    %c0_131 = arith.constant 0 : index
    %257 = vector.load %arg8[%c5_129, %c0_130, %c0_131] : memref<6x1x256xf32, #tpu.memory_space<vmem>>, vector<1x1x256xf32>
    %258 = vector.shape_cast %257 : vector<1x1x256xf32> to vector<1x256xf32>
    %259 = vector.broadcast %258 : vector<1x256xf32> to vector<16x256xf32>
    %260 = arith.addf %256, %259 : vector<16x256xf32>
    %261 = vector.extract_strided_slice %260 {offsets = [0, 0], sizes = [16, 128], strides = [1, 1]} : vector<16x256xf32> to vector<16x128xf32>
    %262 = arith.addf %223, %261 : vector<16x128xf32>
    %cst_132 = arith.constant 5.000000e-01 : f32
    %263 = vector.broadcast %cst_132 : f32 to vector<16x128xf32>
    %264 = arith.mulf %263, %262 : vector<16x128xf32>
    %cst_133 = arith.constant 0.707106769 : f32
    %265 = vector.broadcast %cst_133 : f32 to vector<16x128xf32>
    %266 = arith.mulf %262, %265 : vector<16x128xf32>
    %267 = math.erf %266 : vector<16x128xf32>
    %cst_134 = arith.constant 1.000000e+00 : f32
    %268 = vector.broadcast %cst_134 : f32 to vector<16x128xf32>
    %269 = arith.addf %268, %267 : vector<16x128xf32>
    %270 = arith.mulf %264, %269 : vector<16x128xf32>
    %271 = arith.truncf %270 : vector<16x128xf32> to vector<16x128xbf16>
    %c0_135 = arith.constant 0 : index
    %c0_136 = arith.constant 0 : index
    %272 = vector.load %arg9[%c0_135, %c0_136] : memref<128x128xbf16, #tpu.memory_space<vmem>>, vector<128x128xbf16>
    %cst_137 = arith.constant dense<0.000000e+00> : vector<16x128xf32>
    %273 = tpu.matmul %271, %272, %cst_137 {dimension_numbers = #tpu.dot_dimension_numbers<[1], [0], [0], [1], [0, 0, 1, 1], [], []>} : vector<16x128xbf16>, vector<128x128xbf16>, vector<16x128xf32> -> vector<16x128xf32>
    %c0_138 = arith.constant 0 : index
    %c0_139 = arith.constant 0 : index
    %274 = vector.load %arg10[%c0_138, %c0_139] : memref<1x128xf32, #tpu.memory_space<vmem>>, vector<1x128xf32>
    %275 = vector.broadcast %274 : vector<1x128xf32> to vector<16x128xf32>
    %276 = arith.addf %273, %275 : vector<16x128xf32>
    %cst_140 = arith.constant 5.000000e-01 : f32
    %277 = vector.broadcast %cst_140 : f32 to vector<16x128xf32>
    %278 = arith.mulf %277, %276 : vector<16x128xf32>
    %cst_141 = arith.constant 0.707106769 : f32
    %279 = vector.broadcast %cst_141 : f32 to vector<16x128xf32>
    %280 = arith.mulf %276, %279 : vector<16x128xf32>
    %281 = math.erf %280 : vector<16x128xf32>
    %cst_142 = arith.constant 1.000000e+00 : f32
    %282 = vector.broadcast %cst_142 : f32 to vector<16x128xf32>
    %283 = arith.addf %282, %281 : vector<16x128xf32>
    %284 = arith.mulf %278, %283 : vector<16x128xf32>
    %285 = arith.truncf %284 : vector<16x128xf32> to vector<16x128xbf16>
    %c0_143 = arith.constant 0 : index
    %c0_144 = arith.constant 0 : index
    %286 = vector.load %arg11[%c0_143, %c0_144] : memref<128x128xbf16, #tpu.memory_space<vmem>>, vector<128x128xbf16>
    %cst_145 = arith.constant dense<0.000000e+00> : vector<16x128xf32>
    %287 = tpu.matmul %285, %286, %cst_145 {dimension_numbers = #tpu.dot_dimension_numbers<[1], [0], [0], [1], [0, 0, 1, 1], [], []>} : vector<16x128xbf16>, vector<128x128xbf16>, vector<16x128xf32> -> vector<16x128xf32>
    %c0_146 = arith.constant 0 : index
    %c0_147 = arith.constant 0 : index
    %288 = vector.load %arg12[%c0_146, %c0_147] : memref<1x128xf32, #tpu.memory_space<vmem>>, vector<1x128xf32>
    %289 = vector.broadcast %288 : vector<1x128xf32> to vector<16x128xf32>
    %290 = arith.addf %287, %289 : vector<16x128xf32>
    %291 = vector.shape_cast %290 : vector<16x128xf32> to vector<1x16x128xf32>
    %cst_148 = arith.constant dense<0.000000e+00> : vector<1x128xf32>
    %292 = vector.multi_reduction <add>, %291, %cst_148 [1] : vector<1x16x128xf32> to vector<1x128xf32>
    %293 = vector.shape_cast %292 : vector<1x128xf32> to vector<1x1x128xf32>
    %cst_149 = arith.constant 1.600000e+01 : f32
    %294 = vector.broadcast %cst_149 : f32 to vector<1x1x128xf32>
    %295 = arith.divf %293, %294 : vector<1x1x128xf32>
    %c0_150 = arith.constant 0 : index
    %c0_151 = arith.constant 0 : index
    %c0_152 = arith.constant 0 : index
    %296 = vector.load %arg13[%c0_150, %c0_151, %c0_152] : memref<1x1x128xf32, #tpu.memory_space<vmem>>, vector<1x1x128xf32>
    tpu.vector_store %arg13[%c0_150, %c0_151, %c0_152], %295 {strides = array<i32>} : memref<1x1x128xf32, #tpu.memory_space<vmem>>, vector<1x1x128xf32>,
    return
  }
  func.func @transform_0(%arg0: i32) -> (i32, i32, i32) {
    %c0_i32 = arith.constant 0 : i32
    %c0_i32_0 = arith.constant 0 : i32
    %c0_i32_1 = arith.constant 0 : i32
    return %arg0, %c0_i32, %c0_i32_0 : i32, i32, i32
  }
  func.func @transform_1(%arg0: i32) -> (i32, i32) {
    %c0_i32 = arith.constant 0 : i32
    %c0_i32_0 = arith.constant 0 : i32
    %c0_i32_1 = arith.constant 0 : i32
    return %c0_i32, %c0_i32_0 : i32, i32
  }
  func.func @transform_2(%arg0: i32) -> (i32, i32) {
    %c0_i32 = arith.constant 0 : i32
    %c0_i32_0 = arith.constant 0 : i32
    %c0_i32_1 = arith.constant 0 : i32
    return %c0_i32, %c0_i32_0 : i32, i32
  }
  func.func @transform_3(%arg0: i32) -> (i32, i32, i32) {
    %c0_i32 = arith.constant 0 : i32
    %c0_i32_0 = arith.constant 0 : i32
    %c0_i32_1 = arith.constant 0 : i32
    %c0_i32_2 = arith.constant 0 : i32
    return %c0_i32, %c0_i32_0, %c0_i32_1 : i32, i32, i32
  }
  func.func @transform_4(%arg0: i32) -> (i32, i32, i32) {
    %c0_i32 = arith.constant 0 : i32
    %c0_i32_0 = arith.constant 0 : i32
    %c0_i32_1 = arith.constant 0 : i32
    %c0_i32_2 = arith.constant 0 : i32
    return %c0_i32, %c0_i32_0, %c0_i32_1 : i32, i32, i32
  }
  func.func @transform_5(%arg0: i32) -> (i32, i32, i32) {
    %c0_i32 = arith.constant 0 : i32
    %c0_i32_0 = arith.constant 0 : i32
    %c0_i32_1 = arith.constant 0 : i32
    %c0_i32_2 = arith.constant 0 : i32
    return %c0_i32, %c0_i32_0, %c0_i32_1 : i32, i32, i32
  }
  func.func @transform_6(%arg0: i32) -> (i32, i32, i32) {
    %c0_i32 = arith.constant 0 : i32
    %c0_i32_0 = arith.constant 0 : i32
    %c0_i32_1 = arith.constant 0 : i32
    %c0_i32_2 = arith.constant 0 : i32
    return %c0_i32, %c0_i32_0, %c0_i32_1 : i32, i32, i32
  }
  func.func @transform_7(%arg0: i32) -> (i32, i32, i32) {
    %c0_i32 = arith.constant 0 : i32
    %c0_i32_0 = arith.constant 0 : i32
    %c0_i32_1 = arith.constant 0 : i32
    %c0_i32_2 = arith.constant 0 : i32
    return %c0_i32, %c0_i32_0, %c0_i32_1 : i32, i32, i32
  }
  func.func @transform_8(%arg0: i32) -> (i32, i32) {
    %c0_i32 = arith.constant 0 : i32
    %c0_i32_0 = arith.constant 0 : i32
    %c0_i32_1 = arith.constant 0 : i32
    return %c0_i32, %c0_i32_0 : i32, i32
  }
  func.func @transform_9(%arg0: i32) -> (i32, i32) {
    %c0_i32 = arith.constant 0 : i32
    %c0_i32_0 = arith.constant 0 : i32
    %c0_i32_1 = arith.constant 0 : i32
    return %c0_i32, %c0_i32_0 : i32, i32
  }
  func.func @transform_10(%arg0: i32) -> (i32, i32) {
    %c0_i32 = arith.constant 0 : i32
    %c0_i32_0 = arith.constant 0 : i32
    %c0_i32_1 = arith.constant 0 : i32
    return %c0_i32, %c0_i32_0 : i32, i32
  }
  func.func @transform_11(%arg0: i32) -> (i32, i32) {
    %c0_i32 = arith.constant 0 : i32
    %c0_i32_0 = arith.constant 0 : i32
    %c0_i32_1 = arith.constant 0 : i32
    return %c0_i32, %c0_i32_0 : i32, i32
  }
  func.func @transform_12(%arg0: i32) -> (i32, i32, i32) {
    %c0_i32 = arith.constant 0 : i32
    %c0_i32_0 = arith.constant 0 : i32
    %c0_i32_1 = arith.constant 0 : i32
    return %arg0, %c0_i32, %c0_i32_0 : i32, i32, i32
  }
}

</mosaic_0001>

<llo_original>
// kernel: quantum_wavenet_forward.1
$region0: #{quantum_wavenet_forward.1}
  #allocation0 [shape = 'u32[]', space=smem, size = 0x4, offset = 0x4, fixed_abs, tag = 'smem constant byte address 0x4 - core index']
  #allocation1 [shape = 'u32[144,128]{1,0:T(1,128)}', space=vmem, size = 0x12000, scoped, tag = 'internal scratch']
  %s0 = inlined_call_operand.vmem [shape: bf16[2,16,128], index: 0, kind: input, shape index: {}]
  %s1 = inlined_call_operand.vmem [shape: bf16[128,128], index: 1, kind: input, shape index: {}]
  %s2 = inlined_call_operand.vmem [shape: f32[1,128], index: 2, kind: input, shape index: {}]
  %s3 = inlined_call_operand.hbm [shape: bf16[6,128,256], index: 3, kind: input, shape index: {}]
  %s4 = inlined_call_operand.hbm [shape: bf16[6,128,256], index: 4, kind: input, shape index: {}]
  %s5 = inlined_call_operand.vmem [shape: f32[6,1,256], index: 5, kind: input, shape index: {}]
  %s6 = inlined_call_operand.hbm [shape: bf16[6,128,256], index: 6, kind: input, shape index: {}]
  %s7 = inlined_call_operand.vmem [shape: f32[6,1,256], index: 7, kind: input, shape index: {}]
  %s8 = inlined_call_operand.hbm [shape: bf16[128,128], index: 8, kind: input, shape index: {}]
  %s9 = inlined_call_operand.vmem [shape: f32[1,128], index: 9, kind: input, shape index: {}]
  %s10 = inlined_call_operand.hbm [shape: bf16[128,128], index: 10, kind: input, shape index: {}]
  %s11 = inlined_call_operand.vmem [shape: f32[1,128], index: 11, kind: input, shape index: {}]
  %s12 = inlined_call_operand.vmem [shape: f32[2,1,128], index: 12, kind: output, shape index: {}]
  %s13 = sld [smem:[#allocation0]]
  $region101: #{quantum_wavenet_forward.1} parent=0
    _
  %s15 = ssub.s32 1, %s13
  %s16 = scalar_select 0, %s15, %s13
  $region1: #{quantum_wavenet_forward.1} parent=0
    #allocation2 [shape = 'u8[393216]{0}', space=vmem, size = 0x60000, scoped, tag = 'input window, operand 3, single buffered']
    #allocation3 [shape = 's32[2]{0}', space=sflag, size = 0x8, scoped, tag = 'scoped memory for quantum_wavenet_forward.1']
    #allocation4 [shape = 'u8[393216]{0}', space=vmem, size = 0x60000, scoped, tag = 'input window, operand 4, single buffered']
    #allocation5 [shape = 's32[1]{0}', space=sflag, size = 0x4, scoped, tag = 'scoped memory for quantum_wavenet_forward.1']
    #allocation6 [shape = 'u8[393216]{0}', space=vmem, size = 0x60000, scoped, tag = 'input window, operand 6, single buffered']
    #allocation7 [shape = 'u8[32768]{0}', space=vmem, size = 0x8000, scoped, tag = 'input window, operand 8, single buffered']
    #allocation8 [shape = 's32[1]{0}', space=sflag, size = 0x4, scoped, tag = 'scoped memory for quantum_wavenet_forward.1']
    #allocation9 [shape = 'u8[32768]{0}', space=vmem, size = 0x8000, scoped, tag = 'input window, operand 10, single buffered']
    %17 = vsyncpa [#allocation3], 0
    %18 = vsyncpa [#allocation5], 0
    %19 = vsyncpa [#allocation8], 0
    loop: start=0, step=1, limit=4
    $region2: #{quantum_wavenet_forward.1} parent=1 // loop_pre_header
      _
    $region3: #{quantum_wavenet_forward.1} parent=1 // loop_header
      %s21 = sphi 0, %s25
      %p22 = scmp.ge.s32.totalorder %s21, 4
      %s31 = sphi 0, %s33
      %s34 = sphi 0, %s31
      %s35 = sphi 0, %s34
      %s51 = sphi 0, %s35
      %s55 = sphi 0, %s55
      %s57 = sphi 0, %s55
      %s58 = sphi 0, %s57
      %s72 = sphi 0, %s58
      %s76 = sphi 0, %s76
      %s78 = sphi 0, %s76
      %s79 = sphi 0, %s78
      %s93 = sphi 0, %s79
      %s97 = sphi 0, %s97
      %s99 = sphi 0, %s97
      %s100 = sphi 0, %s99
      %s114 = sphi 0, %s100
      %s118 = sphi 0, %s118
      %s120 = sphi 0, %s118
      %s121 = sphi 0, %s120
      %s135 = sphi 0, %s121
      %s139 = sphi 0, %s139
      %s141 = sphi 0, %s139
      %s142 = sphi 0, %s141
      %s156 = sphi 0, %s142
      %s160 = sphi 0, %s160
      %s162 = sphi 0, %s160
      %s163 = sphi 0, %s162
      %s177 = sphi 0, %s163
      %s181 = sphi 0, %s181
      %s183 = sphi 0, %s181
      %s184 = sphi 0, %s183
      %s198 = sphi 0, %s184
      %s202 = sphi 0, %s202
      %s204 = sphi 0, %s202
      %s205 = sphi 0, %s204
      %s219 = sphi 0, %s205
      %s223 = sphi 0, %s223
      %s225 = sphi 0, %s223
      %s226 = sphi 0, %s225
      %s240 = sphi 0, %s226
      %s244 = sphi 0, %s244
      %s246 = sphi 0, %s244
      %s247 = sphi 0, %s246
      %s261 = sphi 0, %s247
      %s265 = sphi 0, %s265
      %s267 = sphi 0, %s265
      %s268 = sphi 0, %s267
      %s282 = sphi 0, %s268
      %s288 = sphi 0, %s290
      %s291 = sphi 0, %s288
      %s292 = sphi 0, %s291
      %s308 = sphi 0, %s292
    $region4: #{quantum_wavenet_forward.1} parent=1 // loop_header_branch
      %24 = sbr.rel (%p22) target = $region8
    $region5: #{quantum_wavenet_forward.1} parent=1 // loop_body
      %s26 = ssub.s32 %s21, 1
      %s27 = ssub.s32 %s21, 2
      %s28 = sadd.s32 %s21, 1
      %s29 = ssub.s32 %s21, %s28
      %p30 = scmp.eq.s32.totalorder %s29, 0
      %s32 = sadd.s32 %s31, 1
      %s33 = scalar_select %p30, %s31, %s32
      %p36 = pneg %p30
      %p37 = scmp.eq.s32.totalorder %s21, 1
      %p38 = por %p36, %p37
      %p39 = scmp.ne.s32.totalorder %s31, %s34
      %p40 = scmp.eq.s32.totalorder %s21, 0
      %p41 = por %p39, %p40
      %p42 = scmp.ne.s32.totalorder %s31, %s34
      %p43 = scmp.eq.s32.totalorder %s26, 1
      %p44 = por %p42, %p43
      %p45 = scmp.ne.s32.totalorder %s34, %s35
      %p46 = scmp.eq.s32.totalorder %s26, 0
      %p47 = por %p45, %p46
      %p48 = scmp.ne.s32.totalorder %s34, %s35
      %p49 = scmp.eq.s32.totalorder %s27, 1
      %p50 = por %p48, %p49
      %p52 = scmp.ne.s32.totalorder %s35, %s51
      %p53 = scmp.eq.s32.totalorder %s27, 0
      %p54 = por %p52, %p53
      %s56 = sadd.s32 %s55, 1
      %p59 = scmp.eq.s32.totalorder %s21, 1
      %p60 = scmp.ne.s32.totalorder %s55, %s57
      %p61 = scmp.eq.s32.totalorder %s21, 0
      %p62 = por %p60, %p61
      %p63 = scmp.ne.s32.totalorder %s55, %s57
      %p64 = scmp.eq.s32.totalorder %s26, 1
      %p65 = por %p63, %p64
      %p66 = scmp.ne.s32.totalorder %s57, %s58
      %p67 = scmp.eq.s32.totalorder %s26, 0
      %p68 = por %p66, %p67
      %p69 = scmp.ne.s32.totalorder %s57, %s58
      %p70 = scmp.eq.s32.totalorder %s27, 1
      %p71 = por %p69, %p70
      %p73 = scmp.ne.s32.totalorder %s58, %s72
      %p74 = scmp.eq.s32.totalorder %s27, 0
      %p75 = por %p73, %p74
      %s77 = sadd.s32 %s76, 1
      %p80 = scmp.eq.s32.totalorder %s21, 1
      %p81 = scmp.ne.s32.totalorder %s76, %s78
      %p82 = scmp.eq.s32.totalorder %s21, 0
      %p83 = por %p81, %p82
      %p84 = scmp.ne.s32.totalorder %s76, %s78
      %p85 = scmp.eq.s32.totalorder %s26, 1
      %p86 = por %p84, %p85
      %p87 = scmp.ne.s32.totalorder %s78, %s79
      %p88 = scmp.eq.s32.totalorder %s26, 0
      %p89 = por %p87, %p88
      %p90 = scmp.ne.s32.totalorder %s78, %s79
      %p91 = scmp.eq.s32.totalorder %s27, 1
      %p92 = por %p90, %p91
      %p94 = scmp.ne.s32.totalorder %s79, %s93
      %p95 = scmp.eq.s32.totalorder %s27, 0
      %p96 = por %p94, %p95
      %s98 = sadd.s32 %s97, 1
      %p101 = scmp.eq.s32.totalorder %s21, 1
      %p102 = scmp.ne.s32.totalorder %s97, %s99
      %p103 = scmp.eq.s32.totalorder %s21, 0
      %p104 = por %p102, %p103
      %p105 = scmp.ne.s32.totalorder %s97, %s99
      %p106 = scmp.eq.s32.totalorder %s26, 1
      %p107 = por %p105, %p106
      %p108 = scmp.ne.s32.totalorder %s99, %s100
      %p109 = scmp.eq.s32.totalorder %s26, 0
      %p110 = por %p108, %p109
      %p111 = scmp.ne.s32.totalorder %s99, %s100
      %p112 = scmp.eq.s32.totalorder %s27, 1
      %p113 = por %p111, %p112
      %p115 = scmp.ne.s32.totalorder %s100, %s114
      %p116 = scmp.eq.s32.totalorder %s27, 0
      %p117 = por %p115, %p116
      %s119 = sadd.s32 %s118, 1
      %p122 = scmp.eq.s32.totalorder %s21, 1
      %p123 = scmp.ne.s32.totalorder %s118, %s120
      %p124 = scmp.eq.s32.totalorder %s21, 0
      %p125 = por %p123, %p124
      %p126 = scmp.ne.s32.totalorder %s118, %s120
      %p127 = scmp.eq.s32.totalorder %s26, 1
      %p128 = por %p126, %p127
      %p129 = scmp.ne.s32.totalorder %s120, %s121
      %p130 = scmp.eq.s32.totalorder %s26, 0
      %p131 = por %p129, %p130
      %p132 = scmp.ne.s32.totalorder %s120, %s121
      %p133 = scmp.eq.s32.totalorder %s27, 1
      %p134 = por %p132, %p133
      %p136 = scmp.ne.s32.totalorder %s121, %s135
      %p137 = scmp.eq.s32.totalorder %s27, 0
      %p138 = por %p136, %p137
      %s140 = sadd.s32 %s139, 1
      %p143 = scmp.eq.s32.totalorder %s21, 1
      %p144 = scmp.ne.s32.totalorder %s139, %s141
      %p145 = scmp.eq.s32.totalorder %s21, 0
      %p146 = por %p144, %p145
      %p147 = scmp.ne.s32.totalorder %s139, %s141
      %p148 = scmp.eq.s32.totalorder %s26, 1
      %p149 = por %p147, %p148
      %p150 = scmp.ne.s32.totalorder %s141, %s142
      %p151 = scmp.eq.s32.totalorder %s26, 0
      %p152 = por %p150, %p151
      %p153 = scmp.ne.s32.totalorder %s141, %s142
      %p154 = scmp.eq.s32.totalorder %s27, 1
      %p155 = por %p153, %p154
      %p157 = scmp.ne.s32.totalorder %s142, %s156
      %p158 = scmp.eq.s32.totalorder %s27, 0
      %p159 = por %p157, %p158
      %s161 = sadd.s32 %s160, 1
      %p164 = scmp.eq.s32.totalorder %s21, 1
      %p165 = scmp.ne.s32.totalorder %s160, %s162
      %p166 = scmp.eq.s32.totalorder %s21, 0
      %p167 = por %p165, %p166
      %p168 = scmp.ne.s32.totalorder %s160, %s162
      %p169 = scmp.eq.s32.totalorder %s26, 1
      %p170 = por %p168, %p169
      %p171 = scmp.ne.s32.totalorder %s162, %s163
      %p172 = scmp.eq.s32.totalorder %s26, 0
      %p173 = por %p171, %p172
      %p174 = scmp.ne.s32.totalorder %s162, %s163
      %p175 = scmp.eq.s32.totalorder %s27, 1
      %p176 = por %p174, %p175
      %p178 = scmp.ne.s32.totalorder %s163, %s177
      %p179 = scmp.eq.s32.totalorder %s27, 0
      %p180 = por %p178, %p179
      %s182 = sadd.s32 %s181, 1
      %p185 = scmp.eq.s32.totalorder %s21, 1
      %p186 = scmp.ne.s32.totalorder %s181, %s183
      %p187 = scmp.eq.s32.totalorder %s21, 0
      %p188 = por %p186, %p187
      %p189 = scmp.ne.s32.totalorder %s181, %s183
      %p190 = scmp.eq.s32.totalorder %s26, 1
      %p191 = por %p189, %p190
      %p192 = scmp.ne.s32.totalorder %s183, %s184
      %p193 = scmp.eq.s32.totalorder %s26, 0
      %p194 = por %p192, %p193
      %p195 = scmp.ne.s32.totalorder %s183, %s184
      %p196 = scmp.eq.s32.totalorder %s27, 1
      %p197 = por %p195, %p196
      %p199 = scmp.ne.s32.totalorder %s184, %s198
      %p200 = scmp.eq.s32.totalorder %s27, 0
      %p201 = por %p199, %p200
      %s203 = sadd.s32 %s202, 1
      %p206 = scmp.eq.s32.totalorder %s21, 1
      %p207 = scmp.ne.s32.totalorder %s202, %s204
      %p208 = scmp.eq.s32.totalorder %s21, 0
      %p209 = por %p207, %p208
      %p210 = scmp.ne.s32.totalorder %s202, %s204
      %p211 = scmp.eq.s32.totalorder %s26, 1
      %p212 = por %p210, %p211
      %p213 = scmp.ne.s32.totalorder %s204, %s205
      %p214 = scmp.eq.s32.totalorder %s26, 0
      %p215 = por %p213, %p214
      %p216 = scmp.ne.s32.totalorder %s204, %s205
      %p217 = scmp.eq.s32.totalorder %s27, 1
      %p218 = por %p216, %p217
      %p220 = scmp.ne.s32.totalorder %s205, %s219
      %p221 = scmp.eq.s32.totalorder %s27, 0
      %p222 = por %p220, %p221
      %s224 = sadd.s32 %s223, 1
      %p227 = scmp.eq.s32.totalorder %s21, 1
      %p228 = scmp.ne.s32.totalorder %s223, %s225
      %p229 = scmp.eq.s32.totalorder %s21, 0
      %p230 = por %p228, %p229
      %p231 = scmp.ne.s32.totalorder %s223, %s225
      %p232 = scmp.eq.s32.totalorder %s26, 1
      %p233 = por %p231, %p232
      %p234 = scmp.ne.s32.totalorder %s225, %s226
      %p235 = scmp.eq.s32.totalorder %s26, 0
      %p236 = por %p234, %p235
      %p237 = scmp.ne.s32.totalorder %s225, %s226
      %p238 = scmp.eq.s32.totalorder %s27, 1
      %p239 = por %p237, %p238
      %p241 = scmp.ne.s32.totalorder %s226, %s240
      %p242 = scmp.eq.s32.totalorder %s27, 0
      %p243 = por %p241, %p242
      %s245 = sadd.s32 %s244, 1
      %p248 = scmp.eq.s32.totalorder %s21, 1
      %p249 = scmp.ne.s32.totalorder %s244, %s246
      %p250 = scmp.eq.s32.totalorder %s21, 0
      %p251 = por %p249, %p250
      %p252 = scmp.ne.s32.totalorder %s244, %s246
      %p253 = scmp.eq.s32.totalorder %s26, 1
      %p254 = por %p252, %p253
      %p255 = scmp.ne.s32.totalorder %s246, %s247
      %p256 = scmp.eq.s32.totalorder %s26, 0
      %p257 = por %p255, %p256
      %p258 = scmp.ne.s32.totalorder %s246, %s247
      %p259 = scmp.eq.s32.totalorder %s27, 1
      %p260 = por %p258, %p259
      %p262 = scmp.ne.s32.totalorder %s247, %s261
      %p263 = scmp.eq.s32.totalorder %s27, 0
      %p264 = por %p262, %p263
      %s266 = sadd.s32 %s265, 1
      %p269 = scmp.eq.s32.totalorder %s21, 1
      %p270 = scmp.ne.s32.totalorder %s265, %s267
      %p271 = scmp.eq.s32.totalorder %s21, 0
      %p272 = por %p270, %p271
      %p273 = scmp.ne.s32.totalorder %s265, %s267
      %p274 = scmp.eq.s32.totalorder %s26, 1
      %p275 = por %p273, %p274
      %p276 = scmp.ne.s32.totalorder %s267, %s268
      %p277 = scmp.eq.s32.totalorder %s26, 0
      %p278 = por %p276, %p277
      %p279 = scmp.ne.s32.totalorder %s267, %s268
      %p280 = scmp.eq.s32.totalorder %s27, 1
      %p281 = por %p279, %p280
      %p283 = scmp.ne.s32.totalorder %s268, %s282
      %p284 = scmp.eq.s32.totalorder %s27, 0
      %p285 = por %p283, %p284
      %s286 = ssub.s32 %s21, %s28
      %p287 = scmp.eq.s32.totalorder %s286, 0
      %s289 = sadd.s32 %s288, 1
      %s290 = scalar_select %p287, %s288, %s289
      %p293 = pneg %p287
      %p294 = scmp.eq.s32.totalorder %s21, 1
      %p295 = por %p293, %p294
      %p296 = scmp.ne.s32.totalorder %s288, %s291
      %p297 = scmp.eq.s32.totalorder %s21, 0
      %p298 = por %p296, %p297
      %p299 = scmp.ne.s32.totalorder %s288, %s291
      %p300 = scmp.eq.s32.totalorder %s26, 1
      %p301 = por %p299, %p300
      %p302 = scmp.ne.s32.totalorder %s291, %s292
      %p303 = scmp.eq.s32.totalorder %s26, 0
      %p304 = por %p302, %p303
      %p305 = scmp.ne.s32.totalorder %s291, %s292
      %p306 = scmp.eq.s32.totalorder %s27, 1
      %p307 = por %p305, %p306
      %p309 = scmp.ne.s32.totalorder %s292, %s308
      %p310 = scmp.eq.s32.totalorder %s27, 0
      %p311 = por %p309, %p310
      %p312 = scmp.le.s32.totalorder 1, %s21
      %p313 = scmp.lt.s32.totalorder %s21, 3
      %p314 = pnand %p312, %p313
      %p315 = pneg %p314
      // Predicated region
      $region9: #{quantum_wavenet_forward.1} parent=5 // pred_check
        _
      $region10: #{quantum_wavenet_forward.1} parent=5 // pred_check_branch
        %317 = sbr.rel (%p314) target = $region12
      $region11: #{quantum_wavenet_forward.1} parent=5 // pred_region
        %s318 = ssub.s32 %s21, 1
        // Predicated region
        $region13: #{quantum_wavenet_forward.1} parent=11 // pred_check
          %p319 = pneg %p68
        $region14: #{quantum_wavenet_forward.1} parent=11 // pred_check_branch
          %321 = sbr.rel (%p319) target = $region16
        $region15: #{quantum_wavenet_forward.1} parent=11 // pred_region
          _
        $region16: #{quantum_wavenet_forward.1} parent=11 // pred_fallthru
          _
        // Predicated region
        $region17: #{quantum_wavenet_forward.1} parent=11 // pred_check
          %p322 = pneg %p89
        $region18: #{quantum_wavenet_forward.1} parent=11 // pred_check_branch
          %324 = sbr.rel (%p322) target = $region20
        $region19: #{quantum_wavenet_forward.1} parent=11 // pred_region
          _
        $region20: #{quantum_wavenet_forward.1} parent=11 // pred_fallthru
          _
        // Predicated region
        $region21: #{quantum_wavenet_forward.1} parent=11 // pred_check
          %p325 = pneg %p110
        $region22: #{quantum_wavenet_forward.1} parent=11 // pred_check_branch
          %327 = sbr.rel (%p325) target = $region24
        $region23: #{quantum_wavenet_forward.1} parent=11 // pred_region
          %s329 = ssub.s32 12288, 12288
          %330 = vsyncadd [#allocation3], %s329
          %s331 = sshll.u32 [#allocation2], 4
          %s332 = int_to_ptr.vmem [resolvable:$true] %s331
          %337 = dma.hbm_to_vmem [thread:$0]  %s3, 12288, %s332, [#allocation3], 128, 128, 8
        $region24: #{quantum_wavenet_forward.1} parent=11 // pred_fallthru
          _
        // Predicated region
        $region25: #{quantum_wavenet_forward.1} parent=11 // pred_check
          %p338 = pneg %p131
        $region26: #{quantum_wavenet_forward.1} parent=11 // pred_check_branch
          %340 = sbr.rel (%p338) target = $region28
        $region27: #{quantum_wavenet_forward.1} parent=11 // pred_region
          %s342 = ssub.s32 12288, 12288
          %343 = vsyncadd [#allocation5], %s342
          %s344 = sshll.u32 [#allocation4], 4
          %s345 = int_to_ptr.vmem [resolvable:$true] %s344
          %350 = dma.hbm_to_vmem [thread:$0]  %s4, 12288, %s345, [#allocation5], 128, 128, 8
        $region28: #{quantum_wavenet_forward.1} parent=11 // pred_fallthru
          _
        // Predicated region
        $region29: #{quantum_wavenet_forward.1} parent=11 // pred_check
          %p351 = pneg %p152
        $region30: #{quantum_wavenet_forward.1} parent=11 // pred_check_branch
          %353 = sbr.rel (%p351) target = $region32
        $region31: #{quantum_wavenet_forward.1} parent=11 // pred_region
          _
        $region32: #{quantum_wavenet_forward.1} parent=11 // pred_fallthru
          _
        // Predicated region
        $region33: #{quantum_wavenet_forward.1} parent=11 // pred_check
          %p354 = pneg %p173
        $region34: #{quantum_wavenet_forward.1} parent=11 // pred_check_branch
          %356 = sbr.rel (%p354) target = $region36
        $region35: #{quantum_wavenet_forward.1} parent=11 // pred_region
          %s358 = ssub.s32 12288, 12288
          %359 = vsyncadd [#allocation5], %s358
          %s360 = sshll.u32 [#allocation6], 4
          %s361 = int_to_ptr.vmem [resolvable:$true] %s360
          %366 = dma.hbm_to_vmem [thread:$0]  %s6, 12288, %s361, [#allocation5], 128, 128, 8
        $region36: #{quantum_wavenet_forward.1} parent=11 // pred_fallthru
          _
        // Predicated region
        $region37: #{quantum_wavenet_forward.1} parent=11 // pred_check
          %p367 = pneg %p194
        $region38: #{quantum_wavenet_forward.1} parent=11 // pred_check_branch
          %369 = sbr.rel (%p367) target = $region40
        $region39: #{quantum_wavenet_forward.1} parent=11 // pred_region
          _
        $region40: #{quantum_wavenet_forward.1} parent=11 // pred_fallthru
          _
        // Predicated region
        $region41: #{quantum_wavenet_forward.1} parent=11 // pred_check
          %p370 = pneg %p215
        $region42: #{quantum_wavenet_forward.1} parent=11 // pred_check_branch
          %372 = sbr.rel (%p370) target = $region44
        $region43: #{quantum_wavenet_forward.1} parent=11 // pred_region
          %s374 = ssub.s32 1024, 1024
          %375 = vsyncadd [#allocation8], %s374
          %s376 = sshll.u32 [#allocation7], 4
          %s377 = int_to_ptr.vmem [resolvable:$true] %s376
          %382 = dma.hbm_to_vmem [thread:$0]  %s8, 1024, %s377, [#allocation8], 64, 64, 4
        $region44: #{quantum_wavenet_forward.1} parent=11 // pred_fallthru
          _
        // Predicated region
        $region45: #{quantum_wavenet_forward.1} parent=11 // pred_check
          %p383 = pneg %p236
        $region46: #{quantum_wavenet_forward.1} parent=11 // pred_check_branch
          %385 = sbr.rel (%p383) target = $region48
        $region47: #{quantum_wavenet_forward.1} parent=11 // pred_region
          _
        $region48: #{quantum_wavenet_forward.1} parent=11 // pred_fallthru
          _
        // Predicated region
        $region49: #{quantum_wavenet_forward.1} parent=11 // pred_check
          %p386 = pneg %p257
        $region50: #{quantum_wavenet_forward.1} parent=11 // pred_check_branch
          %388 = sbr.rel (%p386) target = $region52
        $region51: #{quantum_wavenet_forward.1} parent=11 // pred_region
          %s390 = ssub.s32 1024, 1024
          %391 = vsyncadd [#allocation8], %s390
          %s392 = sshll.u32 [#allocation9], 4
          %s393 = int_to_ptr.vmem [resolvable:$true] %s392
          %398 = dma.hbm_to_vmem [thread:$0]  %s10, 1024, %s393, [#allocation8], 64, 64, 4
        $region52: #{quantum_wavenet_forward.1} parent=11 // pred_fallthru
          _
        // Predicated region
        $region53: #{quantum_wavenet_forward.1} parent=11 // pred_check
          %p399 = pneg %p278
        $region54: #{quantum_wavenet_forward.1} parent=11 // pred_check_branch
          %401 = sbr.rel (%p399) target = $region56
        $region55: #{quantum_wavenet_forward.1} parent=11 // pred_region
          _
        $region56: #{quantum_wavenet_forward.1} parent=11 // pred_fallthru
          _
      $region12: #{quantum_wavenet_forward.1} parent=5 // pred_fallthru
        _
      %p402 = scmp.lt.s32.totalorder %s21, 2
      // Predicated region
      $region57: #{quantum_wavenet_forward.1} parent=5 // pred_check
        %p403 = pneg %p402
      $region58: #{quantum_wavenet_forward.1} parent=5 // pred_check_branch
        %405 = sbr.rel (%p403) target = $region60
      $region59: #{quantum_wavenet_forward.1} parent=5 // pred_region
        // Predicated region
        $region61: #{quantum_wavenet_forward.1} parent=59 // pred_check
          %p406 = pneg %p41
        $region62: #{quantum_wavenet_forward.1} parent=59 // pred_check_branch
          %408 = sbr.rel (%p406) target = $region64
        $region63: #{quantum_wavenet_forward.1} parent=59 // pred_region
          %p409 = scmp.lt.s32.totalorder %s21, 1
          %s410 = scalar_select %p409, %s21, 1
          %s411 = smul.addr %s410, 2
          %s412 = smul.addr %s411, 4
          %s413 = scalar_lea.vmem %s0, %s412
        $region64: #{quantum_wavenet_forward.1} parent=59 // pred_fallthru
          _
      $region60: #{quantum_wavenet_forward.1} parent=5 // pred_fallthru
        _
      %p414 = scmp.le.s32.totalorder 1, %s21
      %p415 = scmp.lt.s32.totalorder %s21, 3
      %p416 = pnand %p414, %p415
      %p417 = pneg %p416
      // Predicated region
      $region65: #{quantum_wavenet_forward.1} parent=5 // pred_check
        _
      $region66: #{quantum_wavenet_forward.1} parent=5 // pred_check_branch
        %419 = sbr.rel (%p416) target = $region68
      $region67: #{quantum_wavenet_forward.1} parent=5 // pred_region
        %s420 = ssub.s32 %s21, 1
        // Predicated region
        $region69: #{quantum_wavenet_forward.1} parent=67 // pred_check
          %p421 = pneg %p110
        $region70: #{quantum_wavenet_forward.1} parent=67 // pred_check_branch
          %423 = sbr.rel (%p421) target = $region72
        $region71: #{quantum_wavenet_forward.1} parent=67 // pred_region
          %424 = dma.done [#allocation3], 12288
        $region72: #{quantum_wavenet_forward.1} parent=67 // pred_fallthru
          _
        // Predicated region
        $region73: #{quantum_wavenet_forward.1} parent=67 // pred_check
          %p425 = pneg %p131
        $region74: #{quantum_wavenet_forward.1} parent=67 // pred_check_branch
          %427 = sbr.rel (%p425) target = $region76
        $region75: #{quantum_wavenet_forward.1} parent=67 // pred_region
          %428 = dma.done [#allocation5], 12288
        $region76: #{quantum_wavenet_forward.1} parent=67 // pred_fallthru
          _
        // Predicated region
        $region77: #{quantum_wavenet_forward.1} parent=67 // pred_check
          %p429 = pneg %p173
        $region78: #{quantum_wavenet_forward.1} parent=67 // pred_check_branch
          %431 = sbr.rel (%p429) target = $region80
        $region79: #{quantum_wavenet_forward.1} parent=67 // pred_region
          %432 = dma.done [#allocation5], 12288
        $region80: #{quantum_wavenet_forward.1} parent=67 // pred_fallthru
          _
        // Predicated region
        $region81: #{quantum_wavenet_forward.1} parent=67 // pred_check
          %p433 = pneg %p215
        $region82: #{quantum_wavenet_forward.1} parent=67 // pred_check_branch
          %435 = sbr.rel (%p433) target = $region84
        $region83: #{quantum_wavenet_forward.1} parent=67 // pred_region
          %436 = dma.done [#allocation8], 1024
        $region84: #{quantum_wavenet_forward.1} parent=67 // pred_fallthru
          _
        // Predicated region
        $region85: #{quantum_wavenet_forward.1} parent=67 // pred_check
          %p437 = pneg %p257
        $region86: #{quantum_wavenet_forward.1} parent=67 // pred_check_branch
          %439 = sbr.rel (%p437) target = $region88
        $region87: #{quantum_wavenet_forward.1} parent=67 // pred_region
          %440 = dma.done [#allocation8], 1024
        $region88: #{quantum_wavenet_forward.1} parent=67 // pred_fallthru
          _
        %p441 = scmp.lt.s32.totalorder %s26, 1
        %s442 = scalar_select %p441, %s26, 1
        %s443 = smul.addr %s442, 2
        %s444 = smul.addr %s443, 4
        %s445 = scalar_lea.vmem %s0, %s444
        %p446 = pneg %p47
        %p447 = pneg %p44
        %p448 = pneg %p68
        %p449 = pneg %p65
        %p450 = pneg %p89
        %p451 = pneg %p86
        %p452 = pneg %p110
        %p453 = pneg %p107
        %p454 = pneg %p131
        %p455 = pneg %p128
        %p456 = pneg %p152
        %p457 = pneg %p149
        %p458 = pneg %p173
        %p459 = pneg %p170
        %p460 = pneg %p194
        %p461 = pneg %p191
        %p462 = pneg %p215
        %p463 = pneg %p212
        %p464 = pneg %p236
        %p465 = pneg %p233
        %p466 = pneg %p257
        %p467 = pneg %p254
        %p468 = pneg %p278
        %p469 = pneg %p275
        %p470 = pneg %p304
        %p471 = pneg %p301
        %p472 = scmp.lt.s32.totalorder %s26, 1
        %s473 = scalar_select %p472, %s26, 1
        %s474 = scalar_lea.vmem %s12, %s473
        %p475 = scmp.lt.s32.totalorder %s26, 1
        %s476 = scalar_select %p475, %s26, 1
        %s477 = smul.addr %s476, 2
        %s478 = smul.addr %s477, 4
        %s479 = scalar_lea.vmem %s0, %s478
        %p480 = scmp.lt.s32.totalorder %s26, 1
        %s481 = scalar_select %p480, %s26, 1
        %s482 = scalar_lea.vmem %s12, %s481
        %v484 = vld [vmem:[%s479] sm:$0xf]
        %v485 = vld [vmem:[%s479 + $0x4] sm:$0xf]
        %v486 = vld [vmem:[%s1] sm:$0xf]
        %v487 = vld [vmem:[%s1 + $0x4] sm:$0xf]
        %v488 = vld [vmem:[%s1 + $0x8] sm:$0xf]
        %v489 = vld [vmem:[%s1 + $0xc] sm:$0xf]
        %v490 = vld [vmem:[%s1 + $0x10] sm:$0xf]
        %v491 = vld [vmem:[%s1 + $0x14] sm:$0xf]
        %v492 = vld [vmem:[%s1 + $0x18] sm:$0xf]
        %v493 = vld [vmem:[%s1 + $0x1c] sm:$0xf]
        %v494 = vld [vmem:[%s1 + $0x20] sm:$0xf]
        %v495 = vld [vmem:[%s1 + $0x24] sm:$0xf]
        %v496 = vld [vmem:[%s1 + $0x28] sm:$0xf]
        %v497 = vld [vmem:[%s1 + $0x2c] sm:$0xf]
        %v498 = vld [vmem:[%s1 + $0x30] sm:$0xf]
        %v499 = vld [vmem:[%s1 + $0x34] sm:$0xf]
        %v500 = vld [vmem:[%s1 + $0x38] sm:$0xf]
        %v501 = vld [vmem:[%s1 + $0x3c] sm:$0xf]
        %v502 = vld [vmem:[%s2] sm:$0x1]
        %v504 = vlaneseq
        %v505 = vshrl.u32 %v504, 7
        %v506 = vsub.s32 0, %v505
        %v507 = vrot.slane %v502, %v506
        %v511 = vunpack.c.l.b16 %v484
        %v512 = vunpack.c.l.b16 %v485
        %v513 = vpack.c.b16 %v512, %v511
        %v531 = vunpack.c.l.b16 %v486
        %v532 = vunpack.c.l.b16 %v487
        %v533 = vunpack.c.l.b16 %v488
        %v534 = vunpack.c.l.b16 %v489
        %v535 = vunpack.c.l.b16 %v490
        %v536 = vunpack.c.l.b16 %v491
        %v537 = vunpack.c.l.b16 %v492
        %v538 = vunpack.c.l.b16 %v493
        %v539 = vunpack.c.l.b16 %v494
        %v540 = vunpack.c.l.b16 %v495
        %v541 = vunpack.c.l.b16 %v496
        %v542 = vunpack.c.l.b16 %v497
        %v543 = vunpack.c.l.b16 %v498
        %v544 = vunpack.c.l.b16 %v499
        %v545 = vunpack.c.l.b16 %v500
        %v546 = vunpack.c.l.b16 %v501
        %v547 = vpack.c.b16 %v532, %v531
        %v548 = vpack.c.b16 %v534, %v533
        %v549 = vpack.c.b16 %v536, %v535
        %v550 = vpack.c.b16 %v538, %v537
        %v551 = vpack.c.b16 %v540, %v539
        %v552 = vpack.c.b16 %v542, %v541
        %v553 = vpack.c.b16 %v544, %v543
        %v554 = vpack.c.b16 %v546, %v545
        %563 = vmatprep.subr.bf16.mxu0 0
        %564 = vmatpush1.bf16.msra.mxu0 %v554
        %565 = vmatprep.subr.bf16.mxu0 0
        %566 = vmatpush1.bf16.msra.mxu0 %v553
        %567 = vmatprep.subr.bf16.mxu0 0
        %568 = vmatpush1.bf16.msra.mxu0 %v552
        %569 = vmatprep.subr.bf16.mxu0 0
        %570 = vmatpush1.bf16.msra.mxu0 %v551
        %571 = vmatprep.subr.bf16.mxu0 0
        %572 = vmatpush1.bf16.msra.mxu0 %v550
        %573 = vmatprep.subr.bf16.mxu0 0
        %574 = vmatpush1.bf16.msra.mxu0 %v549
        %575 = vmatprep.subr.bf16.mxu0 0
        %576 = vmatpush1.bf16.msra.mxu0 %v548
        %577 = vmatprep.subr.bf16.mxu0 0
        %578 = vmatpush1.bf16.msra.mxu0 %v547
        %579 = vmatprep.subr.bf16.mxu0 0
        %580 = vmatpush2.bf16.msra.mxu0 0
        %581 = vmatprep.subr.bf16.mxu0 0
        %582 = vmatpush2.bf16.msra.mxu0 0
        %583 = vmatprep.subr.bf16.mxu0 0
        %584 = vmatpush2.bf16.msra.mxu0 0
        %585 = vmatprep.subr.bf16.mxu0 0
        %586 = vmatpush2.bf16.msra.mxu0 0
        %587 = vmatprep.subr.bf16.mxu0 0
        %588 = vmatpush2.bf16.msra.mxu0 0
        %589 = vmatprep.subr.bf16.mxu0 0
        %590 = vmatpush2.bf16.msra.mxu0 0
        %591 = vmatprep.subr.bf16.mxu0 0
        %592 = vmatpush2.bf16.msra.mxu0 0
        %593 = vmatprep.subr.bf16.mxu0 0
        %594 = vmatpush2.bf16.msra.mxu0 0
        %595 = vmatprep.mubr.bf16.mxu0 0
        %596 = vmatmul.mubr.bf16.gmra.mxu0 %v513
        %v597 = vpop.f32.mrf.mxu0
        %v598 = vadd.f32 %v507, %v597
        %v599 = vpop.f32.mrf.mxu0
        %v600 = vpop.f32.mrf.mxu0
        %v601 = vadd.f32 %v507, %v600
        %v602 = vpop.f32.mrf.mxu0
        %603 = vdwg.mxu0
        %v604 = vlaneseq
        %v605 = vshrl.u32 %v604, 7
        %v606 = vadd.s32 %v605, 8
        %vm607 = vcmp.lt.s32.totalorder %v605, 0
        %v608 = vsub.s32 0, %v605
        %v609 = vsel %vm607, %v608, %v605
        %v610 = vshrl.u32 %v609, 4
        %v611 = vand.u32 %v609, 15
        %v612 = vsub.s32 0, %v611
        %v613 = vsel %vm607, %v612, %v611
        %vm614 = vcmp.lt.s32.totalorder %v606, 0
        %v615 = vsub.s32 0, %v606
        %v616 = vsel %vm614, %v615, %v606
        %v617 = vshrl.u32 %v616, 4
        %v618 = vand.u32 %v616, 15
        %v619 = vsub.s32 0, %v618
        %v620 = vsel %vm614, %v619, %v618
        %vm621 = vcmp.ne.s32.totalorder %v613, 0
        %vm622 = vcmp.ne.s32.totalorder %v620, 0
        %vm623 = vcmp.lt.s32.totalorder %v613, 0
        %vm624 = vcmp.lt.s32.totalorder %v620, 0
        %vm625 = vmand %vm623, %vm621
        %vm626 = vmand %vm624, %vm622
        %v627 = vadd.s32 %v613, 16
        %v628 = vadd.s32 %v620, 16
        %v629 = vsel %vm625, %v627, %v613
        %v630 = vsel %vm626, %v628, %v620
        %vm631 = vcmp.ge.s32.totalorder %v629, 1
        %vm632 = vcmp.ge.s32.totalorder %v630, 1
        %vm633 = vcmp.ge.s32.totalorder %v629, 2
        %vm634 = vcmp.ge.s32.totalorder %v630, 2
        %vm635 = vcmp.ge.s32.totalorder %v629, 4
        %vm636 = vcmp.ge.s32.totalorder %v630, 4
        %v637 = vrot.slane %v598, 7
        %v638 = vrot.slane %v601, 7
        %vm639 = vcmp.lt.s32.totalorder %v605, 1
        %v640 = vsel %vm639, %v637, %v638
        %v641 = vsel %vm639, %v638, %v637
        %v642 = vsel %vm631, 1, 0
        %v643 = vsel %vm632, 1, 0
        %vm644 = vcmp.eq.s32.totalorder %v642, 1
        %vm645 = vcmp.eq.s32.totalorder %v643, 1
        %v646 = vsel %vm644, %v641, 0.0
        %v647 = vsel %vm645, %v640, 0.0
        %v648 = vpack.c.bf16 %v647, %v646
        %v649 = vld [vmem:[#allocation2] sm:$0xff]
        %v650 = vld [vmem:[#allocation2 + $0x8] sm:$0xff]
        %v651 = vld [vmem:[#allocation2 + $0x10] sm:$0xff]
        %v652 = vld [vmem:[#allocation2 + $0x18] sm:$0xff]
        %v653 = vld [vmem:[#allocation2 + $0x20] sm:$0xff]
        %v654 = vld [vmem:[#allocation2 + $0x28] sm:$0xff]
        %v655 = vld [vmem:[#allocation2 + $0x30] sm:$0xff]
        %v656 = vld [vmem:[#allocation2 + $0x38] sm:$0xff]
        %v657 = vld [vmem:[#allocation2 + $0x40] sm:$0xff]
        %v658 = vld [vmem:[#allocation2 + $0x48] sm:$0xff]
        %v659 = vld [vmem:[#allocation2 + $0x50] sm:$0xff]
        %v660 = vld [vmem:[#allocation2 + $0x58] sm:$0xff]
        %v661 = vld [vmem:[#allocation2 + $0x60] sm:$0xff]
        %v662 = vld [vmem:[#allocation2 + $0x68] sm:$0xff]
        %v663 = vld [vmem:[#allocation2 + $0x70] sm:$0xff]
        %v664 = vld [vmem:[#allocation2 + $0x78] sm:$0xff]
        %v665 = vpack.c.bf16 %v601, %v598
        %v666 = vld [vmem:[#allocation4] sm:$0xff]
        %v667 = vld [vmem:[#allocation4 + $0x8] sm:$0xff]
        %v668 = vld [vmem:[#allocation4 + $0x10] sm:$0xff]
        %v669 = vld [vmem:[#allocation4 + $0x18] sm:$0xff]
        %v670 = vld [vmem:[#allocation4 + $0x20] sm:$0xff]
        %v671 = vld [vmem:[#allocation4 + $0x28] sm:$0xff]
        %v672 = vld [vmem:[#allocation4 + $0x30] sm:$0xff]
        %v673 = vld [vmem:[#allocation4 + $0x38] sm:$0xff]
        %v674 = vld [vmem:[#allocation4 + $0x40] sm:$0xff]
        %v675 = vld [vmem:[#allocation4 + $0x48] sm:$0xff]
        %v676 = vld [vmem:[#allocation4 + $0x50] sm:$0xff]
        %v677 = vld [vmem:[#allocation4 + $0x58] sm:$0xff]
        %v678 = vld [vmem:[#allocation4 + $0x60] sm:$0xff]
        %v679 = vld [vmem:[#allocation4 + $0x68] sm:$0xff]
        %v680 = vld [vmem:[#allocation4 + $0x70] sm:$0xff]
        %v681 = vld [vmem:[#allocation4 + $0x78] sm:$0xff]
        %v698 = vunpack.c.l.b16 %v666
        %v699 = vunpack.c.h.b16 %v666
        %v700 = vunpack.c.l.b16 %v667
        %v701 = vunpack.c.h.b16 %v667
        %v702 = vunpack.c.l.b16 %v668
        %v703 = vunpack.c.h.b16 %v668
        %v704 = vunpack.c.l.b16 %v669
        %v705 = vunpack.c.h.b16 %v669
        %v706 = vunpack.c.l.b16 %v670
        %v707 = vunpack.c.h.b16 %v670
        %v708 = vunpack.c.l.b16 %v671
        %v709 = vunpack.c.h.b16 %v671
        %v710 = vunpack.c.l.b16 %v672
        %v711 = vunpack.c.h.b16 %v672
        %v712 = vunpack.c.l.b16 %v673
        %v713 = vunpack.c.h.b16 %v673
        %v714 = vunpack.c.l.b16 %v674
        %v715 = vunpack.c.h.b16 %v674
        %v716 = vunpack.c.l.b16 %v675
        %v717 = vunpack.c.h.b16 %v675
        %v718 = vunpack.c.l.b16 %v676
        %v719 = vunpack.c.h.b16 %v676
        %v720 = vunpack.c.l.b16 %v677
        %v721 = vunpack.c.h.b16 %v677
        %v722 = vunpack.c.l.b16 %v678
        %v723 = vunpack.c.h.b16 %v678
        %v724 = vunpack.c.l.b16 %v679
        %v725 = vunpack.c.h.b16 %v679
        %v726 = vunpack.c.l.b16 %v680
        %v727 = vunpack.c.h.b16 %v680
        %v728 = vunpack.c.l.b16 %v681
        %v729 = vunpack.c.h.b16 %v681
        %v730 = vpack.c.b16 %v700, %v698
        %v731 = vpack.c.b16 %v701, %v699
        %v732 = vpack.c.b16 %v704, %v702
        %v733 = vpack.c.b16 %v705, %v703
        %v734 = vpack.c.b16 %v708, %v706
        %v735 = vpack.c.b16 %v709, %v707
        %v736 = vpack.c.b16 %v712, %v710
        %v737 = vpack.c.b16 %v713, %v711
        %v738 = vpack.c.b16 %v716, %v714
        %v739 = vpack.c.b16 %v717, %v715
        %v740 = vpack.c.b16 %v720, %v718
        %v741 = vpack.c.b16 %v721, %v719
        %v742 = vpack.c.b16 %v724, %v722
        %v743 = vpack.c.b16 %v725, %v723
        %v744 = vpack.c.b16 %v728, %v726
        %v745 = vpack.c.b16 %v729, %v727
        %762 = vmatprep.subr.bf16.mxu0 %v745
        %763 = vmatpush1.bf16.msra.mxu0 %v744
        %764 = vmatprep.subr.bf16.mxu0 %v743
        %765 = vmatpush1.bf16.msra.mxu0 %v742
        %766 = vmatprep.subr.bf16.mxu0 %v741
        %767 = vmatpush1.bf16.msra.mxu0 %v740
        %768 = vmatprep.subr.bf16.mxu0 %v739
        %769 = vmatpush1.bf16.msra.mxu0 %v738
        %770 = vmatprep.subr.bf16.mxu0 %v737
        %771 = vmatpush1.bf16.msra.mxu0 %v736
        %772 = vmatprep.subr.bf16.mxu0 %v735
        %773 = vmatpush1.bf16.msra.mxu0 %v734
        %774 = vmatprep.subr.bf16.mxu0 %v733
        %775 = vmatpush1.bf16.msra.mxu0 %v732
        %776 = vmatprep.subr.bf16.mxu0 %v731
        %777 = vmatpush1.bf16.msra.mxu0 %v730
        %778 = vmatprep.subr.bf16.mxu0 0
        %779 = vmatpush2.bf16.msra.mxu0 0
        %780 = vmatprep.subr.bf16.mxu0 0
        %781 = vmatpush2.bf16.msra.mxu0 0
        %782 = vmatprep.subr.bf16.mxu0 0
        %783 = vmatpush2.bf16.msra.mxu0 0
        %784 = vmatprep.subr.bf16.mxu0 0
        %785 = vmatpush2.bf16.msra.mxu0 0
        %786 = vmatprep.subr.bf16.mxu0 0
        %787 = vmatpush2.bf16.msra.mxu0 0
        %788 = vmatprep.subr.bf16.mxu0 0
        %789 = vmatpush2.bf16.msra.mxu0 0
        %790 = vmatprep.subr.bf16.mxu0 0
        %791 = vmatpush2.bf16.msra.mxu0 0
        %792 = vmatprep.subr.bf16.mxu0 0
        %793 = vmatpush2.bf16.msra.mxu0 0
        %794 = vmatprep.mubr.bf16.mxu0 0
        %795 = vmatmul.mubr.bf16.gmra.mxu0 %v665
        %v796 = vpop.f32.mrf.mxu0
        %v797 = vadd.f32 0.0, %v796
        %v798 = vpop.f32.mrf.mxu0
        %v799 = vadd.f32 0.0, %v798
        %v800 = vpop.f32.mrf.mxu0
        %v801 = vadd.f32 0.0, %v800
        %v802 = vpop.f32.mrf.mxu0
        %v803 = vadd.f32 0.0, %v802
        %804 = vdwg.mxu0
        %v821 = vunpack.c.l.b16 %v649
        %v822 = vunpack.c.h.b16 %v649
        %v823 = vunpack.c.l.b16 %v650
        %v824 = vunpack.c.h.b16 %v650
        %v825 = vunpack.c.l.b16 %v651
        %v826 = vunpack.c.h.b16 %v651
        %v827 = vunpack.c.l.b16 %v652
        %v828 = vunpack.c.h.b16 %v652
        %v829 = vunpack.c.l.b16 %v653
        %v830 = vunpack.c.h.b16 %v653
        %v831 = vunpack.c.l.b16 %v654
        %v832 = vunpack.c.h.b16 %v654
        %v833 = vunpack.c.l.b16 %v655
        %v834 = vunpack.c.h.b16 %v655
        %v835 = vunpack.c.l.b16 %v656
        %v836 = vunpack.c.h.b16 %v656
        %v837 = vunpack.c.l.b16 %v657
        %v838 = vunpack.c.h.b16 %v657
        %v839 = vunpack.c.l.b16 %v658
        %v840 = vunpack.c.h.b16 %v658
        %v841 = vunpack.c.l.b16 %v659
        %v842 = vunpack.c.h.b16 %v659
        %v843 = vunpack.c.l.b16 %v660
        %v844 = vunpack.c.h.b16 %v660
        %v845 = vunpack.c.l.b16 %v661
        %v846 = vunpack.c.h.b16 %v661
        %v847 = vunpack.c.l.b16 %v662
        %v848 = vunpack.c.h.b16 %v662
        %v849 = vunpack.c.l.b16 %v663
        %v850 = vunpack.c.h.b16 %v663
        %v851 = vunpack.c.l.b16 %v664
        %v852 = vunpack.c.h.b16 %v664
        %v853 = vpack.c.b16 %v823, %v821
        %v854 = vpack.c.b16 %v824, %v822
        %v855 = vpack.c.b16 %v827, %v825
        %v856 = vpack.c.b16 %v828, %v826
        %v857 = vpack.c.b16 %v831, %v829
        %v858 = vpack.c.b16 %v832, %v830
        %v859 = vpack.c.b16 %v835, %v833
        %v860 = vpack.c.b16 %v836, %v834
        %v861 = vpack.c.b16 %v839, %v837
        %v862 = vpack.c.b16 %v840, %v838
        %v863 = vpack.c.b16 %v843, %v841
        %v864 = vpack.c.b16 %v844, %v842
        %v865 = vpack.c.b16 %v847, %v845
        %v866 = vpack.c.b16 %v848, %v846
        %v867 = vpack.c.b16 %v851, %v849
        %v868 = vpack.c.b16 %v852, %v850
        %885 = vmatprep.subr.bf16.mxu0 %v868
        %886 = vmatpush1.bf16.msra.mxu0 %v867
        %887 = vmatprep.subr.bf16.mxu0 %v866
        %888 = vmatpush1.bf16.msra.mxu0 %v865
        %889 = vmatprep.subr.bf16.mxu0 %v864
        %890 = vmatpush1.bf16.msra.mxu0 %v863
        %891 = vmatprep.subr.bf16.mxu0 %v862
        %892 = vmatpush1.bf16.msra.mxu0 %v861
        %893 = vmatprep.subr.bf16.mxu0 %v860
        %894 = vmatpush1.bf16.msra.mxu0 %v859
        %895 = vmatprep.subr.bf16.mxu0 %v858
        %896 = vmatpush1.bf16.msra.mxu0 %v857
        %897 = vmatprep.subr.bf16.mxu0 %v856
        %898 = vmatpush1.bf16.msra.mxu0 %v855
        %899 = vmatprep.subr.bf16.mxu0 %v854
        %900 = vmatpush1.bf16.msra.mxu0 %v853
        %901 = vmatprep.subr.bf16.mxu0 0
        %902 = vmatpush2.bf16.msra.mxu0 0
        %903 = vmatprep.subr.bf16.mxu0 0
        %904 = vmatpush2.bf16.msra.mxu0 0
        %905 = vmatprep.subr.bf16.mxu0 0
        %906 = vmatpush2.bf16.msra.mxu0 0
        %907 = vmatprep.subr.bf16.mxu0 0
        %908 = vmatpush2.bf16.msra.mxu0 0
        %909 = vmatprep.subr.bf16.mxu0 0
        %910 = vmatpush2.bf16.msra.mxu0 0
        %911 = vmatprep.subr.bf16.mxu0 0
        %912 = vmatpush2.bf16.msra.mxu0 0
        %913 = vmatprep.subr.bf16.mxu0 0
        %914 = vmatpush2.bf16.msra.mxu0 0
        %915 = vmatprep.subr.bf16.mxu0 0
        %916 = vmatpush2.bf16.msra.mxu0 0
        %917 = vmatprep.mubr.bf16.mxu0 0
        %918 = vmatmul.mubr.bf16.gmra.mxu0 %v648
        %v919 = vpop.f32.mrf.mxu0
        %v920 = vadd.f32 %v797, %v919
        %v921 = vpop.f32.mrf.mxu0
        %v922 = vadd.f32 %v799, %v921
        %v923 = vpop.f32.mrf.mxu0
        %v924 = vadd.f32 %v801, %v923
        %v925 = vpop.f32.mrf.mxu0
        %v926 = vadd.f32 %v803, %v925
        %927 = vdwg.mxu0
        %v928 = vld [vmem:[%s5] sm:$0x3]
        %v930 = vlaneseq
        %v931 = vshrl.u32 %v930, 7
        %v932 = vsub.s32 0, %v931
        %v933 = vrot.slane %v928, %v932
        %v934 = vlaneseq
        %v935 = vshrl.u32 %v934, 7
        %v936 = vsub.s32 1, %v935
        %v937 = vrot.slane %v928, %v936
        %v940 = vadd.f32 %v920, %v933
        %v941 = vadd.f32 %v922, %v937
        %v942 = vadd.f32 %v924, %v933
        %v943 = vadd.f32 %v926, %v937
        %v944 = vtanh.pop %v940
        %v945 = vtanh.pop %v942
        %v946 = vxor.u32 %v941, 2147483648
        %v947 = vxor.u32 %v943, 2147483648
        %v948 = vmul.f32 %v946, 1.442695
        %v949 = vpow.pop %v948
        %v950 = vmul.f32 %v947, 1.442695
        %v951 = vpow.pop %v950
        %v952 = vadd.f32 %v949, 1.0
        %v953 = vadd.f32 %v951, 1.0
        %v954 = vrcp.pop %v952
        %v955 = vmul.f32 1.0, %v954
        %v956 = vrcp.pop %v953
        %v957 = vmul.f32 1.0, %v956
        %v958 = vmul.f32 %v944, %v955
        %v959 = vmul.f32 %v945, %v957
        %v960 = vpack.c.bf16 %v959, %v958
        %v961 = vld [vmem:[#allocation6] sm:$0xff]
        %v962 = vld [vmem:[#allocation6 + $0x8] sm:$0xff]
        %v963 = vld [vmem:[#allocation6 + $0x10] sm:$0xff]
        %v964 = vld [vmem:[#allocation6 + $0x18] sm:$0xff]
        %v965 = vld [vmem:[#allocation6 + $0x20] sm:$0xff]
        %v966 = vld [vmem:[#allocation6 + $0x28] sm:$0xff]
        %v967 = vld [vmem:[#allocation6 + $0x30] sm:$0xff]
        %v968 = vld [vmem:[#allocation6 + $0x38] sm:$0xff]
        %v969 = vld [vmem:[#allocation6 + $0x40] sm:$0xff]
        %v970 = vld [vmem:[#allocation6 + $0x48] sm:$0xff]
        %v971 = vld [vmem:[#allocation6 + $0x50] sm:$0xff]
        %v972 = vld [vmem:[#allocation6 + $0x58] sm:$0xff]
        %v973 = vld [vmem:[#allocation6 + $0x60] sm:$0xff]
        %v974 = vld [vmem:[#allocation6 + $0x68] sm:$0xff]
        %v975 = vld [vmem:[#allocation6 + $0x70] sm:$0xff]
        %v976 = vld [vmem:[#allocation6 + $0x78] sm:$0xff]
        %v977 = vld [vmem:[%s7] sm:$0x3]
        %v979 = vlaneseq
        %v980 = vshrl.u32 %v979, 7
        %v981 = vsub.s32 0, %v980
        %v982 = vrot.slane %v977, %v981
        %v983 = vlaneseq
        %v984 = vshrl.u32 %v983, 7
        %v985 = vsub.s32 1, %v984
        %v986 = vrot.slane %v977, %v985
        %v1005 = vunpack.c.l.b16 %v961
        %v1006 = vunpack.c.h.b16 %v961
        %v1007 = vunpack.c.l.b16 %v962
        %v1008 = vunpack.c.h.b16 %v962
        %v1009 = vunpack.c.l.b16 %v963
        %v1010 = vunpack.c.h.b16 %v963
        %v1011 = vunpack.c.l.b16 %v964
        %v1012 = vunpack.c.h.b16 %v964
        %v1013 = vunpack.c.l.b16 %v965
        %v1014 = vunpack.c.h.b16 %v965
        %v1015 = vunpack.c.l.b16 %v966
        %v1016 = vunpack.c.h.b16 %v966
        %v1017 = vunpack.c.l.b16 %v967
        %v1018 = vunpack.c.h.b16 %v967
        %v1019 = vunpack.c.l.b16 %v968
        %v1020 = vunpack.c.h.b16 %v968
        %v1021 = vunpack.c.l.b16 %v969
        %v1022 = vunpack.c.h.b16 %v969
        %v1023 = vunpack.c.l.b16 %v970
        %v1024 = vunpack.c.h.b16 %v970
        %v1025 = vunpack.c.l.b16 %v971
        %v1026 = vunpack.c.h.b16 %v971
        %v1027 = vunpack.c.l.b16 %v972
        %v1028 = vunpack.c.h.b16 %v972
        %v1029 = vunpack.c.l.b16 %v973
        %v1030 = vunpack.c.h.b16 %v973
        %v1031 = vunpack.c.l.b16 %v974
        %v1032 = vunpack.c.h.b16 %v974
        %v1033 = vunpack.c.l.b16 %v975
        %v1034 = vunpack.c.h.b16 %v975
        %v1035 = vunpack.c.l.b16 %v976
        %v1036 = vunpack.c.h.b16 %v976
        %v1037 = vpack.c.b16 %v1007, %v1005
        %v1038 = vpack.c.b16 %v1008, %v1006
        %v1039 = vpack.c.b16 %v1011, %v1009
        %v1040 = vpack.c.b16 %v1012, %v1010
        %v1041 = vpack.c.b16 %v1015, %v1013
        %v1042 = vpack.c.b16 %v1016, %v1014
        %v1043 = vpack.c.b16 %v1019, %v1017
        %v1044 = vpack.c.b16 %v1020, %v1018
        %v1045 = vpack.c.b16 %v1023, %v1021
        %v1046 = vpack.c.b16 %v1024, %v1022
        %v1047 = vpack.c.b16 %v1027, %v1025
        %v1048 = vpack.c.b16 %v1028, %v1026
        %v1049 = vpack.c.b16 %v1031, %v1029
        %v1050 = vpack.c.b16 %v1032, %v1030
        %v1051 = vpack.c.b16 %v1035, %v1033
        %v1052 = vpack.c.b16 %v1036, %v1034
        %1069 = vmatprep.subr.bf16.mxu0 %v1052
        %1070 = vmatpush1.bf16.msra.mxu0 %v1051
        %1071 = vmatprep.subr.bf16.mxu0 %v1050
        %1072 = vmatpush1.bf16.msra.mxu0 %v1049
        %1073 = vmatprep.subr.bf16.mxu0 %v1048
        %1074 = vmatpush1.bf16.msra.mxu0 %v1047
        %1075 = vmatprep.subr.bf16.mxu0 %v1046
        %1076 = vmatpush1.bf16.msra.mxu0 %v1045
        %1077 = vmatprep.subr.bf16.mxu0 %v1044
        %1078 = vmatpush1.bf16.msra.mxu0 %v1043
        %1079 = vmatprep.subr.bf16.mxu0 %v1042
        %1080 = vmatpush1.bf16.msra.mxu0 %v1041
        %1081 = vmatprep.subr.bf16.mxu0 %v1040
        %1082 = vmatpush1.bf16.msra.mxu0 %v1039
        %1083 = vmatprep.subr.bf16.mxu0 %v1038
        %1084 = vmatpush1.bf16.msra.mxu0 %v1037
        %1085 = vmatprep.subr.bf16.mxu0 0
        %1086 = vmatpush2.bf16.msra.mxu0 0
        %1087 = vmatprep.subr.bf16.mxu0 0
        %1088 = vmatpush2.bf16.msra.mxu0 0
        %1089 = vmatprep.subr.bf16.mxu0 0
        %1090 = vmatpush2.bf16.msra.mxu0 0
        %1091 = vmatprep.subr.bf16.mxu0 0
        %1092 = vmatpush2.bf16.msra.mxu0 0
        %1093 = vmatprep.subr.bf16.mxu0 0
        %1094 = vmatpush2.bf16.msra.mxu0 0
        %1095 = vmatprep.subr.bf16.mxu0 0
        %1096 = vmatpush2.bf16.msra.mxu0 0
        %1097 = vmatprep.subr.bf16.mxu0 0
        %1098 = vmatpush2.bf16.msra.mxu0 0
        %1099 = vmatprep.subr.bf16.mxu0 0
        %1100 = vmatpush2.bf16.msra.mxu0 0
        %1101 = vmatprep.mubr.bf16.mxu0 0
        %1102 = vmatmul.mubr.bf16.gmra.mxu0 %v960
        %v1103 = vpop.f32.mrf.mxu0
        %v1104 = vadd.f32 %v982, %v1103
        %v1105 = vpop.f32.mrf.mxu0
        %v1106 = vadd.f32 %v986, %v1105
        %v1107 = vpop.f32.mrf.mxu0
        %v1108 = vadd.f32 %v982, %v1107
        %v1109 = vpop.f32.mrf.mxu0
        %v1110 = vadd.f32 %v986, %v1109
        %1111 = vdwg.mxu0
        %v1112 = vadd.f32 %v1104, 0.0
        %v1113 = vadd.f32 %v1108, 0.0
        %v1114 = vadd.f32 %v598, %v1106
        %v1115 = vadd.f32 %v601, %v1110
        %v1116 = vrot.slane %v1114, 6
        %v1117 = vrot.slane %v1115, 6
        %vm1118 = vcmp.lt.s32.totalorder %v605, 2
        %v1119 = vsel %vm1118, %v1116, %v1117
        %v1120 = vsel %vm1118, %v1117, %v1116
        %v1121 = vsel %vm633, 1, 0
        %v1122 = vsel %vm634, 1, 0
        %vm1123 = vcmp.eq.s32.totalorder %v1121, 1
        %vm1124 = vcmp.eq.s32.totalorder %v1122, 1
        %v1125 = vsel %vm1123, %v1120, 0.0
        %v1126 = vsel %vm1124, %v1119, 0.0
        %v1127 = vpack.c.bf16 %v1126, %v1125
        %s1128 = scalar_lea.vmem [#allocation2], 128
        %v1129 = vld [vmem:[%s1128] sm:$0xff]
        %v1130 = vld [vmem:[%s1128 + $0x8] sm:$0xff]
        %v1131 = vld [vmem:[%s1128 + $0x10] sm:$0xff]
        %v1132 = vld [vmem:[%s1128 + $0x18] sm:$0xff]
        %v1133 = vld [vmem:[%s1128 + $0x20] sm:$0xff]
        %v1134 = vld [vmem:[%s1128 + $0x28] sm:$0xff]
        %v1135 = vld [vmem:[%s1128 + $0x30] sm:$0xff]
        %v1136 = vld [vmem:[%s1128 + $0x38] sm:$0xff]
        %v1137 = vld [vmem:[%s1128 + $0x40] sm:$0xff]
        %v1138 = vld [vmem:[%s1128 + $0x48] sm:$0xff]
        %v1139 = vld [vmem:[%s1128 + $0x50] sm:$0xff]
        %v1140 = vld [vmem:[%s1128 + $0x58] sm:$0xff]
        %v1141 = vld [vmem:[%s1128 + $0x60] sm:$0xff]
        %v1142 = vld [vmem:[%s1128 + $0x68] sm:$0xff]
        %v1143 = vld [vmem:[%s1128 + $0x70] sm:$0xff]
        %v1144 = vld [vmem:[%s1128 + $0x78] sm:$0xff]
        %v1145 = vpack.c.bf16 %v1115, %v1114
        %s1146 = scalar_lea.vmem [#allocation4], 128
        %v1147 = vld [vmem:[%s1146] sm:$0xff]
        %v1148 = vld [vmem:[%s1146 + $0x8] sm:$0xff]
        %v1149 = vld [vmem:[%s1146 + $0x10] sm:$0xff]
        %v1150 = vld [vmem:[%s1146 + $0x18] sm:$0xff]
        %v1151 = vld [vmem:[%s1146 + $0x20] sm:$0xff]
        %v1152 = vld [vmem:[%s1146 + $0x28] sm:$0xff]
        %v1153 = vld [vmem:[%s1146 + $0x30] sm:$0xff]
        %v1154 = vld [vmem:[%s1146 + $0x38] sm:$0xff]
        %v1155 = vld [vmem:[%s1146 + $0x40] sm:$0xff]
        %v1156 = vld [vmem:[%s1146 + $0x48] sm:$0xff]
        %v1157 = vld [vmem:[%s1146 + $0x50] sm:$0xff]
        %v1158 = vld [vmem:[%s1146 + $0x58] sm:$0xff]
        %v1159 = vld [vmem:[%s1146 + $0x60] sm:$0xff]
        %v1160 = vld [vmem:[%s1146 + $0x68] sm:$0xff]
        %v1161 = vld [vmem:[%s1146 + $0x70] sm:$0xff]
        %v1162 = vld [vmem:[%s1146 + $0x78] sm:$0xff]
        %v1179 = vunpack.c.l.b16 %v1147
        %v1180 = vunpack.c.h.b16 %v1147
        %v1181 = vunpack.c.l.b16 %v1148
        %v1182 = vunpack.c.h.b16 %v1148
        %v1183 = vunpack.c.l.b16 %v1149
        %v1184 = vunpack.c.h.b16 %v1149
        %v1185 = vunpack.c.l.b16 %v1150
        %v1186 = vunpack.c.h.b16 %v1150
        %v1187 = vunpack.c.l.b16 %v1151
        %v1188 = vunpack.c.h.b16 %v1151
        %v1189 = vunpack.c.l.b16 %v1152
        %v1190 = vunpack.c.h.b16 %v1152
        %v1191 = vunpack.c.l.b16 %v1153
        %v1192 = vunpack.c.h.b16 %v1153
        %v1193 = vunpack.c.l.b16 %v1154
        %v1194 = vunpack.c.h.b16 %v1154
        %v1195 = vunpack.c.l.b16 %v1155
        %v1196 = vunpack.c.h.b16 %v1155
        %v1197 = vunpack.c.l.b16 %v1156
        %v1198 = vunpack.c.h.b16 %v1156
        %v1199 = vunpack.c.l.b16 %v1157
        %v1200 = vunpack.c.h.b16 %v1157
        %v1201 = vunpack.c.l.b16 %v1158
        %v1202 = vunpack.c.h.b16 %v1158
        %v1203 = vunpack.c.l.b16 %v1159
        %v1204 = vunpack.c.h.b16 %v1159
        %v1205 = vunpack.c.l.b16 %v1160
        %v1206 = vunpack.c.h.b16 %v1160
        %v1207 = vunpack.c.l.b16 %v1161
        %v1208 = vunpack.c.h.b16 %v1161
        %v1209 = vunpack.c.l.b16 %v1162
        %v1210 = vunpack.c.h.b16 %v1162
        %v1211 = vpack.c.b16 %v1181, %v1179
        %v1212 = vpack.c.b16 %v1182, %v1180
        %v1213 = vpack.c.b16 %v1185, %v1183
        %v1214 = vpack.c.b16 %v1186, %v1184
        %v1215 = vpack.c.b16 %v1189, %v1187
        %v1216 = vpack.c.b16 %v1190, %v1188
        %v1217 = vpack.c.b16 %v1193, %v1191
        %v1218 = vpack.c.b16 %v1194, %v1192
        %v1219 = vpack.c.b16 %v1197, %v1195
        %v1220 = vpack.c.b16 %v1198, %v1196
        %v1221 = vpack.c.b16 %v1201, %v1199
        %v1222 = vpack.c.b16 %v1202, %v1200
        %v1223 = vpack.c.b16 %v1205, %v1203
        %v1224 = vpack.c.b16 %v1206, %v1204
        %v1225 = vpack.c.b16 %v1209, %v1207
        %v1226 = vpack.c.b16 %v1210, %v1208
        %1243 = vmatprep.subr.bf16.mxu0 %v1226
        %1244 = vmatpush1.bf16.msra.mxu0 %v1225
        %1245 = vmatprep.subr.bf16.mxu0 %v1224
        %1246 = vmatpush1.bf16.msra.mxu0 %v1223
        %1247 = vmatprep.subr.bf16.mxu0 %v1222
        %1248 = vmatpush1.bf16.msra.mxu0 %v1221
        %1249 = vmatprep.subr.bf16.mxu0 %v1220
        %1250 = vmatpush1.bf16.msra.mxu0 %v1219
        %1251 = vmatprep.subr.bf16.mxu0 %v1218
        %1252 = vmatpush1.bf16.msra.mxu0 %v1217
        %1253 = vmatprep.subr.bf16.mxu0 %v1216
        %1254 = vmatpush1.bf16.msra.mxu0 %v1215
        %1255 = vmatprep.subr.bf16.mxu0 %v1214
        %1256 = vmatpush1.bf16.msra.mxu0 %v1213
        %1257 = vmatprep.subr.bf16.mxu0 %v1212
        %1258 = vmatpush1.bf16.msra.mxu0 %v1211
        %1259 = vmatprep.subr.bf16.mxu0 0
        %1260 = vmatpush2.bf16.msra.mxu0 0
        %1261 = vmatprep.subr.bf16.mxu0 0
        %1262 = vmatpush2.bf16.msra.mxu0 0
        %1263 = vmatprep.subr.bf16.mxu0 0
        %1264 = vmatpush2.bf16.msra.mxu0 0
        %1265 = vmatprep.subr.bf16.mxu0 0
        %1266 = vmatpush2.bf16.msra.mxu0 0
        %1267 = vmatprep.subr.bf16.mxu0 0
        %1268 = vmatpush2.bf16.msra.mxu0 0
        %1269 = vmatprep.subr.bf16.mxu0 0
        %1270 = vmatpush2.bf16.msra.mxu0 0
        %1271 = vmatprep.subr.bf16.mxu0 0
        %1272 = vmatpush2.bf16.msra.mxu0 0
        %1273 = vmatprep.subr.bf16.mxu0 0
        %1274 = vmatpush2.bf16.msra.mxu0 0
        %1275 = vmatprep.mubr.bf16.mxu0 0
        %1276 = vmatmul.mubr.bf16.gmra.mxu0 %v1145
        %v1277 = vpop.f32.mrf.mxu0
        %v1278 = vadd.f32 0.0, %v1277
        %v1279 = vpop.f32.mrf.mxu0
        %v1280 = vadd.f32 0.0, %v1279
        %v1281 = vpop.f32.mrf.mxu0
        %v1282 = vadd.f32 0.0, %v1281
        %v1283 = vpop.f32.mrf.mxu0
        %v1284 = vadd.f32 0.0, %v1283
        %1285 = vdwg.mxu0
        %v1302 = vunpack.c.l.b16 %v1129
        %v1303 = vunpack.c.h.b16 %v1129
        %v1304 = vunpack.c.l.b16 %v1130
        %v1305 = vunpack.c.h.b16 %v1130
        %v1306 = vunpack.c.l.b16 %v1131
        %v1307 = vunpack.c.h.b16 %v1131
        %v1308 = vunpack.c.l.b16 %v1132
        %v1309 = vunpack.c.h.b16 %v1132
        %v1310 = vunpack.c.l.b16 %v1133
        %v1311 = vunpack.c.h.b16 %v1133
        %v1312 = vunpack.c.l.b16 %v1134
        %v1313 = vunpack.c.h.b16 %v1134
        %v1314 = vunpack.c.l.b16 %v1135
        %v1315 = vunpack.c.h.b16 %v1135
        %v1316 = vunpack.c.l.b16 %v1136
        %v1317 = vunpack.c.h.b16 %v1136
        %v1318 = vunpack.c.l.b16 %v1137
        %v1319 = vunpack.c.h.b16 %v1137
        %v1320 = vunpack.c.l.b16 %v1138
        %v1321 = vunpack.c.h.b16 %v1138
        %v1322 = vunpack.c.l.b16 %v1139
        %v1323 = vunpack.c.h.b16 %v1139
        %v1324 = vunpack.c.l.b16 %v1140
        %v1325 = vunpack.c.h.b16 %v1140
        %v1326 = vunpack.c.l.b16 %v1141
        %v1327 = vunpack.c.h.b16 %v1141
        %v1328 = vunpack.c.l.b16 %v1142
        %v1329 = vunpack.c.h.b16 %v1142
        %v1330 = vunpack.c.l.b16 %v1143
        %v1331 = vunpack.c.h.b16 %v1143
        %v1332 = vunpack.c.l.b16 %v1144
        %v1333 = vunpack.c.h.b16 %v1144
        %v1334 = vpack.c.b16 %v1304, %v1302
        %v1335 = vpack.c.b16 %v1305, %v1303
        %v1336 = vpack.c.b16 %v1308, %v1306
        %v1337 = vpack.c.b16 %v1309, %v1307
        %v1338 = vpack.c.b16 %v1312, %v1310
        %v1339 = vpack.c.b16 %v1313, %v1311
        %v1340 = vpack.c.b16 %v1316, %v1314
        %v1341 = vpack.c.b16 %v1317, %v1315
        %v1342 = vpack.c.b16 %v1320, %v1318
        %v1343 = vpack.c.b16 %v1321, %v1319
        %v1344 = vpack.c.b16 %v1324, %v1322
        %v1345 = vpack.c.b16 %v1325, %v1323
        %v1346 = vpack.c.b16 %v1328, %v1326
        %v1347 = vpack.c.b16 %v1329, %v1327
        %v1348 = vpack.c.b16 %v1332, %v1330
        %v1349 = vpack.c.b16 %v1333, %v1331
        %1366 = vmatprep.subr.bf16.mxu0 %v1349
        %1367 = vmatpush1.bf16.msra.mxu0 %v1348
        %1368 = vmatprep.subr.bf16.mxu0 %v1347
        %1369 = vmatpush1.bf16.msra.mxu0 %v1346
        %1370 = vmatprep.subr.bf16.mxu0 %v1345
        %1371 = vmatpush1.bf16.msra.mxu0 %v1344
        %1372 = vmatprep.subr.bf16.mxu0 %v1343
        %1373 = vmatpush1.bf16.msra.mxu0 %v1342
        %1374 = vmatprep.subr.bf16.mxu0 %v1341
        %1375 = vmatpush1.bf16.msra.mxu0 %v1340
        %1376 = vmatprep.subr.bf16.mxu0 %v1339
        %1377 = vmatpush1.bf16.msra.mxu0 %v1338
        %1378 = vmatprep.subr.bf16.mxu0 %v1337
        %1379 = vmatpush1.bf16.msra.mxu0 %v1336
        %1380 = vmatprep.subr.bf16.mxu0 %v1335
        %1381 = vmatpush1.bf16.msra.mxu0 %v1334
        %1382 = vmatprep.subr.bf16.mxu0 0
        %1383 = vmatpush2.bf16.msra.mxu0 0
        %1384 = vmatprep.subr.bf16.mxu0 0
        %1385 = vmatpush2.bf16.msra.mxu0 0
        %1386 = vmatprep.subr.bf16.mxu0 0
        %1387 = vmatpush2.bf16.msra.mxu0 0
        %1388 = vmatprep.subr.bf16.mxu0 0
        %1389 = vmatpush2.bf16.msra.mxu0 0
        %1390 = vmatprep.subr.bf16.mxu0 0
        %1391 = vmatpush2.bf16.msra.mxu0 0
        %1392 = vmatprep.subr.bf16.mxu0 0
        %1393 = vmatpush2.bf16.msra.mxu0 0
        %1394 = vmatprep.subr.bf16.mxu0 0
        %1395 = vmatpush2.bf16.msra.mxu0 0
        %1396 = vmatprep.subr.bf16.mxu0 0
        %1397 = vmatpush2.bf16.msra.mxu0 0
        %1398 = vmatprep.mubr.bf16.mxu0 0
        %1399 = vmatmul.mubr.bf16.gmra.mxu0 %v1127
        %v1400 = vpop.f32.mrf.mxu0
        %v1401 = vadd.f32 %v1278, %v1400
        %v1402 = vpop.f32.mrf.mxu0
        %v1403 = vadd.f32 %v1280, %v1402
        %v1404 = vpop.f32.mrf.mxu0
        %v1405 = vadd.f32 %v1282, %v1404
        %v1406 = vpop.f32.mrf.mxu0
        %v1407 = vadd.f32 %v1284, %v1406
        %1408 = vdwg.mxu0
        %s1409 = scalar_lea.vmem %s5, 2
        %v1410 = vld [vmem:[%s1409] sm:$0x3]
        %v1412 = vlaneseq
        %v1413 = vshrl.u32 %v1412, 7
        %v1414 = vsub.s32 0, %v1413
        %v1415 = vrot.slane %v1410, %v1414
        %v1416 = vlaneseq
        %v1417 = vshrl.u32 %v1416, 7
        %v1418 = vsub.s32 1, %v1417
        %v1419 = vrot.slane %v1410, %v1418
        %v1422 = vadd.f32 %v1401, %v1415
        %v1423 = vadd.f32 %v1403, %v1419
        %v1424 = vadd.f32 %v1405, %v1415
        %v1425 = vadd.f32 %v1407, %v1419
        %v1426 = vtanh.pop %v1422
        %v1427 = vtanh.pop %v1424
        %v1428 = vxor.u32 %v1423, 2147483648
        %v1429 = vxor.u32 %v1425, 2147483648
        %v1430 = vmul.f32 %v1428, 1.442695
        %v1431 = vpow.pop %v1430
        %v1432 = vmul.f32 %v1429, 1.442695
        %v1433 = vpow.pop %v1432
        %v1434 = vadd.f32 %v1431, 1.0
        %v1435 = vadd.f32 %v1433, 1.0
        %v1436 = vrcp.pop %v1434
        %v1437 = vmul.f32 1.0, %v1436
        %v1438 = vrcp.pop %v1435
        %v1439 = vmul.f32 1.0, %v1438
        %v1440 = vmul.f32 %v1426, %v1437
        %v1441 = vmul.f32 %v1427, %v1439
        %v1442 = vpack.c.bf16 %v1441, %v1440
        %s1443 = scalar_lea.vmem [#allocation6], 128
        %v1444 = vld [vmem:[%s1443] sm:$0xff]
        %v1445 = vld [vmem:[%s1443 + $0x8] sm:$0xff]
        %v1446 = vld [vmem:[%s1443 + $0x10] sm:$0xff]
        %v1447 = vld [vmem:[%s1443 + $0x18] sm:$0xff]
        %v1448 = vld [vmem:[%s1443 + $0x20] sm:$0xff]
        %v1449 = vld [vmem:[%s1443 + $0x28] sm:$0xff]
        %v1450 = vld [vmem:[%s1443 + $0x30] sm:$0xff]
        %v1451 = vld [vmem:[%s1443 + $0x38] sm:$0xff]
        %v1452 = vld [vmem:[%s1443 + $0x40] sm:$0xff]
        %v1453 = vld [vmem:[%s1443 + $0x48] sm:$0xff]
        %v1454 = vld [vmem:[%s1443 + $0x50] sm:$0xff]
        %v1455 = vld [vmem:[%s1443 + $0x58] sm:$0xff]
        %v1456 = vld [vmem:[%s1443 + $0x60] sm:$0xff]
        %v1457 = vld [vmem:[%s1443 + $0x68] sm:$0xff]
        %v1458 = vld [vmem:[%s1443 + $0x70] sm:$0xff]
        %v1459 = vld [vmem:[%s1443 + $0x78] sm:$0xff]
        %s1460 = scalar_lea.vmem %s7, 2
        %v1461 = vld [vmem:[%s1460] sm:$0x3]
        %v1463 = vlaneseq
        %v1464 = vshrl.u32 %v1463, 7
        %v1465 = vsub.s32 0, %v1464
        %v1466 = vrot.slane %v1461, %v1465
        %v1467 = vlaneseq
        %v1468 = vshrl.u32 %v1467, 7
        %v1469 = vsub.s32 1, %v1468
        %v1470 = vrot.slane %v1461, %v1469
        %v1489 = vunpack.c.l.b16 %v1444
        %v1490 = vunpack.c.h.b16 %v1444
        %v1491 = vunpack.c.l.b16 %v1445
        %v1492 = vunpack.c.h.b16 %v1445
        %v1493 = vunpack.c.l.b16 %v1446
        %v1494 = vunpack.c.h.b16 %v1446
        %v1495 = vunpack.c.l.b16 %v1447
        %v1496 = vunpack.c.h.b16 %v1447
        %v1497 = vunpack.c.l.b16 %v1448
        %v1498 = vunpack.c.h.b16 %v1448
        %v1499 = vunpack.c.l.b16 %v1449
        %v1500 = vunpack.c.h.b16 %v1449
        %v1501 = vunpack.c.l.b16 %v1450
        %v1502 = vunpack.c.h.b16 %v1450
        %v1503 = vunpack.c.l.b16 %v1451
        %v1504 = vunpack.c.h.b16 %v1451
        %v1505 = vunpack.c.l.b16 %v1452
        %v1506 = vunpack.c.h.b16 %v1452
        %v1507 = vunpack.c.l.b16 %v1453
        %v1508 = vunpack.c.h.b16 %v1453
        %v1509 = vunpack.c.l.b16 %v1454
        %v1510 = vunpack.c.h.b16 %v1454
        %v1511 = vunpack.c.l.b16 %v1455
        %v1512 = vunpack.c.h.b16 %v1455
        %v1513 = vunpack.c.l.b16 %v1456
        %v1514 = vunpack.c.h.b16 %v1456
        %v1515 = vunpack.c.l.b16 %v1457
        %v1516 = vunpack.c.h.b16 %v1457
        %v1517 = vunpack.c.l.b16 %v1458
        %v1518 = vunpack.c.h.b16 %v1458
        %v1519 = vunpack.c.l.b16 %v1459
        %v1520 = vunpack.c.h.b16 %v1459
        %v1521 = vpack.c.b16 %v1491, %v1489
        %v1522 = vpack.c.b16 %v1492, %v1490
        %v1523 = vpack.c.b16 %v1495, %v1493
        %v1524 = vpack.c.b16 %v1496, %v1494
        %v1525 = vpack.c.b16 %v1499, %v1497
        %v1526 = vpack.c.b16 %v1500, %v1498
        %v1527 = vpack.c.b16 %v1503, %v1501
        %v1528 = vpack.c.b16 %v1504, %v1502
        %v1529 = vpack.c.b16 %v1507, %v1505
        %v1530 = vpack.c.b16 %v1508, %v1506
        %v1531 = vpack.c.b16 %v1511, %v1509
        %v1532 = vpack.c.b16 %v1512, %v1510
        %v1533 = vpack.c.b16 %v1515, %v1513
        %v1534 = vpack.c.b16 %v1516, %v1514
        %v1535 = vpack.c.b16 %v1519, %v1517
        %v1536 = vpack.c.b16 %v1520, %v1518
        %1553 = vmatprep.subr.bf16.mxu0 %v1536
        %1554 = vmatpush1.bf16.msra.mxu0 %v1535
        %1555 = vmatprep.subr.bf16.mxu0 %v1534
        %1556 = vmatpush1.bf16.msra.mxu0 %v1533
        %1557 = vmatprep.subr.bf16.mxu0 %v1532
        %1558 = vmatpush1.bf16.msra.mxu0 %v1531
        %1559 = vmatprep.subr.bf16.mxu0 %v1530
        %1560 = vmatpush1.bf16.msra.mxu0 %v1529
        %1561 = vmatprep.subr.bf16.mxu0 %v1528
        %1562 = vmatpush1.bf16.msra.mxu0 %v1527
        %1563 = vmatprep.subr.bf16.mxu0 %v1526
        %1564 = vmatpush1.bf16.msra.mxu0 %v1525
        %1565 = vmatprep.subr.bf16.mxu0 %v1524
        %1566 = vmatpush1.bf16.msra.mxu0 %v1523
        %1567 = vmatprep.subr.bf16.mxu0 %v1522
        %1568 = vmatpush1.bf16.msra.mxu0 %v1521
        %1569 = vmatprep.subr.bf16.mxu0 0
        %1570 = vmatpush2.bf16.msra.mxu0 0
        %1571 = vmatprep.subr.bf16.mxu0 0
        %1572 = vmatpush2.bf16.msra.mxu0 0
        %1573 = vmatprep.subr.bf16.mxu0 0
        %1574 = vmatpush2.bf16.msra.mxu0 0
        %1575 = vmatprep.subr.bf16.mxu0 0
        %1576 = vmatpush2.bf16.msra.mxu0 0
        %1577 = vmatprep.subr.bf16.mxu0 0
        %1578 = vmatpush2.bf16.msra.mxu0 0
        %1579 = vmatprep.subr.bf16.mxu0 0
        %1580 = vmatpush2.bf16.msra.mxu0 0
        %1581 = vmatprep.subr.bf16.mxu0 0
        %1582 = vmatpush2.bf16.msra.mxu0 0
        %1583 = vmatprep.subr.bf16.mxu0 0
        %1584 = vmatpush2.bf16.msra.mxu0 0
        %1585 = vmatprep.mubr.bf16.mxu0 0
        %1586 = vmatmul.mubr.bf16.gmra.mxu0 %v1442
        %v1587 = vpop.f32.mrf.mxu0
        %v1588 = vadd.f32 %v1466, %v1587
        %v1589 = vpop.f32.mrf.mxu0
        %v1590 = vadd.f32 %v1470, %v1589
        %v1591 = vpop.f32.mrf.mxu0
        %v1592 = vadd.f32 %v1466, %v1591
        %v1593 = vpop.f32.mrf.mxu0
        %v1594 = vadd.f32 %v1470, %v1593
        %1595 = vdwg.mxu0
        %v1596 = vadd.f32 %v1112, %v1588
        %v1597 = vadd.f32 %v1113, %v1592
        %v1598 = vadd.f32 %v1114, %v1590
        %v1599 = vadd.f32 %v1115, %v1594
        %v1600 = vrot.slane %v1598, 4
        %v1601 = vrot.slane %v1599, 4
        %vm1602 = vcmp.lt.s32.totalorder %v605, 4
        %v1603 = vsel %vm1602, %v1600, %v1601
        %v1604 = vsel %vm1602, %v1601, %v1600
        %v1605 = vsel %vm635, 1, 0
        %v1606 = vsel %vm636, 1, 0
        %vm1607 = vcmp.eq.s32.totalorder %v1605, 1
        %vm1608 = vcmp.eq.s32.totalorder %v1606, 1
        %v1609 = vsel %vm1607, %v1604, 0.0
        %v1610 = vsel %vm1608, %v1603, 0.0
        %v1611 = vpack.c.bf16 %v1610, %v1609
        %s1612 = scalar_lea.vmem [#allocation2], 256
        %v1613 = vld [vmem:[%s1612] sm:$0xff]
        %v1614 = vld [vmem:[%s1612 + $0x8] sm:$0xff]
        %v1615 = vld [vmem:[%s1612 + $0x10] sm:$0xff]
        %v1616 = vld [vmem:[%s1612 + $0x18] sm:$0xff]
        %v1617 = vld [vmem:[%s1612 + $0x20] sm:$0xff]
        %v1618 = vld [vmem:[%s1612 + $0x28] sm:$0xff]
        %v1619 = vld [vmem:[%s1612 + $0x30] sm:$0xff]
        %v1620 = vld [vmem:[%s1612 + $0x38] sm:$0xff]
        %v1621 = vld [vmem:[%s1612 + $0x40] sm:$0xff]
        %v1622 = vld [vmem:[%s1612 + $0x48] sm:$0xff]
        %v1623 = vld [vmem:[%s1612 + $0x50] sm:$0xff]
        %v1624 = vld [vmem:[%s1612 + $0x58] sm:$0xff]
        %v1625 = vld [vmem:[%s1612 + $0x60] sm:$0xff]
        %v1626 = vld [vmem:[%s1612 + $0x68] sm:$0xff]
        %v1627 = vld [vmem:[%s1612 + $0x70] sm:$0xff]
        %v1628 = vld [vmem:[%s1612 + $0x78] sm:$0xff]
        %v1629 = vpack.c.bf16 %v1599, %v1598
        %s1630 = scalar_lea.vmem [#allocation4], 256
        %v1631 = vld [vmem:[%s1630] sm:$0xff]
        %v1632 = vld [vmem:[%s1630 + $0x8] sm:$0xff]
        %v1633 = vld [vmem:[%s1630 + $0x10] sm:$0xff]
        %v1634 = vld [vmem:[%s1630 + $0x18] sm:$0xff]
        %v1635 = vld [vmem:[%s1630 + $0x20] sm:$0xff]
        %v1636 = vld [vmem:[%s1630 + $0x28] sm:$0xff]
        %v1637 = vld [vmem:[%s1630 + $0x30] sm:$0xff]
        %v1638 = vld [vmem:[%s1630 + $0x38] sm:$0xff]
        %v1639 = vld [vmem:[%s1630 + $0x40] sm:$0xff]
        %v1640 = vld [vmem:[%s1630 + $0x48] sm:$0xff]
        %v1641 = vld [vmem:[%s1630 + $0x50] sm:$0xff]
        %v1642 = vld [vmem:[%s1630 + $0x58] sm:$0xff]
        %v1643 = vld [vmem:[%s1630 + $0x60] sm:$0xff]
        %v1644 = vld [vmem:[%s1630 + $0x68] sm:$0xff]
        %v1645 = vld [vmem:[%s1630 + $0x70] sm:$0xff]
        %v1646 = vld [vmem:[%s1630 + $0x78] sm:$0xff]
        %v1663 = vunpack.c.l.b16 %v1631
        %v1664 = vunpack.c.h.b16 %v1631
        %v1665 = vunpack.c.l.b16 %v1632
        %v1666 = vunpack.c.h.b16 %v1632
        %v1667 = vunpack.c.l.b16 %v1633
        %v1668 = vunpack.c.h.b16 %v1633
        %v1669 = vunpack.c.l.b16 %v1634
        %v1670 = vunpack.c.h.b16 %v1634
        %v1671 = vunpack.c.l.b16 %v1635
        %v1672 = vunpack.c.h.b16 %v1635
        %v1673 = vunpack.c.l.b16 %v1636
        %v1674 = vunpack.c.h.b16 %v1636
        %v1675 = vunpack.c.l.b16 %v1637
        %v1676 = vunpack.c.h.b16 %v1637
        %v1677 = vunpack.c.l.b16 %v1638
        %v1678 = vunpack.c.h.b16 %v1638
        %v1679 = vunpack.c.l.b16 %v1639
        %v1680 = vunpack.c.h.b16 %v1639
        %v1681 = vunpack.c.l.b16 %v1640
        %v1682 = vunpack.c.h.b16 %v1640
        %v1683 = vunpack.c.l.b16 %v1641
        %v1684 = vunpack.c.h.b16 %v1641
        %v1685 = vunpack.c.l.b16 %v1642
        %v1686 = vunpack.c.h.b16 %v1642
        %v1687 = vunpack.c.l.b16 %v1643
        %v1688 = vunpack.c.h.b16 %v1643
        %v1689 = vunpack.c.l.b16 %v1644
        %v1690 = vunpack.c.h.b16 %v1644
        %v1691 = vunpack.c.l.b16 %v1645
        %v1692 = vunpack.c.h.b16 %v1645
        %v1693 = vunpack.c.l.b16 %v1646
        %v1694 = vunpack.c.h.b16 %v1646
        %v1695 = vpack.c.b16 %v1665, %v1663
        %v1696 = vpack.c.b16 %v1666, %v1664
        %v1697 = vpack.c.b16 %v1669, %v1667
        %v1698 = vpack.c.b16 %v1670, %v1668
        %v1699 = vpack.c.b16 %v1673, %v1671
        %v1700 = vpack.c.b16 %v1674, %v1672
        %v1701 = vpack.c.b16 %v1677, %v1675
        %v1702 = vpack.c.b16 %v1678, %v1676
        %v1703 = vpack.c.b16 %v1681, %v1679
        %v1704 = vpack.c.b16 %v1682, %v1680
        %v1705 = vpack.c.b16 %v1685, %v1683
        %v1706 = vpack.c.b16 %v1686, %v1684
        %v1707 = vpack.c.b16 %v1689, %v1687
        %v1708 = vpack.c.b16 %v1690, %v1688
        %v1709 = vpack.c.b16 %v1693, %v1691
        %v1710 = vpack.c.b16 %v1694, %v1692
        %1727 = vmatprep.subr.bf16.mxu0 %v1710
        %1728 = vmatpush1.bf16.msra.mxu0 %v1709
        %1729 = vmatprep.subr.bf16.mxu0 %v1708
        %1730 = vmatpush1.bf16.msra.mxu0 %v1707
        %1731 = vmatprep.subr.bf16.mxu0 %v1706
        %1732 = vmatpush1.bf16.msra.mxu0 %v1705
        %1733 = vmatprep.subr.bf16.mxu0 %v1704
        %1734 = vmatpush1.bf16.msra.mxu0 %v1703
        %1735 = vmatprep.subr.bf16.mxu0 %v1702
        %1736 = vmatpush1.bf16.msra.mxu0 %v1701
        %1737 = vmatprep.subr.bf16.mxu0 %v1700
        %1738 = vmatpush1.bf16.msra.mxu0 %v1699
        %1739 = vmatprep.subr.bf16.mxu0 %v1698
        %1740 = vmatpush1.bf16.msra.mxu0 %v1697
        %1741 = vmatprep.subr.bf16.mxu0 %v1696
        %1742 = vmatpush1.bf16.msra.mxu0 %v1695
        %1743 = vmatprep.subr.bf16.mxu0 0
        %1744 = vmatpush2.bf16.msra.mxu0 0
        %1745 = vmatprep.subr.bf16.mxu0 0
        %1746 = vmatpush2.bf16.msra.mxu0 0
        %1747 = vmatprep.subr.bf16.mxu0 0
        %1748 = vmatpush2.bf16.msra.mxu0 0
        %1749 = vmatprep.subr.bf16.mxu0 0
        %1750 = vmatpush2.bf16.msra.mxu0 0
        %1751 = vmatprep.subr.bf16.mxu0 0
        %1752 = vmatpush2.bf16.msra.mxu0 0
        %1753 = vmatprep.subr.bf16.mxu0 0
        %1754 = vmatpush2.bf16.msra.mxu0 0
        %1755 = vmatprep.subr.bf16.mxu0 0
        %1756 = vmatpush2.bf16.msra.mxu0 0
        %1757 = vmatprep.subr.bf16.mxu0 0
        %1758 = vmatpush2.bf16.msra.mxu0 0
        %1759 = vmatprep.mubr.bf16.mxu0 0
        %1760 = vmatmul.mubr.bf16.gmra.mxu0 %v1629
        %v1761 = vpop.f32.mrf.mxu0
        %v1762 = vadd.f32 0.0, %v1761
        %v1763 = vpop.f32.mrf.mxu0
        %v1764 = vadd.f32 0.0, %v1763
        %v1765 = vpop.f32.mrf.mxu0
        %v1766 = vadd.f32 0.0, %v1765
        %v1767 = vpop.f32.mrf.mxu0
        %v1768 = vadd.f32 0.0, %v1767
        %1769 = vdwg.mxu0
        %v1786 = vunpack.c.l.b16 %v1613
        %v1787 = vunpack.c.h.b16 %v1613
        %v1788 = vunpack.c.l.b16 %v1614
        %v1789 = vunpack.c.h.b16 %v1614
        %v1790 = vunpack.c.l.b16 %v1615
        %v1791 = vunpack.c.h.b16 %v1615
        %v1792 = vunpack.c.l.b16 %v1616
        %v1793 = vunpack.c.h.b16 %v1616
        %v1794 = vunpack.c.l.b16 %v1617
        %v1795 = vunpack.c.h.b16 %v1617
        %v1796 = vunpack.c.l.b16 %v1618
        %v1797 = vunpack.c.h.b16 %v1618
        %v1798 = vunpack.c.l.b16 %v1619
        %v1799 = vunpack.c.h.b16 %v1619
        %v1800 = vunpack.c.l.b16 %v1620
        %v1801 = vunpack.c.h.b16 %v1620
        %v1802 = vunpack.c.l.b16 %v1621
        %v1803 = vunpack.c.h.b16 %v1621
        %v1804 = vunpack.c.l.b16 %v1622
        %v1805 = vunpack.c.h.b16 %v1622
        %v1806 = vunpack.c.l.b16 %v1623
        %v1807 = vunpack.c.h.b16 %v1623
        %v1808 = vunpack.c.l.b16 %v1624
        %v1809 = vunpack.c.h.b16 %v1624
        %v1810 = vunpack.c.l.b16 %v1625
        %v1811 = vunpack.c.h.b16 %v1625
        %v1812 = vunpack.c.l.b16 %v1626
        %v1813 = vunpack.c.h.b16 %v1626
        %v1814 = vunpack.c.l.b16 %v1627
        %v1815 = vunpack.c.h.b16 %v1627
        %v1816 = vunpack.c.l.b16 %v1628
        %v1817 = vunpack.c.h.b16 %v1628
        %v1818 = vpack.c.b16 %v1788, %v1786
        %v1819 = vpack.c.b16 %v1789, %v1787
        %v1820 = vpack.c.b16 %v1792, %v1790
        %v1821 = vpack.c.b16 %v1793, %v1791
        %v1822 = vpack.c.b16 %v1796, %v1794
        %v1823 = vpack.c.b16 %v1797, %v1795
        %v1824 = vpack.c.b16 %v1800, %v1798
        %v1825 = vpack.c.b16 %v1801, %v1799
        %v1826 = vpack.c.b16 %v1804, %v1802
        %v1827 = vpack.c.b16 %v1805, %v1803
        %v1828 = vpack.c.b16 %v1808, %v1806
        %v1829 = vpack.c.b16 %v1809, %v1807
        %v1830 = vpack.c.b16 %v1812, %v1810
        %v1831 = vpack.c.b16 %v1813, %v1811
        %v1832 = vpack.c.b16 %v1816, %v1814
        %v1833 = vpack.c.b16 %v1817, %v1815
        %1850 = vmatprep.subr.bf16.mxu0 %v1833
        %1851 = vmatpush1.bf16.msra.mxu0 %v1832
        %1852 = vmatprep.subr.bf16.mxu0 %v1831
        %1853 = vmatpush1.bf16.msra.mxu0 %v1830
        %1854 = vmatprep.subr.bf16.mxu0 %v1829
        %1855 = vmatpush1.bf16.msra.mxu0 %v1828
        %1856 = vmatprep.subr.bf16.mxu0 %v1827
        %1857 = vmatpush1.bf16.msra.mxu0 %v1826
        %1858 = vmatprep.subr.bf16.mxu0 %v1825
        %1859 = vmatpush1.bf16.msra.mxu0 %v1824
        %1860 = vmatprep.subr.bf16.mxu0 %v1823
        %1861 = vmatpush1.bf16.msra.mxu0 %v1822
        %1862 = vmatprep.subr.bf16.mxu0 %v1821
        %1863 = vmatpush1.bf16.msra.mxu0 %v1820
        %1864 = vmatprep.subr.bf16.mxu0 %v1819
        %1865 = vmatpush1.bf16.msra.mxu0 %v1818
        %1866 = vmatprep.subr.bf16.mxu0 0
        %1867 = vmatpush2.bf16.msra.mxu0 0
        %1868 = vmatprep.subr.bf16.mxu0 0
        %1869 = vmatpush2.bf16.msra.mxu0 0
        %1870 = vmatprep.subr.bf16.mxu0 0
        %1871 = vmatpush2.bf16.msra.mxu0 0
        %1872 = vmatprep.subr.bf16.mxu0 0
        %1873 = vmatpush2.bf16.msra.mxu0 0
        %1874 = vmatprep.subr.bf16.mxu0 0
        %1875 = vmatpush2.bf16.msra.mxu0 0
        %1876 = vmatprep.subr.bf16.mxu0 0
        %1877 = vmatpush2.bf16.msra.mxu0 0
        %1878 = vmatprep.subr.bf16.mxu0 0
        %1879 = vmatpush2.bf16.msra.mxu0 0
        %1880 = vmatprep.subr.bf16.mxu0 0
        %1881 = vmatpush2.bf16.msra.mxu0 0
        %1882 = vmatprep.mubr.bf16.mxu0 0
        %1883 = vmatmul.mubr.bf16.gmra.mxu0 %v1611
        %v1884 = vpop.f32.mrf.mxu0
        %v1885 = vadd.f32 %v1762, %v1884
        %v1886 = vpop.f32.mrf.mxu0
        %v1887 = vadd.f32 %v1764, %v1886
        %v1888 = vpop.f32.mrf.mxu0
        %v1889 = vadd.f32 %v1766, %v1888
        %v1890 = vpop.f32.mrf.mxu0
        %v1891 = vadd.f32 %v1768, %v1890
        %1892 = vdwg.mxu0
        %s1893 = scalar_lea.vmem %s5, 4
        %v1894 = vld [vmem:[%s1893] sm:$0x3]
        %v1896 = vlaneseq
        %v1897 = vshrl.u32 %v1896, 7
        %v1898 = vsub.s32 0, %v1897
        %v1899 = vrot.slane %v1894, %v1898
        %v1900 = vlaneseq
        %v1901 = vshrl.u32 %v1900, 7
        %v1902 = vsub.s32 1, %v1901
        %v1903 = vrot.slane %v1894, %v1902
        %v1906 = vadd.f32 %v1885, %v1899
        %v1907 = vadd.f32 %v1887, %v1903
        %v1908 = vadd.f32 %v1889, %v1899
        %v1909 = vadd.f32 %v1891, %v1903
        %v1910 = vtanh.pop %v1906
        %v1911 = vtanh.pop %v1908
        %v1912 = vxor.u32 %v1907, 2147483648
        %v1913 = vxor.u32 %v1909, 2147483648
        %v1914 = vmul.f32 %v1912, 1.442695
        %v1915 = vpow.pop %v1914
        %v1916 = vmul.f32 %v1913, 1.442695
        %v1917 = vpow.pop %v1916
        %v1918 = vadd.f32 %v1915, 1.0
        %v1919 = vadd.f32 %v1917, 1.0
        %v1920 = vrcp.pop %v1918
        %v1921 = vmul.f32 1.0, %v1920
        %v1922 = vrcp.pop %v1919
        %v1923 = vmul.f32 1.0, %v1922
        %v1924 = vmul.f32 %v1910, %v1921
        %v1925 = vmul.f32 %v1911, %v1923
        %v1926 = vpack.c.bf16 %v1925, %v1924
        %s1927 = scalar_lea.vmem [#allocation6], 256
        %v1928 = vld [vmem:[%s1927] sm:$0xff]
        %v1929 = vld [vmem:[%s1927 + $0x8] sm:$0xff]
        %v1930 = vld [vmem:[%s1927 + $0x10] sm:$0xff]
        %v1931 = vld [vmem:[%s1927 + $0x18] sm:$0xff]
        %v1932 = vld [vmem:[%s1927 + $0x20] sm:$0xff]
        %v1933 = vld [vmem:[%s1927 + $0x28] sm:$0xff]
        %v1934 = vld [vmem:[%s1927 + $0x30] sm:$0xff]
        %v1935 = vld [vmem:[%s1927 + $0x38] sm:$0xff]
        %v1936 = vld [vmem:[%s1927 + $0x40] sm:$0xff]
        %v1937 = vld [vmem:[%s1927 + $0x48] sm:$0xff]
        %v1938 = vld [vmem:[%s1927 + $0x50] sm:$0xff]
        %v1939 = vld [vmem:[%s1927 + $0x58] sm:$0xff]
        %v1940 = vld [vmem:[%s1927 + $0x60] sm:$0xff]
        %v1941 = vld [vmem:[%s1927 + $0x68] sm:$0xff]
        %v1942 = vld [vmem:[%s1927 + $0x70] sm:$0xff]
        %v1943 = vld [vmem:[%s1927 + $0x78] sm:$0xff]
        %s1944 = scalar_lea.vmem %s7, 4
        %v1945 = vld [vmem:[%s1944] sm:$0x3]
        %v1947 = vlaneseq
        %v1948 = vshrl.u32 %v1947, 7
        %v1949 = vsub.s32 0, %v1948
        %v1950 = vrot.slane %v1945, %v1949
        %v1951 = vlaneseq
        %v1952 = vshrl.u32 %v1951, 7
        %v1953 = vsub.s32 1, %v1952
        %v1954 = vrot.slane %v1945, %v1953
        %v1973 = vunpack.c.l.b16 %v1928
        %v1974 = vunpack.c.h.b16 %v1928
        %v1975 = vunpack.c.l.b16 %v1929
        %v1976 = vunpack.c.h.b16 %v1929
        %v1977 = vunpack.c.l.b16 %v1930
        %v1978 = vunpack.c.h.b16 %v1930
        %v1979 = vunpack.c.l.b16 %v1931
        %v1980 = vunpack.c.h.b16 %v1931
        %v1981 = vunpack.c.l.b16 %v1932
        %v1982 = vunpack.c.h.b16 %v1932
        %v1983 = vunpack.c.l.b16 %v1933
        %v1984 = vunpack.c.h.b16 %v1933
        %v1985 = vunpack.c.l.b16 %v1934
        %v1986 = vunpack.c.h.b16 %v1934
        %v1987 = vunpack.c.l.b16 %v1935
        %v1988 = vunpack.c.h.b16 %v1935
        %v1989 = vunpack.c.l.b16 %v1936
        %v1990 = vunpack.c.h.b16 %v1936
        %v1991 = vunpack.c.l.b16 %v1937
        %v1992 = vunpack.c.h.b16 %v1937
        %v1993 = vunpack.c.l.b16 %v1938
        %v1994 = vunpack.c.h.b16 %v1938
        %v1995 = vunpack.c.l.b16 %v1939
        %v1996 = vunpack.c.h.b16 %v1939
        %v1997 = vunpack.c.l.b16 %v1940
        %v1998 = vunpack.c.h.b16 %v1940
        %v1999 = vunpack.c.l.b16 %v1941
        %v2000 = vunpack.c.h.b16 %v1941
        %v2001 = vunpack.c.l.b16 %v1942
        %v2002 = vunpack.c.h.b16 %v1942
        %v2003 = vunpack.c.l.b16 %v1943
        %v2004 = vunpack.c.h.b16 %v1943
        %v2005 = vpack.c.b16 %v1975, %v1973
        %v2006 = vpack.c.b16 %v1976, %v1974
        %v2007 = vpack.c.b16 %v1979, %v1977
        %v2008 = vpack.c.b16 %v1980, %v1978
        %v2009 = vpack.c.b16 %v1983, %v1981
        %v2010 = vpack.c.b16 %v1984, %v1982
        %v2011 = vpack.c.b16 %v1987, %v1985
        %v2012 = vpack.c.b16 %v1988, %v1986
        %v2013 = vpack.c.b16 %v1991, %v1989
        %v2014 = vpack.c.b16 %v1992, %v1990
        %v2015 = vpack.c.b16 %v1995, %v1993
        %v2016 = vpack.c.b16 %v1996, %v1994
        %v2017 = vpack.c.b16 %v1999, %v1997
        %v2018 = vpack.c.b16 %v2000, %v1998
        %v2019 = vpack.c.b16 %v2003, %v2001
        %v2020 = vpack.c.b16 %v2004, %v2002
        %2037 = vmatprep.subr.bf16.mxu0 %v2020
        %2038 = vmatpush1.bf16.msra.mxu0 %v2019
        %2039 = vmatprep.subr.bf16.mxu0 %v2018
        %2040 = vmatpush1.bf16.msra.mxu0 %v2017
        %2041 = vmatprep.subr.bf16.mxu0 %v2016
        %2042 = vmatpush1.bf16.msra.mxu0 %v2015
        %2043 = vmatprep.subr.bf16.mxu0 %v2014
        %2044 = vmatpush1.bf16.msra.mxu0 %v2013
        %2045 = vmatprep.subr.bf16.mxu0 %v2012
        %2046 = vmatpush1.bf16.msra.mxu0 %v2011
        %2047 = vmatprep.subr.bf16.mxu0 %v2010
        %2048 = vmatpush1.bf16.msra.mxu0 %v2009
        %2049 = vmatprep.subr.bf16.mxu0 %v2008
        %2050 = vmatpush1.bf16.msra.mxu0 %v2007
        %2051 = vmatprep.subr.bf16.mxu0 %v2006
        %2052 = vmatpush1.bf16.msra.mxu0 %v2005
        %2053 = vmatprep.subr.bf16.mxu0 0
        %2054 = vmatpush2.bf16.msra.mxu0 0
        %2055 = vmatprep.subr.bf16.mxu0 0
        %2056 = vmatpush2.bf16.msra.mxu0 0
        %2057 = vmatprep.subr.bf16.mxu0 0
        %2058 = vmatpush2.bf16.msra.mxu0 0
        %2059 = vmatprep.subr.bf16.mxu0 0
        %2060 = vmatpush2.bf16.msra.mxu0 0
        %2061 = vmatprep.subr.bf16.mxu0 0
        %2062 = vmatpush2.bf16.msra.mxu0 0
        %2063 = vmatprep.subr.bf16.mxu0 0
        %2064 = vmatpush2.bf16.msra.mxu0 0
        %2065 = vmatprep.subr.bf16.mxu0 0
        %2066 = vmatpush2.bf16.msra.mxu0 0
        %2067 = vmatprep.subr.bf16.mxu0 0
        %2068 = vmatpush2.bf16.msra.mxu0 0
        %2069 = vmatprep.mubr.bf16.mxu0 0
        %2070 = vmatmul.mubr.bf16.gmra.mxu0 %v1926
        %v2071 = vpop.f32.mrf.mxu0
        %v2072 = vadd.f32 %v1950, %v2071
        %v2073 = vpop.f32.mrf.mxu0
        %v2074 = vadd.f32 %v1954, %v2073
        %v2075 = vpop.f32.mrf.mxu0
        %v2076 = vadd.f32 %v1950, %v2075
        %v2077 = vpop.f32.mrf.mxu0
        %v2078 = vadd.f32 %v1954, %v2077
        %2079 = vdwg.mxu0
        %v2080 = vadd.f32 %v1596, %v2072
        %v2081 = vadd.f32 %v1597, %v2076
        %v2082 = vadd.f32 %v1598, %v2074
        %v2083 = vadd.f32 %v1599, %v2078
        %v2084 = vrot.slane %v2082, 7
        %v2085 = vrot.slane %v2083, 7
        %v2086 = vsel %vm639, %v2084, %v2085
        %v2087 = vsel %vm639, %v2085, %v2084
        %v2088 = vsel %vm644, %v2087, 0.0
        %v2089 = vsel %vm645, %v2086, 0.0
        %v2090 = vpack.c.bf16 %v2089, %v2088
        %s2091 = scalar_lea.vmem [#allocation2], 384
        %v2092 = vld [vmem:[%s2091] sm:$0xff]
        %v2093 = vld [vmem:[%s2091 + $0x8] sm:$0xff]
        %v2094 = vld [vmem:[%s2091 + $0x10] sm:$0xff]
        %v2095 = vld [vmem:[%s2091 + $0x18] sm:$0xff]
        %v2096 = vld [vmem:[%s2091 + $0x20] sm:$0xff]
        %v2097 = vld [vmem:[%s2091 + $0x28] sm:$0xff]
        %v2098 = vld [vmem:[%s2091 + $0x30] sm:$0xff]
        %v2099 = vld [vmem:[%s2091 + $0x38] sm:$0xff]
        %v2100 = vld [vmem:[%s2091 + $0x40] sm:$0xff]
        %v2101 = vld [vmem:[%s2091 + $0x48] sm:$0xff]
        %v2102 = vld [vmem:[%s2091 + $0x50] sm:$0xff]
        %v2103 = vld [vmem:[%s2091 + $0x58] sm:$0xff]
        %v2104 = vld [vmem:[%s2091 + $0x60] sm:$0xff]
        %v2105 = vld [vmem:[%s2091 + $0x68] sm:$0xff]
        %v2106 = vld [vmem:[%s2091 + $0x70] sm:$0xff]
        %v2107 = vld [vmem:[%s2091 + $0x78] sm:$0xff]
        %v2108 = vpack.c.bf16 %v2083, %v2082
        %s2109 = scalar_lea.vmem [#allocation4], 384
        %v2110 = vld [vmem:[%s2109] sm:$0xff]
        %v2111 = vld [vmem:[%s2109 + $0x8] sm:$0xff]
        %v2112 = vld [vmem:[%s2109 + $0x10] sm:$0xff]
        %v2113 = vld [vmem:[%s2109 + $0x18] sm:$0xff]
        %v2114 = vld [vmem:[%s2109 + $0x20] sm:$0xff]
        %v2115 = vld [vmem:[%s2109 + $0x28] sm:$0xff]
        %v2116 = vld [vmem:[%s2109 + $0x30] sm:$0xff]
        %v2117 = vld [vmem:[%s2109 + $0x38] sm:$0xff]
        %v2118 = vld [vmem:[%s2109 + $0x40] sm:$0xff]
        %v2119 = vld [vmem:[%s2109 + $0x48] sm:$0xff]
        %v2120 = vld [vmem:[%s2109 + $0x50] sm:$0xff]
        %v2121 = vld [vmem:[%s2109 + $0x58] sm:$0xff]
        %v2122 = vld [vmem:[%s2109 + $0x60] sm:$0xff]
        %v2123 = vld [vmem:[%s2109 + $0x68] sm:$0xff]
        %v2124 = vld [vmem:[%s2109 + $0x70] sm:$0xff]
        %v2125 = vld [vmem:[%s2109 + $0x78] sm:$0xff]
        %v2142 = vunpack.c.l.b16 %v2110
        %v2143 = vunpack.c.h.b16 %v2110
        %v2144 = vunpack.c.l.b16 %v2111
        %v2145 = vunpack.c.h.b16 %v2111
        %v2146 = vunpack.c.l.b16 %v2112
        %v2147 = vunpack.c.h.b16 %v2112
        %v2148 = vunpack.c.l.b16 %v2113
        %v2149 = vunpack.c.h.b16 %v2113
        %v2150 = vunpack.c.l.b16 %v2114
        %v2151 = vunpack.c.h.b16 %v2114
        %v2152 = vunpack.c.l.b16 %v2115
        %v2153 = vunpack.c.h.b16 %v2115
        %v2154 = vunpack.c.l.b16 %v2116
        %v2155 = vunpack.c.h.b16 %v2116
        %v2156 = vunpack.c.l.b16 %v2117
        %v2157 = vunpack.c.h.b16 %v2117
        %v2158 = vunpack.c.l.b16 %v2118
        %v2159 = vunpack.c.h.b16 %v2118
        %v2160 = vunpack.c.l.b16 %v2119
        %v2161 = vunpack.c.h.b16 %v2119
        %v2162 = vunpack.c.l.b16 %v2120
        %v2163 = vunpack.c.h.b16 %v2120
        %v2164 = vunpack.c.l.b16 %v2121
        %v2165 = vunpack.c.h.b16 %v2121
        %v2166 = vunpack.c.l.b16 %v2122
        %v2167 = vunpack.c.h.b16 %v2122
        %v2168 = vunpack.c.l.b16 %v2123
        %v2169 = vunpack.c.h.b16 %v2123
        %v2170 = vunpack.c.l.b16 %v2124
        %v2171 = vunpack.c.h.b16 %v2124
        %v2172 = vunpack.c.l.b16 %v2125
        %v2173 = vunpack.c.h.b16 %v2125
        %v2174 = vpack.c.b16 %v2144, %v2142
        %v2175 = vpack.c.b16 %v2145, %v2143
        %v2176 = vpack.c.b16 %v2148, %v2146
        %v2177 = vpack.c.b16 %v2149, %v2147
        %v2178 = vpack.c.b16 %v2152, %v2150
        %v2179 = vpack.c.b16 %v2153, %v2151
        %v2180 = vpack.c.b16 %v2156, %v2154
        %v2181 = vpack.c.b16 %v2157, %v2155
        %v2182 = vpack.c.b16 %v2160, %v2158
        %v2183 = vpack.c.b16 %v2161, %v2159
        %v2184 = vpack.c.b16 %v2164, %v2162
        %v2185 = vpack.c.b16 %v2165, %v2163
        %v2186 = vpack.c.b16 %v2168, %v2166
        %v2187 = vpack.c.b16 %v2169, %v2167
        %v2188 = vpack.c.b16 %v2172, %v2170
        %v2189 = vpack.c.b16 %v2173, %v2171
        %2206 = vmatprep.subr.bf16.mxu0 %v2189
        %2207 = vmatpush1.bf16.msra.mxu0 %v2188
        %2208 = vmatprep.subr.bf16.mxu0 %v2187
        %2209 = vmatpush1.bf16.msra.mxu0 %v2186
        %2210 = vmatprep.subr.bf16.mxu0 %v2185
        %2211 = vmatpush1.bf16.msra.mxu0 %v2184
        %2212 = vmatprep.subr.bf16.mxu0 %v2183
        %2213 = vmatpush1.bf16.msra.mxu0 %v2182
        %2214 = vmatprep.subr.bf16.mxu0 %v2181
        %2215 = vmatpush1.bf16.msra.mxu0 %v2180
        %2216 = vmatprep.subr.bf16.mxu0 %v2179
        %2217 = vmatpush1.bf16.msra.mxu0 %v2178
        %2218 = vmatprep.subr.bf16.mxu0 %v2177
        %2219 = vmatpush1.bf16.msra.mxu0 %v2176
        %2220 = vmatprep.subr.bf16.mxu0 %v2175
        %2221 = vmatpush1.bf16.msra.mxu0 %v2174
        %2222 = vmatprep.subr.bf16.mxu0 0
        %2223 = vmatpush2.bf16.msra.mxu0 0
        %2224 = vmatprep.subr.bf16.mxu0 0
        %2225 = vmatpush2.bf16.msra.mxu0 0
        %2226 = vmatprep.subr.bf16.mxu0 0
        %2227 = vmatpush2.bf16.msra.mxu0 0
        %2228 = vmatprep.subr.bf16.mxu0 0
        %2229 = vmatpush2.bf16.msra.mxu0 0
        %2230 = vmatprep.subr.bf16.mxu0 0
        %2231 = vmatpush2.bf16.msra.mxu0 0
        %2232 = vmatprep.subr.bf16.mxu0 0
        %2233 = vmatpush2.bf16.msra.mxu0 0
        %2234 = vmatprep.subr.bf16.mxu0 0
        %2235 = vmatpush2.bf16.msra.mxu0 0
        %2236 = vmatprep.subr.bf16.mxu0 0
        %2237 = vmatpush2.bf16.msra.mxu0 0
        %2238 = vmatprep.mubr.bf16.mxu0 0
        %2239 = vmatmul.mubr.bf16.gmra.mxu0 %v2108
        %v2240 = vpop.f32.mrf.mxu0
        %v2241 = vadd.f32 0.0, %v2240
        %v2242 = vpop.f32.mrf.mxu0
        %v2243 = vadd.f32 0.0, %v2242
        %v2244 = vpop.f32.mrf.mxu0
        %v2245 = vadd.f32 0.0, %v2244
        %v2246 = vpop.f32.mrf.mxu0
        %v2247 = vadd.f32 0.0, %v2246
        %2248 = vdwg.mxu0
        %v2265 = vunpack.c.l.b16 %v2092
        %v2266 = vunpack.c.h.b16 %v2092
        %v2267 = vunpack.c.l.b16 %v2093
        %v2268 = vunpack.c.h.b16 %v2093
        %v2269 = vunpack.c.l.b16 %v2094
        %v2270 = vunpack.c.h.b16 %v2094
        %v2271 = vunpack.c.l.b16 %v2095
        %v2272 = vunpack.c.h.b16 %v2095
        %v2273 = vunpack.c.l.b16 %v2096
        %v2274 = vunpack.c.h.b16 %v2096
        %v2275 = vunpack.c.l.b16 %v2097
        %v2276 = vunpack.c.h.b16 %v2097
        %v2277 = vunpack.c.l.b16 %v2098
        %v2278 = vunpack.c.h.b16 %v2098
        %v2279 = vunpack.c.l.b16 %v2099
        %v2280 = vunpack.c.h.b16 %v2099
        %v2281 = vunpack.c.l.b16 %v2100
        %v2282 = vunpack.c.h.b16 %v2100
        %v2283 = vunpack.c.l.b16 %v2101
        %v2284 = vunpack.c.h.b16 %v2101
        %v2285 = vunpack.c.l.b16 %v2102
        %v2286 = vunpack.c.h.b16 %v2102
        %v2287 = vunpack.c.l.b16 %v2103
        %v2288 = vunpack.c.h.b16 %v2103
        %v2289 = vunpack.c.l.b16 %v2104
        %v2290 = vunpack.c.h.b16 %v2104
        %v2291 = vunpack.c.l.b16 %v2105
        %v2292 = vunpack.c.h.b16 %v2105
        %v2293 = vunpack.c.l.b16 %v2106
        %v2294 = vunpack.c.h.b16 %v2106
        %v2295 = vunpack.c.l.b16 %v2107
        %v2296 = vunpack.c.h.b16 %v2107
        %v2297 = vpack.c.b16 %v2267, %v2265
        %v2298 = vpack.c.b16 %v2268, %v2266
        %v2299 = vpack.c.b16 %v2271, %v2269
        %v2300 = vpack.c.b16 %v2272, %v2270
        %v2301 = vpack.c.b16 %v2275, %v2273
        %v2302 = vpack.c.b16 %v2276, %v2274
        %v2303 = vpack.c.b16 %v2279, %v2277
        %v2304 = vpack.c.b16 %v2280, %v2278
        %v2305 = vpack.c.b16 %v2283, %v2281
        %v2306 = vpack.c.b16 %v2284, %v2282
        %v2307 = vpack.c.b16 %v2287, %v2285
        %v2308 = vpack.c.b16 %v2288, %v2286
        %v2309 = vpack.c.b16 %v2291, %v2289
        %v2310 = vpack.c.b16 %v2292, %v2290
        %v2311 = vpack.c.b16 %v2295, %v2293
        %v2312 = vpack.c.b16 %v2296, %v2294
        %2329 = vmatprep.subr.bf16.mxu0 %v2312
        %2330 = vmatpush1.bf16.msra.mxu0 %v2311
        %2331 = vmatprep.subr.bf16.mxu0 %v2310
        %2332 = vmatpush1.bf16.msra.mxu0 %v2309
        %2333 = vmatprep.subr.bf16.mxu0 %v2308
        %2334 = vmatpush1.bf16.msra.mxu0 %v2307
        %2335 = vmatprep.subr.bf16.mxu0 %v2306
        %2336 = vmatpush1.bf16.msra.mxu0 %v2305
        %2337 = vmatprep.subr.bf16.mxu0 %v2304
        %2338 = vmatpush1.bf16.msra.mxu0 %v2303
        %2339 = vmatprep.subr.bf16.mxu0 %v2302
        %2340 = vmatpush1.bf16.msra.mxu0 %v2301
        %2341 = vmatprep.subr.bf16.mxu0 %v2300
        %2342 = vmatpush1.bf16.msra.mxu0 %v2299
        %2343 = vmatprep.subr.bf16.mxu0 %v2298
        %2344 = vmatpush1.bf16.msra.mxu0 %v2297
        %2345 = vmatprep.subr.bf16.mxu0 0
        %2346 = vmatpush2.bf16.msra.mxu0 0
        %2347 = vmatprep.subr.bf16.mxu0 0
        %2348 = vmatpush2.bf16.msra.mxu0 0
        %2349 = vmatprep.subr.bf16.mxu0 0
        %2350 = vmatpush2.bf16.msra.mxu0 0
        %2351 = vmatprep.subr.bf16.mxu0 0
        %2352 = vmatpush2.bf16.msra.mxu0 0
        %2353 = vmatprep.subr.bf16.mxu0 0
        %2354 = vmatpush2.bf16.msra.mxu0 0
        %2355 = vmatprep.subr.bf16.mxu0 0
        %2356 = vmatpush2.bf16.msra.mxu0 0
        %2357 = vmatprep.subr.bf16.mxu0 0
        %2358 = vmatpush2.bf16.msra.mxu0 0
        %2359 = vmatprep.subr.bf16.mxu0 0
        %2360 = vmatpush2.bf16.msra.mxu0 0
        %2361 = vmatprep.mubr.bf16.mxu0 0
        %2362 = vmatmul.mubr.bf16.gmra.mxu0 %v2090
        %v2363 = vpop.f32.mrf.mxu0
        %v2364 = vadd.f32 %v2241, %v2363
        %v2365 = vpop.f32.mrf.mxu0
        %v2366 = vadd.f32 %v2243, %v2365
        %v2367 = vpop.f32.mrf.mxu0
        %v2368 = vadd.f32 %v2245, %v2367
        %v2369 = vpop.f32.mrf.mxu0
        %v2370 = vadd.f32 %v2247, %v2369
        %2371 = vdwg.mxu0
        %s2372 = scalar_lea.vmem %s5, 6
        %v2373 = vld [vmem:[%s2372] sm:$0x3]
        %v2375 = vlaneseq
        %v2376 = vshrl.u32 %v2375, 7
        %v2377 = vsub.s32 0, %v2376
        %v2378 = vrot.slane %v2373, %v2377
        %v2379 = vlaneseq
        %v2380 = vshrl.u32 %v2379, 7
        %v2381 = vsub.s32 1, %v2380
        %v2382 = vrot.slane %v2373, %v2381
        %v2385 = vadd.f32 %v2364, %v2378
        %v2386 = vadd.f32 %v2366, %v2382
        %v2387 = vadd.f32 %v2368, %v2378
        %v2388 = vadd.f32 %v2370, %v2382
        %v2389 = vtanh.pop %v2385
        %v2390 = vtanh.pop %v2387
        %v2391 = vxor.u32 %v2386, 2147483648
        %v2392 = vxor.u32 %v2388, 2147483648
        %v2393 = vmul.f32 %v2391, 1.442695
        %v2394 = vpow.pop %v2393
        %v2395 = vmul.f32 %v2392, 1.442695
        %v2396 = vpow.pop %v2395
        %v2397 = vadd.f32 %v2394, 1.0
        %v2398 = vadd.f32 %v2396, 1.0
        %v2399 = vrcp.pop %v2397
        %v2400 = vmul.f32 1.0, %v2399
        %v2401 = vrcp.pop %v2398
        %v2402 = vmul.f32 1.0, %v2401
        %v2403 = vmul.f32 %v2389, %v2400
        %v2404 = vmul.f32 %v2390, %v2402
        %v2405 = vpack.c.bf16 %v2404, %v2403
        %s2406 = scalar_lea.vmem [#allocation6], 384
        %v2407 = vld [vmem:[%s2406] sm:$0xff]
        %v2408 = vld [vmem:[%s2406 + $0x8] sm:$0xff]
        %v2409 = vld [vmem:[%s2406 + $0x10] sm:$0xff]
        %v2410 = vld [vmem:[%s2406 + $0x18] sm:$0xff]
        %v2411 = vld [vmem:[%s2406 + $0x20] sm:$0xff]
        %v2412 = vld [vmem:[%s2406 + $0x28] sm:$0xff]
        %v2413 = vld [vmem:[%s2406 + $0x30] sm:$0xff]
        %v2414 = vld [vmem:[%s2406 + $0x38] sm:$0xff]
        %v2415 = vld [vmem:[%s2406 + $0x40] sm:$0xff]
        %v2416 = vld [vmem:[%s2406 + $0x48] sm:$0xff]
        %v2417 = vld [vmem:[%s2406 + $0x50] sm:$0xff]
        %v2418 = vld [vmem:[%s2406 + $0x58] sm:$0xff]
        %v2419 = vld [vmem:[%s2406 + $0x60] sm:$0xff]
        %v2420 = vld [vmem:[%s2406 + $0x68] sm:$0xff]
        %v2421 = vld [vmem:[%s2406 + $0x70] sm:$0xff]
        %v2422 = vld [vmem:[%s2406 + $0x78] sm:$0xff]
        %s2423 = scalar_lea.vmem %s7, 6
        %v2424 = vld [vmem:[%s2423] sm:$0x3]
        %v2426 = vlaneseq
        %v2427 = vshrl.u32 %v2426, 7
        %v2428 = vsub.s32 0, %v2427
        %v2429 = vrot.slane %v2424, %v2428
        %v2430 = vlaneseq
        %v2431 = vshrl.u32 %v2430, 7
        %v2432 = vsub.s32 1, %v2431
        %v2433 = vrot.slane %v2424, %v2432
        %v2452 = vunpack.c.l.b16 %v2407
        %v2453 = vunpack.c.h.b16 %v2407
        %v2454 = vunpack.c.l.b16 %v2408
        %v2455 = vunpack.c.h.b16 %v2408
        %v2456 = vunpack.c.l.b16 %v2409
        %v2457 = vunpack.c.h.b16 %v2409
        %v2458 = vunpack.c.l.b16 %v2410
        %v2459 = vunpack.c.h.b16 %v2410
        %v2460 = vunpack.c.l.b16 %v2411
        %v2461 = vunpack.c.h.b16 %v2411
        %v2462 = vunpack.c.l.b16 %v2412
        %v2463 = vunpack.c.h.b16 %v2412
        %v2464 = vunpack.c.l.b16 %v2413
        %v2465 = vunpack.c.h.b16 %v2413
        %v2466 = vunpack.c.l.b16 %v2414
        %v2467 = vunpack.c.h.b16 %v2414
        %v2468 = vunpack.c.l.b16 %v2415
        %v2469 = vunpack.c.h.b16 %v2415
        %v2470 = vunpack.c.l.b16 %v2416
        %v2471 = vunpack.c.h.b16 %v2416
        %v2472 = vunpack.c.l.b16 %v2417
        %v2473 = vunpack.c.h.b16 %v2417
        %v2474 = vunpack.c.l.b16 %v2418
        %v2475 = vunpack.c.h.b16 %v2418
        %v2476 = vunpack.c.l.b16 %v2419
        %v2477 = vunpack.c.h.b16 %v2419
        %v2478 = vunpack.c.l.b16 %v2420
        %v2479 = vunpack.c.h.b16 %v2420
        %v2480 = vunpack.c.l.b16 %v2421
        %v2481 = vunpack.c.h.b16 %v2421
        %v2482 = vunpack.c.l.b16 %v2422
        %v2483 = vunpack.c.h.b16 %v2422
        %v2484 = vpack.c.b16 %v2454, %v2452
        %v2485 = vpack.c.b16 %v2455, %v2453
        %v2486 = vpack.c.b16 %v2458, %v2456
        %v2487 = vpack.c.b16 %v2459, %v2457
        %v2488 = vpack.c.b16 %v2462, %v2460
        %v2489 = vpack.c.b16 %v2463, %v2461
        %v2490 = vpack.c.b16 %v2466, %v2464
        %v2491 = vpack.c.b16 %v2467, %v2465
        %v2492 = vpack.c.b16 %v2470, %v2468
        %v2493 = vpack.c.b16 %v2471, %v2469
        %v2494 = vpack.c.b16 %v2474, %v2472
        %v2495 = vpack.c.b16 %v2475, %v2473
        %v2496 = vpack.c.b16 %v2478, %v2476
        %v2497 = vpack.c.b16 %v2479, %v2477
        %v2498 = vpack.c.b16 %v2482, %v2480
        %v2499 = vpack.c.b16 %v2483, %v2481
        %2516 = vmatprep.subr.bf16.mxu0 %v2499
        %2517 = vmatpush1.bf16.msra.mxu0 %v2498
        %2518 = vmatprep.subr.bf16.mxu0 %v2497
        %2519 = vmatpush1.bf16.msra.mxu0 %v2496
        %2520 = vmatprep.subr.bf16.mxu0 %v2495
        %2521 = vmatpush1.bf16.msra.mxu0 %v2494
        %2522 = vmatprep.subr.bf16.mxu0 %v2493
        %2523 = vmatpush1.bf16.msra.mxu0 %v2492
        %2524 = vmatprep.subr.bf16.mxu0 %v2491
        %2525 = vmatpush1.bf16.msra.mxu0 %v2490
        %2526 = vmatprep.subr.bf16.mxu0 %v2489
        %2527 = vmatpush1.bf16.msra.mxu0 %v2488
        %2528 = vmatprep.subr.bf16.mxu0 %v2487
        %2529 = vmatpush1.bf16.msra.mxu0 %v2486
        %2530 = vmatprep.subr.bf16.mxu0 %v2485
        %2531 = vmatpush1.bf16.msra.mxu0 %v2484
        %2532 = vmatprep.subr.bf16.mxu0 0
        %2533 = vmatpush2.bf16.msra.mxu0 0
        %2534 = vmatprep.subr.bf16.mxu0 0
        %2535 = vmatpush2.bf16.msra.mxu0 0
        %2536 = vmatprep.subr.bf16.mxu0 0
        %2537 = vmatpush2.bf16.msra.mxu0 0
        %2538 = vmatprep.subr.bf16.mxu0 0
        %2539 = vmatpush2.bf16.msra.mxu0 0
        %2540 = vmatprep.subr.bf16.mxu0 0
        %2541 = vmatpush2.bf16.msra.mxu0 0
        %2542 = vmatprep.subr.bf16.mxu0 0
        %2543 = vmatpush2.bf16.msra.mxu0 0
        %2544 = vmatprep.subr.bf16.mxu0 0
        %2545 = vmatpush2.bf16.msra.mxu0 0
        %2546 = vmatprep.subr.bf16.mxu0 0
        %2547 = vmatpush2.bf16.msra.mxu0 0
        %2548 = vmatprep.mubr.bf16.mxu0 0
        %2549 = vmatmul.mubr.bf16.gmra.mxu0 %v2405
        %v2550 = vpop.f32.mrf.mxu0
        %v2551 = vadd.f32 %v2429, %v2550
        %v2552 = vpop.f32.mrf.mxu0
        %v2553 = vadd.f32 %v2433, %v2552
        %v2554 = vpop.f32.mrf.mxu0
        %v2555 = vadd.f32 %v2429, %v2554
        %v2556 = vpop.f32.mrf.mxu0
        %v2557 = vadd.f32 %v2433, %v2556
        %2558 = vdwg.mxu0
        %v2559 = vadd.f32 %v2080, %v2551
        %v2560 = vadd.f32 %v2081, %v2555
        %v2561 = vadd.f32 %v2082, %v2553
        %v2562 = vadd.f32 %v2083, %v2557
        %v2563 = vrot.slane %v2561, 6
        %v2564 = vrot.slane %v2562, 6
        %v2565 = vsel %vm1118, %v2563, %v2564
        %v2566 = vsel %vm1118, %v2564, %v2563
        %v2567 = vsel %vm1123, %v2566, 0.0
        %v2568 = vsel %vm1124, %v2565, 0.0
        %v2569 = vpack.c.bf16 %v2568, %v2567
        %s2570 = scalar_lea.vmem [#allocation2], 512
        %v2571 = vld [vmem:[%s2570] sm:$0xff]
        %v2572 = vld [vmem:[%s2570 + $0x8] sm:$0xff]
        %v2573 = vld [vmem:[%s2570 + $0x10] sm:$0xff]
        %v2574 = vld [vmem:[%s2570 + $0x18] sm:$0xff]
        %v2575 = vld [vmem:[%s2570 + $0x20] sm:$0xff]
        %v2576 = vld [vmem:[%s2570 + $0x28] sm:$0xff]
        %v2577 = vld [vmem:[%s2570 + $0x30] sm:$0xff]
        %v2578 = vld [vmem:[%s2570 + $0x38] sm:$0xff]
        %v2579 = vld [vmem:[%s2570 + $0x40] sm:$0xff]
        %v2580 = vld [vmem:[%s2570 + $0x48] sm:$0xff]
        %v2581 = vld [vmem:[%s2570 + $0x50] sm:$0xff]
        %v2582 = vld [vmem:[%s2570 + $0x58] sm:$0xff]
        %v2583 = vld [vmem:[%s2570 + $0x60] sm:$0xff]
        %v2584 = vld [vmem:[%s2570 + $0x68] sm:$0xff]
        %v2585 = vld [vmem:[%s2570 + $0x70] sm:$0xff]
        %v2586 = vld [vmem:[%s2570 + $0x78] sm:$0xff]
        %v2587 = vpack.c.bf16 %v2562, %v2561
        %s2588 = scalar_lea.vmem [#allocation4], 512
        %v2589 = vld [vmem:[%s2588] sm:$0xff]
        %v2590 = vld [vmem:[%s2588 + $0x8] sm:$0xff]
        %v2591 = vld [vmem:[%s2588 + $0x10] sm:$0xff]
        %v2592 = vld [vmem:[%s2588 + $0x18] sm:$0xff]
        %v2593 = vld [vmem:[%s2588 + $0x20] sm:$0xff]
        %v2594 = vld [vmem:[%s2588 + $0x28] sm:$0xff]
        %v2595 = vld [vmem:[%s2588 + $0x30] sm:$0xff]
        %v2596 = vld [vmem:[%s2588 + $0x38] sm:$0xff]
        %v2597 = vld [vmem:[%s2588 + $0x40] sm:$0xff]
        %v2598 = vld [vmem:[%s2588 + $0x48] sm:$0xff]
        %v2599 = vld [vmem:[%s2588 + $0x50] sm:$0xff]
        %v2600 = vld [vmem:[%s2588 + $0x58] sm:$0xff]
        %v2601 = vld [vmem:[%s2588 + $0x60] sm:$0xff]
        %v2602 = vld [vmem:[%s2588 + $0x68] sm:$0xff]
        %v2603 = vld [vmem:[%s2588 + $0x70] sm:$0xff]
        %v2604 = vld [vmem:[%s2588 + $0x78] sm:$0xff]
        %v2621 = vunpack.c.l.b16 %v2589
        %v2622 = vunpack.c.h.b16 %v2589
        %v2623 = vunpack.c.l.b16 %v2590
        %v2624 = vunpack.c.h.b16 %v2590
        %v2625 = vunpack.c.l.b16 %v2591
        %v2626 = vunpack.c.h.b16 %v2591
        %v2627 = vunpack.c.l.b16 %v2592
        %v2628 = vunpack.c.h.b16 %v2592
        %v2629 = vunpack.c.l.b16 %v2593
        %v2630 = vunpack.c.h.b16 %v2593
        %v2631 = vunpack.c.l.b16 %v2594
        %v2632 = vunpack.c.h.b16 %v2594
        %v2633 = vunpack.c.l.b16 %v2595
        %v2634 = vunpack.c.h.b16 %v2595
        %v2635 = vunpack.c.l.b16 %v2596
        %v2636 = vunpack.c.h.b16 %v2596
        %v2637 = vunpack.c.l.b16 %v2597
        %v2638 = vunpack.c.h.b16 %v2597
        %v2639 = vunpack.c.l.b16 %v2598
        %v2640 = vunpack.c.h.b16 %v2598
        %v2641 = vunpack.c.l.b16 %v2599
        %v2642 = vunpack.c.h.b16 %v2599
        %v2643 = vunpack.c.l.b16 %v2600
        %v2644 = vunpack.c.h.b16 %v2600
        %v2645 = vunpack.c.l.b16 %v2601
        %v2646 = vunpack.c.h.b16 %v2601
        %v2647 = vunpack.c.l.b16 %v2602
        %v2648 = vunpack.c.h.b16 %v2602
        %v2649 = vunpack.c.l.b16 %v2603
        %v2650 = vunpack.c.h.b16 %v2603
        %v2651 = vunpack.c.l.b16 %v2604
        %v2652 = vunpack.c.h.b16 %v2604
        %v2653 = vpack.c.b16 %v2623, %v2621
        %v2654 = vpack.c.b16 %v2624, %v2622
        %v2655 = vpack.c.b16 %v2627, %v2625
        %v2656 = vpack.c.b16 %v2628, %v2626
        %v2657 = vpack.c.b16 %v2631, %v2629
        %v2658 = vpack.c.b16 %v2632, %v2630
        %v2659 = vpack.c.b16 %v2635, %v2633
        %v2660 = vpack.c.b16 %v2636, %v2634
        %v2661 = vpack.c.b16 %v2639, %v2637
        %v2662 = vpack.c.b16 %v2640, %v2638
        %v2663 = vpack.c.b16 %v2643, %v2641
        %v2664 = vpack.c.b16 %v2644, %v2642
        %v2665 = vpack.c.b16 %v2647, %v2645
        %v2666 = vpack.c.b16 %v2648, %v2646
        %v2667 = vpack.c.b16 %v2651, %v2649
        %v2668 = vpack.c.b16 %v2652, %v2650
        %2685 = vmatprep.subr.bf16.mxu0 %v2668
        %2686 = vmatpush1.bf16.msra.mxu0 %v2667
        %2687 = vmatprep.subr.bf16.mxu0 %v2666
        %2688 = vmatpush1.bf16.msra.mxu0 %v2665
        %2689 = vmatprep.subr.bf16.mxu0 %v2664
        %2690 = vmatpush1.bf16.msra.mxu0 %v2663
        %2691 = vmatprep.subr.bf16.mxu0 %v2662
        %2692 = vmatpush1.bf16.msra.mxu0 %v2661
        %2693 = vmatprep.subr.bf16.mxu0 %v2660
        %2694 = vmatpush1.bf16.msra.mxu0 %v2659
        %2695 = vmatprep.subr.bf16.mxu0 %v2658
        %2696 = vmatpush1.bf16.msra.mxu0 %v2657
        %2697 = vmatprep.subr.bf16.mxu0 %v2656
        %2698 = vmatpush1.bf16.msra.mxu0 %v2655
        %2699 = vmatprep.subr.bf16.mxu0 %v2654
        %2700 = vmatpush1.bf16.msra.mxu0 %v2653
        %2701 = vmatprep.subr.bf16.mxu0 0
        %2702 = vmatpush2.bf16.msra.mxu0 0
        %2703 = vmatprep.subr.bf16.mxu0 0
        %2704 = vmatpush2.bf16.msra.mxu0 0
        %2705 = vmatprep.subr.bf16.mxu0 0
        %2706 = vmatpush2.bf16.msra.mxu0 0
        %2707 = vmatprep.subr.bf16.mxu0 0
        %2708 = vmatpush2.bf16.msra.mxu0 0
        %2709 = vmatprep.subr.bf16.mxu0 0
        %2710 = vmatpush2.bf16.msra.mxu0 0
        %2711 = vmatprep.subr.bf16.mxu0 0
        %2712 = vmatpush2.bf16.msra.mxu0 0
        %2713 = vmatprep.subr.bf16.mxu0 0
        %2714 = vmatpush2.bf16.msra.mxu0 0
        %2715 = vmatprep.subr.bf16.mxu0 0
        %2716 = vmatpush2.bf16.msra.mxu0 0
        %2717 = vmatprep.mubr.bf16.mxu0 0
        %2718 = vmatmul.mubr.bf16.gmra.mxu0 %v2587
        %v2719 = vpop.f32.mrf.mxu0
        %v2720 = vadd.f32 0.0, %v2719
        %v2721 = vpop.f32.mrf.mxu0
        %v2722 = vadd.f32 0.0, %v2721
        %v2723 = vpop.f32.mrf.mxu0
        %v2724 = vadd.f32 0.0, %v2723
        %v2725 = vpop.f32.mrf.mxu0
        %v2726 = vadd.f32 0.0, %v2725
        %2727 = vdwg.mxu0
        %v2744 = vunpack.c.l.b16 %v2571
        %v2745 = vunpack.c.h.b16 %v2571
        %v2746 = vunpack.c.l.b16 %v2572
        %v2747 = vunpack.c.h.b16 %v2572
        %v2748 = vunpack.c.l.b16 %v2573
        %v2749 = vunpack.c.h.b16 %v2573
        %v2750 = vunpack.c.l.b16 %v2574
        %v2751 = vunpack.c.h.b16 %v2574
        %v2752 = vunpack.c.l.b16 %v2575
        %v2753 = vunpack.c.h.b16 %v2575
        %v2754 = vunpack.c.l.b16 %v2576
        %v2755 = vunpack.c.h.b16 %v2576
        %v2756 = vunpack.c.l.b16 %v2577
        %v2757 = vunpack.c.h.b16 %v2577
        %v2758 = vunpack.c.l.b16 %v2578
        %v2759 = vunpack.c.h.b16 %v2578
        %v2760 = vunpack.c.l.b16 %v2579
        %v2761 = vunpack.c.h.b16 %v2579
        %v2762 = vunpack.c.l.b16 %v2580
        %v2763 = vunpack.c.h.b16 %v2580
        %v2764 = vunpack.c.l.b16 %v2581
        %v2765 = vunpack.c.h.b16 %v2581
        %v2766 = vunpack.c.l.b16 %v2582
        %v2767 = vunpack.c.h.b16 %v2582
        %v2768 = vunpack.c.l.b16 %v2583
        %v2769 = vunpack.c.h.b16 %v2583
        %v2770 = vunpack.c.l.b16 %v2584
        %v2771 = vunpack.c.h.b16 %v2584
        %v2772 = vunpack.c.l.b16 %v2585
        %v2773 = vunpack.c.h.b16 %v2585
        %v2774 = vunpack.c.l.b16 %v2586
        %v2775 = vunpack.c.h.b16 %v2586
        %v2776 = vpack.c.b16 %v2746, %v2744
        %v2777 = vpack.c.b16 %v2747, %v2745
        %v2778 = vpack.c.b16 %v2750, %v2748
        %v2779 = vpack.c.b16 %v2751, %v2749
        %v2780 = vpack.c.b16 %v2754, %v2752
        %v2781 = vpack.c.b16 %v2755, %v2753
        %v2782 = vpack.c.b16 %v2758, %v2756
        %v2783 = vpack.c.b16 %v2759, %v2757
        %v2784 = vpack.c.b16 %v2762, %v2760
        %v2785 = vpack.c.b16 %v2763, %v2761
        %v2786 = vpack.c.b16 %v2766, %v2764
        %v2787 = vpack.c.b16 %v2767, %v2765
        %v2788 = vpack.c.b16 %v2770, %v2768
        %v2789 = vpack.c.b16 %v2771, %v2769
        %v2790 = vpack.c.b16 %v2774, %v2772
        %v2791 = vpack.c.b16 %v2775, %v2773
        %2808 = vmatprep.subr.bf16.mxu0 %v2791
        %2809 = vmatpush1.bf16.msra.mxu0 %v2790
        %2810 = vmatprep.subr.bf16.mxu0 %v2789
        %2811 = vmatpush1.bf16.msra.mxu0 %v2788
        %2812 = vmatprep.subr.bf16.mxu0 %v2787
        %2813 = vmatpush1.bf16.msra.mxu0 %v2786
        %2814 = vmatprep.subr.bf16.mxu0 %v2785
        %2815 = vmatpush1.bf16.msra.mxu0 %v2784
        %2816 = vmatprep.subr.bf16.mxu0 %v2783
        %2817 = vmatpush1.bf16.msra.mxu0 %v2782
        %2818 = vmatprep.subr.bf16.mxu0 %v2781
        %2819 = vmatpush1.bf16.msra.mxu0 %v2780
        %2820 = vmatprep.subr.bf16.mxu0 %v2779
        %2821 = vmatpush1.bf16.msra.mxu0 %v2778
        %2822 = vmatprep.subr.bf16.mxu0 %v2777
        %2823 = vmatpush1.bf16.msra.mxu0 %v2776
        %2824 = vmatprep.subr.bf16.mxu0 0
        %2825 = vmatpush2.bf16.msra.mxu0 0
        %2826 = vmatprep.subr.bf16.mxu0 0
        %2827 = vmatpush2.bf16.msra.mxu0 0
        %2828 = vmatprep.subr.bf16.mxu0 0
        %2829 = vmatpush2.bf16.msra.mxu0 0
        %2830 = vmatprep.subr.bf16.mxu0 0
        %2831 = vmatpush2.bf16.msra.mxu0 0
        %2832 = vmatprep.subr.bf16.mxu0 0
        %2833 = vmatpush2.bf16.msra.mxu0 0
        %2834 = vmatprep.subr.bf16.mxu0 0
        %2835 = vmatpush2.bf16.msra.mxu0 0
        %2836 = vmatprep.subr.bf16.mxu0 0
        %2837 = vmatpush2.bf16.msra.mxu0 0
        %2838 = vmatprep.subr.bf16.mxu0 0
        %2839 = vmatpush2.bf16.msra.mxu0 0
        %2840 = vmatprep.mubr.bf16.mxu0 0
        %2841 = vmatmul.mubr.bf16.gmra.mxu0 %v2569
        %v2842 = vpop.f32.mrf.mxu0
        %v2843 = vadd.f32 %v2720, %v2842
        %v2844 = vpop.f32.mrf.mxu0
        %v2845 = vadd.f32 %v2722, %v2844
        %v2846 = vpop.f32.mrf.mxu0
        %v2847 = vadd.f32 %v2724, %v2846
        %v2848 = vpop.f32.mrf.mxu0
        %v2849 = vadd.f32 %v2726, %v2848
        %2850 = vdwg.mxu0
        %s2851 = scalar_lea.vmem %s5, 8
        %v2852 = vld [vmem:[%s2851] sm:$0x3]
        %v2854 = vlaneseq
        %v2855 = vshrl.u32 %v2854, 7
        %v2856 = vsub.s32 0, %v2855
        %v2857 = vrot.slane %v2852, %v2856
        %v2858 = vlaneseq
        %v2859 = vshrl.u32 %v2858, 7
        %v2860 = vsub.s32 1, %v2859
        %v2861 = vrot.slane %v2852, %v2860
        %v2864 = vadd.f32 %v2843, %v2857
        %v2865 = vadd.f32 %v2845, %v2861
        %v2866 = vadd.f32 %v2847, %v2857
        %v2867 = vadd.f32 %v2849, %v2861
        %v2868 = vtanh.pop %v2864
        %v2869 = vtanh.pop %v2866
        %v2870 = vxor.u32 %v2865, 2147483648
        %v2871 = vxor.u32 %v2867, 2147483648
        %v2872 = vmul.f32 %v2870, 1.442695
        %v2873 = vpow.pop %v2872
        %v2874 = vmul.f32 %v2871, 1.442695
        %v2875 = vpow.pop %v2874
        %v2876 = vadd.f32 %v2873, 1.0
        %v2877 = vadd.f32 %v2875, 1.0
        %v2878 = vrcp.pop %v2876
        %v2879 = vmul.f32 1.0, %v2878
        %v2880 = vrcp.pop %v2877
        %v2881 = vmul.f32 1.0, %v2880
        %v2882 = vmul.f32 %v2868, %v2879
        %v2883 = vmul.f32 %v2869, %v2881
        %v2884 = vpack.c.bf16 %v2883, %v2882
        %s2885 = scalar_lea.vmem [#allocation6], 512
        %v2886 = vld [vmem:[%s2885] sm:$0xff]
        %v2887 = vld [vmem:[%s2885 + $0x8] sm:$0xff]
        %v2888 = vld [vmem:[%s2885 + $0x10] sm:$0xff]
        %v2889 = vld [vmem:[%s2885 + $0x18] sm:$0xff]
        %v2890 = vld [vmem:[%s2885 + $0x20] sm:$0xff]
        %v2891 = vld [vmem:[%s2885 + $0x28] sm:$0xff]
        %v2892 = vld [vmem:[%s2885 + $0x30] sm:$0xff]
        %v2893 = vld [vmem:[%s2885 + $0x38] sm:$0xff]
        %v2894 = vld [vmem:[%s2885 + $0x40] sm:$0xff]
        %v2895 = vld [vmem:[%s2885 + $0x48] sm:$0xff]
        %v2896 = vld [vmem:[%s2885 + $0x50] sm:$0xff]
        %v2897 = vld [vmem:[%s2885 + $0x58] sm:$0xff]
        %v2898 = vld [vmem:[%s2885 + $0x60] sm:$0xff]
        %v2899 = vld [vmem:[%s2885 + $0x68] sm:$0xff]
        %v2900 = vld [vmem:[%s2885 + $0x70] sm:$0xff]
        %v2901 = vld [vmem:[%s2885 + $0x78] sm:$0xff]
        %s2902 = scalar_lea.vmem %s7, 8
        %v2903 = vld [vmem:[%s2902] sm:$0x3]
        %v2905 = vlaneseq
        %v2906 = vshrl.u32 %v2905, 7
        %v2907 = vsub.s32 0, %v2906
        %v2908 = vrot.slane %v2903, %v2907
        %v2909 = vlaneseq
        %v2910 = vshrl.u32 %v2909, 7
        %v2911 = vsub.s32 1, %v2910
        %v2912 = vrot.slane %v2903, %v2911
        %v2931 = vunpack.c.l.b16 %v2886
        %v2932 = vunpack.c.h.b16 %v2886
        %v2933 = vunpack.c.l.b16 %v2887
        %v2934 = vunpack.c.h.b16 %v2887
        %v2935 = vunpack.c.l.b16 %v2888
        %v2936 = vunpack.c.h.b16 %v2888
        %v2937 = vunpack.c.l.b16 %v2889
        %v2938 = vunpack.c.h.b16 %v2889
        %v2939 = vunpack.c.l.b16 %v2890
        %v2940 = vunpack.c.h.b16 %v2890
        %v2941 = vunpack.c.l.b16 %v2891
        %v2942 = vunpack.c.h.b16 %v2891
        %v2943 = vunpack.c.l.b16 %v2892
        %v2944 = vunpack.c.h.b16 %v2892
        %v2945 = vunpack.c.l.b16 %v2893
        %v2946 = vunpack.c.h.b16 %v2893
        %v2947 = vunpack.c.l.b16 %v2894
        %v2948 = vunpack.c.h.b16 %v2894
        %v2949 = vunpack.c.l.b16 %v2895
        %v2950 = vunpack.c.h.b16 %v2895
        %v2951 = vunpack.c.l.b16 %v2896
        %v2952 = vunpack.c.h.b16 %v2896
        %v2953 = vunpack.c.l.b16 %v2897
        %v2954 = vunpack.c.h.b16 %v2897
        %v2955 = vunpack.c.l.b16 %v2898
        %v2956 = vunpack.c.h.b16 %v2898
        %v2957 = vunpack.c.l.b16 %v2899
        %v2958 = vunpack.c.h.b16 %v2899
        %v2959 = vunpack.c.l.b16 %v2900
        %v2960 = vunpack.c.h.b16 %v2900
        %v2961 = vunpack.c.l.b16 %v2901
        %v2962 = vunpack.c.h.b16 %v2901
        %v2963 = vpack.c.b16 %v2933, %v2931
        %v2964 = vpack.c.b16 %v2934, %v2932
        %v2965 = vpack.c.b16 %v2937, %v2935
        %v2966 = vpack.c.b16 %v2938, %v2936
        %v2967 = vpack.c.b16 %v2941, %v2939
        %v2968 = vpack.c.b16 %v2942, %v2940
        %v2969 = vpack.c.b16 %v2945, %v2943
        %v2970 = vpack.c.b16 %v2946, %v2944
        %v2971 = vpack.c.b16 %v2949, %v2947
        %v2972 = vpack.c.b16 %v2950, %v2948
        %v2973 = vpack.c.b16 %v2953, %v2951
        %v2974 = vpack.c.b16 %v2954, %v2952
        %v2975 = vpack.c.b16 %v2957, %v2955
        %v2976 = vpack.c.b16 %v2958, %v2956
        %v2977 = vpack.c.b16 %v2961, %v2959
        %v2978 = vpack.c.b16 %v2962, %v2960
        %2995 = vmatprep.subr.bf16.mxu0 %v2978
        %2996 = vmatpush1.bf16.msra.mxu0 %v2977
        %2997 = vmatprep.subr.bf16.mxu0 %v2976
        %2998 = vmatpush1.bf16.msra.mxu0 %v2975
        %2999 = vmatprep.subr.bf16.mxu0 %v2974
        %3000 = vmatpush1.bf16.msra.mxu0 %v2973
        %3001 = vmatprep.subr.bf16.mxu0 %v2972
        %3002 = vmatpush1.bf16.msra.mxu0 %v2971
        %3003 = vmatprep.subr.bf16.mxu0 %v2970
        %3004 = vmatpush1.bf16.msra.mxu0 %v2969
        %3005 = vmatprep.subr.bf16.mxu0 %v2968
        %3006 = vmatpush1.bf16.msra.mxu0 %v2967
        %3007 = vmatprep.subr.bf16.mxu0 %v2966
        %3008 = vmatpush1.bf16.msra.mxu0 %v2965
        %3009 = vmatprep.subr.bf16.mxu0 %v2964
        %3010 = vmatpush1.bf16.msra.mxu0 %v2963
        %3011 = vmatprep.subr.bf16.mxu0 0
        %3012 = vmatpush2.bf16.msra.mxu0 0
        %3013 = vmatprep.subr.bf16.mxu0 0
        %3014 = vmatpush2.bf16.msra.mxu0 0
        %3015 = vmatprep.subr.bf16.mxu0 0
        %3016 = vmatpush2.bf16.msra.mxu0 0
        %3017 = vmatprep.subr.bf16.mxu0 0
        %3018 = vmatpush2.bf16.msra.mxu0 0
        %3019 = vmatprep.subr.bf16.mxu0 0
        %3020 = vmatpush2.bf16.msra.mxu0 0
        %3021 = vmatprep.subr.bf16.mxu0 0
        %3022 = vmatpush2.bf16.msra.mxu0 0
        %3023 = vmatprep.subr.bf16.mxu0 0
        %3024 = vmatpush2.bf16.msra.mxu0 0
        %3025 = vmatprep.subr.bf16.mxu0 0
        %3026 = vmatpush2.bf16.msra.mxu0 0
        %3027 = vmatprep.mubr.bf16.mxu0 0
        %3028 = vmatmul.mubr.bf16.gmra.mxu0 %v2884
        %v3029 = vpop.f32.mrf.mxu0
        %v3030 = vadd.f32 %v2908, %v3029
        %v3031 = vpop.f32.mrf.mxu0
        %v3032 = vadd.f32 %v2912, %v3031
        %v3033 = vpop.f32.mrf.mxu0
        %v3034 = vadd.f32 %v2908, %v3033
        %v3035 = vpop.f32.mrf.mxu0
        %v3036 = vadd.f32 %v2912, %v3035
        %3037 = vdwg.mxu0
        %v3038 = vadd.f32 %v2559, %v3030
        %v3039 = vadd.f32 %v2560, %v3034
        %v3040 = vadd.f32 %v2561, %v3032
        %v3041 = vadd.f32 %v2562, %v3036
        %v3042 = vrot.slane %v3040, 4
        %v3043 = vrot.slane %v3041, 4
        %v3044 = vsel %vm1602, %v3042, %v3043
        %v3045 = vsel %vm1602, %v3043, %v3042
        %v3046 = vsel %vm1607, %v3045, 0.0
        %v3047 = vsel %vm1608, %v3044, 0.0
        %v3048 = vpack.c.bf16 %v3047, %v3046
        %s3049 = scalar_lea.vmem [#allocation2], 640
        %v3050 = vld [vmem:[%s3049] sm:$0xff]
        %v3051 = vld [vmem:[%s3049 + $0x8] sm:$0xff]
        %v3052 = vld [vmem:[%s3049 + $0x10] sm:$0xff]
        %v3053 = vld [vmem:[%s3049 + $0x18] sm:$0xff]
        %v3054 = vld [vmem:[%s3049 + $0x20] sm:$0xff]
        %v3055 = vld [vmem:[%s3049 + $0x28] sm:$0xff]
        %v3056 = vld [vmem:[%s3049 + $0x30] sm:$0xff]
        %v3057 = vld [vmem:[%s3049 + $0x38] sm:$0xff]
        %v3058 = vld [vmem:[%s3049 + $0x40] sm:$0xff]
        %v3059 = vld [vmem:[%s3049 + $0x48] sm:$0xff]
        %v3060 = vld [vmem:[%s3049 + $0x50] sm:$0xff]
        %v3061 = vld [vmem:[%s3049 + $0x58] sm:$0xff]
        %v3062 = vld [vmem:[%s3049 + $0x60] sm:$0xff]
        %v3063 = vld [vmem:[%s3049 + $0x68] sm:$0xff]
        %v3064 = vld [vmem:[%s3049 + $0x70] sm:$0xff]
        %v3065 = vld [vmem:[%s3049 + $0x78] sm:$0xff]
        %v3066 = vpack.c.bf16 %v3041, %v3040
        %s3067 = scalar_lea.vmem [#allocation4], 640
        %v3068 = vld [vmem:[%s3067] sm:$0xff]
        %v3069 = vld [vmem:[%s3067 + $0x8] sm:$0xff]
        %v3070 = vld [vmem:[%s3067 + $0x10] sm:$0xff]
        %v3071 = vld [vmem:[%s3067 + $0x18] sm:$0xff]
        %v3072 = vld [vmem:[%s3067 + $0x20] sm:$0xff]
        %v3073 = vld [vmem:[%s3067 + $0x28] sm:$0xff]
        %v3074 = vld [vmem:[%s3067 + $0x30] sm:$0xff]
        %v3075 = vld [vmem:[%s3067 + $0x38] sm:$0xff]
        %v3076 = vld [vmem:[%s3067 + $0x40] sm:$0xff]
        %v3077 = vld [vmem:[%s3067 + $0x48] sm:$0xff]
        %v3078 = vld [vmem:[%s3067 + $0x50] sm:$0xff]
        %v3079 = vld [vmem:[%s3067 + $0x58] sm:$0xff]
        %v3080 = vld [vmem:[%s3067 + $0x60] sm:$0xff]
        %v3081 = vld [vmem:[%s3067 + $0x68] sm:$0xff]
        %v3082 = vld [vmem:[%s3067 + $0x70] sm:$0xff]
        %v3083 = vld [vmem:[%s3067 + $0x78] sm:$0xff]
        %v3100 = vunpack.c.l.b16 %v3068
        %v3101 = vunpack.c.h.b16 %v3068
        %v3102 = vunpack.c.l.b16 %v3069
        %v3103 = vunpack.c.h.b16 %v3069
        %v3104 = vunpack.c.l.b16 %v3070
        %v3105 = vunpack.c.h.b16 %v3070
        %v3106 = vunpack.c.l.b16 %v3071
        %v3107 = vunpack.c.h.b16 %v3071
        %v3108 = vunpack.c.l.b16 %v3072
        %v3109 = vunpack.c.h.b16 %v3072
        %v3110 = vunpack.c.l.b16 %v3073
        %v3111 = vunpack.c.h.b16 %v3073
        %v3112 = vunpack.c.l.b16 %v3074
        %v3113 = vunpack.c.h.b16 %v3074
        %v3114 = vunpack.c.l.b16 %v3075
        %v3115 = vunpack.c.h.b16 %v3075
        %v3116 = vunpack.c.l.b16 %v3076
        %v3117 = vunpack.c.h.b16 %v3076
        %v3118 = vunpack.c.l.b16 %v3077
        %v3119 = vunpack.c.h.b16 %v3077
        %v3120 = vunpack.c.l.b16 %v3078
        %v3121 = vunpack.c.h.b16 %v3078
        %v3122 = vunpack.c.l.b16 %v3079
        %v3123 = vunpack.c.h.b16 %v3079
        %v3124 = vunpack.c.l.b16 %v3080
        %v3125 = vunpack.c.h.b16 %v3080
        %v3126 = vunpack.c.l.b16 %v3081
        %v3127 = vunpack.c.h.b16 %v3081
        %v3128 = vunpack.c.l.b16 %v3082
        %v3129 = vunpack.c.h.b16 %v3082
        %v3130 = vunpack.c.l.b16 %v3083
        %v3131 = vunpack.c.h.b16 %v3083
        %v3132 = vpack.c.b16 %v3102, %v3100
        %v3133 = vpack.c.b16 %v3103, %v3101
        %v3134 = vpack.c.b16 %v3106, %v3104
        %v3135 = vpack.c.b16 %v3107, %v3105
        %v3136 = vpack.c.b16 %v3110, %v3108
        %v3137 = vpack.c.b16 %v3111, %v3109
        %v3138 = vpack.c.b16 %v3114, %v3112
        %v3139 = vpack.c.b16 %v3115, %v3113
        %v3140 = vpack.c.b16 %v3118, %v3116
        %v3141 = vpack.c.b16 %v3119, %v3117
        %v3142 = vpack.c.b16 %v3122, %v3120
        %v3143 = vpack.c.b16 %v3123, %v3121
        %v3144 = vpack.c.b16 %v3126, %v3124
        %v3145 = vpack.c.b16 %v3127, %v3125
        %v3146 = vpack.c.b16 %v3130, %v3128
        %v3147 = vpack.c.b16 %v3131, %v3129
        %3164 = vmatprep.subr.bf16.mxu0 %v3147
        %3165 = vmatpush1.bf16.msra.mxu0 %v3146
        %3166 = vmatprep.subr.bf16.mxu0 %v3145
        %3167 = vmatpush1.bf16.msra.mxu0 %v3144
        %3168 = vmatprep.subr.bf16.mxu0 %v3143
        %3169 = vmatpush1.bf16.msra.mxu0 %v3142
        %3170 = vmatprep.subr.bf16.mxu0 %v3141
        %3171 = vmatpush1.bf16.msra.mxu0 %v3140
        %3172 = vmatprep.subr.bf16.mxu0 %v3139
        %3173 = vmatpush1.bf16.msra.mxu0 %v3138
        %3174 = vmatprep.subr.bf16.mxu0 %v3137
        %3175 = vmatpush1.bf16.msra.mxu0 %v3136
        %3176 = vmatprep.subr.bf16.mxu0 %v3135
        %3177 = vmatpush1.bf16.msra.mxu0 %v3134
        %3178 = vmatprep.subr.bf16.mxu0 %v3133
        %3179 = vmatpush1.bf16.msra.mxu0 %v3132
        %3180 = vmatprep.subr.bf16.mxu0 0
        %3181 = vmatpush2.bf16.msra.mxu0 0
        %3182 = vmatprep.subr.bf16.mxu0 0
        %3183 = vmatpush2.bf16.msra.mxu0 0
        %3184 = vmatprep.subr.bf16.mxu0 0
        %3185 = vmatpush2.bf16.msra.mxu0 0
        %3186 = vmatprep.subr.bf16.mxu0 0
        %3187 = vmatpush2.bf16.msra.mxu0 0
        %3188 = vmatprep.subr.bf16.mxu0 0
        %3189 = vmatpush2.bf16.msra.mxu0 0
        %3190 = vmatprep.subr.bf16.mxu0 0
        %3191 = vmatpush2.bf16.msra.mxu0 0
        %3192 = vmatprep.subr.bf16.mxu0 0
        %3193 = vmatpush2.bf16.msra.mxu0 0
        %3194 = vmatprep.subr.bf16.mxu0 0
        %3195 = vmatpush2.bf16.msra.mxu0 0
        %3196 = vmatprep.mubr.bf16.mxu0 0
        %3197 = vmatmul.mubr.bf16.gmra.mxu0 %v3066
        %v3198 = vpop.f32.mrf.mxu0
        %v3199 = vadd.f32 0.0, %v3198
        %v3200 = vpop.f32.mrf.mxu0
        %v3201 = vadd.f32 0.0, %v3200
        %v3202 = vpop.f32.mrf.mxu0
        %v3203 = vadd.f32 0.0, %v3202
        %v3204 = vpop.f32.mrf.mxu0
        %v3205 = vadd.f32 0.0, %v3204
        %3206 = vdwg.mxu0
        %v3223 = vunpack.c.l.b16 %v3050
        %v3224 = vunpack.c.h.b16 %v3050
        %v3225 = vunpack.c.l.b16 %v3051
        %v3226 = vunpack.c.h.b16 %v3051
        %v3227 = vunpack.c.l.b16 %v3052
        %v3228 = vunpack.c.h.b16 %v3052
        %v3229 = vunpack.c.l.b16 %v3053
        %v3230 = vunpack.c.h.b16 %v3053
        %v3231 = vunpack.c.l.b16 %v3054
        %v3232 = vunpack.c.h.b16 %v3054
        %v3233 = vunpack.c.l.b16 %v3055
        %v3234 = vunpack.c.h.b16 %v3055
        %v3235 = vunpack.c.l.b16 %v3056
        %v3236 = vunpack.c.h.b16 %v3056
        %v3237 = vunpack.c.l.b16 %v3057
        %v3238 = vunpack.c.h.b16 %v3057
        %v3239 = vunpack.c.l.b16 %v3058
        %v3240 = vunpack.c.h.b16 %v3058
        %v3241 = vunpack.c.l.b16 %v3059
        %v3242 = vunpack.c.h.b16 %v3059
        %v3243 = vunpack.c.l.b16 %v3060
        %v3244 = vunpack.c.h.b16 %v3060
        %v3245 = vunpack.c.l.b16 %v3061
        %v3246 = vunpack.c.h.b16 %v3061
        %v3247 = vunpack.c.l.b16 %v3062
        %v3248 = vunpack.c.h.b16 %v3062
        %v3249 = vunpack.c.l.b16 %v3063
        %v3250 = vunpack.c.h.b16 %v3063
        %v3251 = vunpack.c.l.b16 %v3064
        %v3252 = vunpack.c.h.b16 %v3064
        %v3253 = vunpack.c.l.b16 %v3065
        %v3254 = vunpack.c.h.b16 %v3065
        %v3255 = vpack.c.b16 %v3225, %v3223
        %v3256 = vpack.c.b16 %v3226, %v3224
        %v3257 = vpack.c.b16 %v3229, %v3227
        %v3258 = vpack.c.b16 %v3230, %v3228
        %v3259 = vpack.c.b16 %v3233, %v3231
        %v3260 = vpack.c.b16 %v3234, %v3232
        %v3261 = vpack.c.b16 %v3237, %v3235
        %v3262 = vpack.c.b16 %v3238, %v3236
        %v3263 = vpack.c.b16 %v3241, %v3239
        %v3264 = vpack.c.b16 %v3242, %v3240
        %v3265 = vpack.c.b16 %v3245, %v3243
        %v3266 = vpack.c.b16 %v3246, %v3244
        %v3267 = vpack.c.b16 %v3249, %v3247
        %v3268 = vpack.c.b16 %v3250, %v3248
        %v3269 = vpack.c.b16 %v3253, %v3251
        %v3270 = vpack.c.b16 %v3254, %v3252
        %3287 = vmatprep.subr.bf16.mxu0 %v3270
        %3288 = vmatpush1.bf16.msra.mxu0 %v3269
        %3289 = vmatprep.subr.bf16.mxu0 %v3268
        %3290 = vmatpush1.bf16.msra.mxu0 %v3267
        %3291 = vmatprep.subr.bf16.mxu0 %v3266
        %3292 = vmatpush1.bf16.msra.mxu0 %v3265
        %3293 = vmatprep.subr.bf16.mxu0 %v3264
        %3294 = vmatpush1.bf16.msra.mxu0 %v3263
        %3295 = vmatprep.subr.bf16.mxu0 %v3262
        %3296 = vmatpush1.bf16.msra.mxu0 %v3261
        %3297 = vmatprep.subr.bf16.mxu0 %v3260
        %3298 = vmatpush1.bf16.msra.mxu0 %v3259
        %3299 = vmatprep.subr.bf16.mxu0 %v3258
        %3300 = vmatpush1.bf16.msra.mxu0 %v3257
        %3301 = vmatprep.subr.bf16.mxu0 %v3256
        %3302 = vmatpush1.bf16.msra.mxu0 %v3255
        %3303 = vmatprep.subr.bf16.mxu0 0
        %3304 = vmatpush2.bf16.msra.mxu0 0
        %3305 = vmatprep.subr.bf16.mxu0 0
        %3306 = vmatpush2.bf16.msra.mxu0 0
        %3307 = vmatprep.subr.bf16.mxu0 0
        %3308 = vmatpush2.bf16.msra.mxu0 0
        %3309 = vmatprep.subr.bf16.mxu0 0
        %3310 = vmatpush2.bf16.msra.mxu0 0
        %3311 = vmatprep.subr.bf16.mxu0 0
        %3312 = vmatpush2.bf16.msra.mxu0 0
        %3313 = vmatprep.subr.bf16.mxu0 0
        %3314 = vmatpush2.bf16.msra.mxu0 0
        %3315 = vmatprep.subr.bf16.mxu0 0
        %3316 = vmatpush2.bf16.msra.mxu0 0
        %3317 = vmatprep.subr.bf16.mxu0 0
        %3318 = vmatpush2.bf16.msra.mxu0 0
        %3319 = vmatprep.mubr.bf16.mxu0 0
        %3320 = vmatmul.mubr.bf16.gmra.mxu0 %v3048
        %v3321 = vpop.f32.mrf.mxu0
        %v3322 = vadd.f32 %v3199, %v3321
        %v3323 = vpop.f32.mrf.mxu0
        %v3324 = vadd.f32 %v3201, %v3323
        %v3325 = vpop.f32.mrf.mxu0
        %v3326 = vadd.f32 %v3203, %v3325
        %v3327 = vpop.f32.mrf.mxu0
        %v3328 = vadd.f32 %v3205, %v3327
        %3329 = vdwg.mxu0
        %s3330 = scalar_lea.vmem %s5, 10
        %v3331 = vld [vmem:[%s3330] sm:$0x3]
        %v3333 = vlaneseq
        %v3334 = vshrl.u32 %v3333, 7
        %v3335 = vsub.s32 0, %v3334
        %v3336 = vrot.slane %v3331, %v3335
        %v3337 = vlaneseq
        %v3338 = vshrl.u32 %v3337, 7
        %v3339 = vsub.s32 1, %v3338
        %v3340 = vrot.slane %v3331, %v3339
        %v3343 = vadd.f32 %v3322, %v3336
        %v3344 = vadd.f32 %v3324, %v3340
        %v3345 = vadd.f32 %v3326, %v3336
        %v3346 = vadd.f32 %v3328, %v3340
        %v3347 = vtanh.pop %v3343
        %v3348 = vtanh.pop %v3345
        %v3349 = vxor.u32 %v3344, 2147483648
        %v3350 = vxor.u32 %v3346, 2147483648
        %v3351 = vmul.f32 %v3349, 1.442695
        %v3352 = vpow.pop %v3351
        %v3353 = vmul.f32 %v3350, 1.442695
        %v3354 = vpow.pop %v3353
        %v3355 = vadd.f32 %v3352, 1.0
        %v3356 = vadd.f32 %v3354, 1.0
        %v3357 = vrcp.pop %v3355
        %v3358 = vmul.f32 1.0, %v3357
        %v3359 = vrcp.pop %v3356
        %v3360 = vmul.f32 1.0, %v3359
        %v3361 = vmul.f32 %v3347, %v3358
        %v3362 = vmul.f32 %v3348, %v3360
        %v3363 = vpack.c.bf16 %v3362, %v3361
        %s3364 = scalar_lea.vmem [#allocation6], 640
        %v3365 = vld [vmem:[%s3364] sm:$0xff]
        %v3366 = vld [vmem:[%s3364 + $0x8] sm:$0xff]
        %v3367 = vld [vmem:[%s3364 + $0x10] sm:$0xff]
        %v3368 = vld [vmem:[%s3364 + $0x18] sm:$0xff]
        %v3369 = vld [vmem:[%s3364 + $0x20] sm:$0xff]
        %v3370 = vld [vmem:[%s3364 + $0x28] sm:$0xff]
        %v3371 = vld [vmem:[%s3364 + $0x30] sm:$0xff]
        %v3372 = vld [vmem:[%s3364 + $0x38] sm:$0xff]
        %v3373 = vld [vmem:[%s3364 + $0x40] sm:$0xff]
        %v3374 = vld [vmem:[%s3364 + $0x48] sm:$0xff]
        %v3375 = vld [vmem:[%s3364 + $0x50] sm:$0xff]
        %v3376 = vld [vmem:[%s3364 + $0x58] sm:$0xff]
        %v3377 = vld [vmem:[%s3364 + $0x60] sm:$0xff]
        %v3378 = vld [vmem:[%s3364 + $0x68] sm:$0xff]
        %v3379 = vld [vmem:[%s3364 + $0x70] sm:$0xff]
        %v3380 = vld [vmem:[%s3364 + $0x78] sm:$0xff]
        %s3381 = scalar_lea.vmem %s7, 10
        %v3382 = vld [vmem:[%s3381] sm:$0x3]
        %v3384 = vlaneseq
        %v3385 = vshrl.u32 %v3384, 7
        %v3386 = vsub.s32 0, %v3385
        %v3387 = vrot.slane %v3382, %v3386
        %v3405 = vunpack.c.l.b16 %v3365
        %v3406 = vunpack.c.h.b16 %v3365
        %v3407 = vunpack.c.l.b16 %v3366
        %v3408 = vunpack.c.h.b16 %v3366
        %v3409 = vunpack.c.l.b16 %v3367
        %v3410 = vunpack.c.h.b16 %v3367
        %v3411 = vunpack.c.l.b16 %v3368
        %v3412 = vunpack.c.h.b16 %v3368
        %v3413 = vunpack.c.l.b16 %v3369
        %v3414 = vunpack.c.h.b16 %v3369
        %v3415 = vunpack.c.l.b16 %v3370
        %v3416 = vunpack.c.h.b16 %v3370
        %v3417 = vunpack.c.l.b16 %v3371
        %v3418 = vunpack.c.h.b16 %v3371
        %v3419 = vunpack.c.l.b16 %v3372
        %v3420 = vunpack.c.h.b16 %v3372
        %v3421 = vunpack.c.l.b16 %v3373
        %v3422 = vunpack.c.h.b16 %v3373
        %v3423 = vunpack.c.l.b16 %v3374
        %v3424 = vunpack.c.h.b16 %v3374
        %v3425 = vunpack.c.l.b16 %v3375
        %v3426 = vunpack.c.h.b16 %v3375
        %v3427 = vunpack.c.l.b16 %v3376
        %v3428 = vunpack.c.h.b16 %v3376
        %v3429 = vunpack.c.l.b16 %v3377
        %v3430 = vunpack.c.h.b16 %v3377
        %v3431 = vunpack.c.l.b16 %v3378
        %v3432 = vunpack.c.h.b16 %v3378
        %v3433 = vunpack.c.l.b16 %v3379
        %v3434 = vunpack.c.h.b16 %v3379
        %v3435 = vunpack.c.l.b16 %v3380
        %v3436 = vunpack.c.h.b16 %v3380
        %v3437 = vpack.c.b16 %v3407, %v3405
        %v3438 = vpack.c.b16 %v3408, %v3406
        %v3439 = vpack.c.b16 %v3411, %v3409
        %v3440 = vpack.c.b16 %v3412, %v3410
        %v3441 = vpack.c.b16 %v3415, %v3413
        %v3442 = vpack.c.b16 %v3416, %v3414
        %v3443 = vpack.c.b16 %v3419, %v3417
        %v3444 = vpack.c.b16 %v3420, %v3418
        %v3445 = vpack.c.b16 %v3423, %v3421
        %v3446 = vpack.c.b16 %v3424, %v3422
        %v3447 = vpack.c.b16 %v3427, %v3425
        %v3448 = vpack.c.b16 %v3428, %v3426
        %v3449 = vpack.c.b16 %v3431, %v3429
        %v3450 = vpack.c.b16 %v3432, %v3430
        %v3451 = vpack.c.b16 %v3435, %v3433
        %v3452 = vpack.c.b16 %v3436, %v3434
        %3469 = vmatprep.subr.bf16.mxu0 %v3452
        %3470 = vmatpush1.bf16.msra.mxu0 %v3451
        %3471 = vmatprep.subr.bf16.mxu0 %v3450
        %3472 = vmatpush1.bf16.msra.mxu0 %v3449
        %3473 = vmatprep.subr.bf16.mxu0 %v3448
        %3474 = vmatpush1.bf16.msra.mxu0 %v3447
        %3475 = vmatprep.subr.bf16.mxu0 %v3446
        %3476 = vmatpush1.bf16.msra.mxu0 %v3445
        %3477 = vmatprep.subr.bf16.mxu0 %v3444
        %3478 = vmatpush1.bf16.msra.mxu0 %v3443
        %3479 = vmatprep.subr.bf16.mxu0 %v3442
        %3480 = vmatpush1.bf16.msra.mxu0 %v3441
        %3481 = vmatprep.subr.bf16.mxu0 %v3440
        %3482 = vmatpush1.bf16.msra.mxu0 %v3439
        %3483 = vmatprep.subr.bf16.mxu0 %v3438
        %3484 = vmatpush1.bf16.msra.mxu0 %v3437
        %3485 = vmatprep.subr.bf16.mxu0 0
        %3486 = vmatpush2.bf16.msra.mxu0 0
        %3487 = vmatprep.subr.bf16.mxu0 0
        %3488 = vmatpush2.bf16.msra.mxu0 0
        %3489 = vmatprep.subr.bf16.mxu0 0
        %3490 = vmatpush2.bf16.msra.mxu0 0
        %3491 = vmatprep.subr.bf16.mxu0 0
        %3492 = vmatpush2.bf16.msra.mxu0 0
        %3493 = vmatprep.subr.bf16.mxu0 0
        %3494 = vmatpush2.bf16.msra.mxu0 0
        %3495 = vmatprep.subr.bf16.mxu0 0
        %3496 = vmatpush2.bf16.msra.mxu0 0
        %3497 = vmatprep.subr.bf16.mxu0 0
        %3498 = vmatpush2.bf16.msra.mxu0 0
        %3499 = vmatprep.subr.bf16.mxu0 0
        %3500 = vmatpush2.bf16.msra.mxu0 0
        %3501 = vmatprep.mubr.bf16.mxu0 0
        %3502 = vmatmul.mubr.bf16.gmra.mxu0 %v3363
        %v3503 = vpop.f32.mrf.mxu0
        %v3504 = vadd.f32 %v3387, %v3503
        %v3505 = vpop.f32.mrf.mxu0
        %v3506 = vpop.f32.mrf.mxu0
        %v3507 = vadd.f32 %v3387, %v3506
        %v3508 = vpop.f32.mrf.mxu0
        %3509 = vdwg.mxu0
        %v3510 = vadd.f32 %v3038, %v3504
        %v3511 = vadd.f32 %v3039, %v3507
        %v3512 = vmul.f32 %v3510, 0.5
        %v3513 = vmul.f32 %v3511, 0.5
        %v3514 = vmul.f32 %v3510, 0.70710677
        %v3515 = vmul.f32 %v3511, 0.70710677
        %v3516 = verf.f32.pop %v3514
        %v3517 = verf.f32.pop %v3515
        %v3518 = vadd.f32 %v3516, 1.0
        %v3519 = vadd.f32 %v3517, 1.0
        %v3520 = vmul.f32 %v3512, %v3518
        %v3521 = vmul.f32 %v3513, %v3519
        %v3522 = vpack.c.bf16 %v3521, %v3520
        %v3523 = vld [vmem:[#allocation7] sm:$0xf]
        %v3524 = vld [vmem:[#allocation7 + $0x4] sm:$0xf]
        %v3525 = vld [vmem:[#allocation7 + $0x8] sm:$0xf]
        %v3526 = vld [vmem:[#allocation7 + $0xc] sm:$0xf]
        %v3527 = vld [vmem:[#allocation7 + $0x10] sm:$0xf]
        %v3528 = vld [vmem:[#allocation7 + $0x14] sm:$0xf]
        %v3529 = vld [vmem:[#allocation7 + $0x18] sm:$0xf]
        %v3530 = vld [vmem:[#allocation7 + $0x1c] sm:$0xf]
        %v3531 = vld [vmem:[#allocation7 + $0x20] sm:$0xf]
        %v3532 = vld [vmem:[#allocation7 + $0x24] sm:$0xf]
        %v3533 = vld [vmem:[#allocation7 + $0x28] sm:$0xf]
        %v3534 = vld [vmem:[#allocation7 + $0x2c] sm:$0xf]
        %v3535 = vld [vmem:[#allocation7 + $0x30] sm:$0xf]
        %v3536 = vld [vmem:[#allocation7 + $0x34] sm:$0xf]
        %v3537 = vld [vmem:[#allocation7 + $0x38] sm:$0xf]
        %v3538 = vld [vmem:[#allocation7 + $0x3c] sm:$0xf]
        %v3539 = vld [vmem:[%s9] sm:$0x1]
        %v3541 = vlaneseq
        %v3542 = vshrl.u32 %v3541, 7
        %v3543 = vsub.s32 0, %v3542
        %v3544 = vrot.slane %v3539, %v3543
        %v3562 = vunpack.c.l.b16 %v3523
        %v3563 = vunpack.c.l.b16 %v3524
        %v3564 = vunpack.c.l.b16 %v3525
        %v3565 = vunpack.c.l.b16 %v3526
        %v3566 = vunpack.c.l.b16 %v3527
        %v3567 = vunpack.c.l.b16 %v3528
        %v3568 = vunpack.c.l.b16 %v3529
        %v3569 = vunpack.c.l.b16 %v3530
        %v3570 = vunpack.c.l.b16 %v3531
        %v3571 = vunpack.c.l.b16 %v3532
        %v3572 = vunpack.c.l.b16 %v3533
        %v3573 = vunpack.c.l.b16 %v3534
        %v3574 = vunpack.c.l.b16 %v3535
        %v3575 = vunpack.c.l.b16 %v3536
        %v3576 = vunpack.c.l.b16 %v3537
        %v3577 = vunpack.c.l.b16 %v3538
        %v3578 = vpack.c.b16 %v3563, %v3562
        %v3579 = vpack.c.b16 %v3565, %v3564
        %v3580 = vpack.c.b16 %v3567, %v3566
        %v3581 = vpack.c.b16 %v3569, %v3568
        %v3582 = vpack.c.b16 %v3571, %v3570
        %v3583 = vpack.c.b16 %v3573, %v3572
        %v3584 = vpack.c.b16 %v3575, %v3574
        %v3585 = vpack.c.b16 %v3577, %v3576
        %3594 = vmatprep.subr.bf16.mxu0 0
        %3595 = vmatpush1.bf16.msra.mxu0 %v3585
        %3596 = vmatprep.subr.bf16.mxu0 0
        %3597 = vmatpush1.bf16.msra.mxu0 %v3584
        %3598 = vmatprep.subr.bf16.mxu0 0
        %3599 = vmatpush1.bf16.msra.mxu0 %v3583
        %3600 = vmatprep.subr.bf16.mxu0 0
        %3601 = vmatpush1.bf16.msra.mxu0 %v3582
        %3602 = vmatprep.subr.bf16.mxu0 0
        %3603 = vmatpush1.bf16.msra.mxu0 %v3581
        %3604 = vmatprep.subr.bf16.mxu0 0
        %3605 = vmatpush1.bf16.msra.mxu0 %v3580
        %3606 = vmatprep.subr.bf16.mxu0 0
        %3607 = vmatpush1.bf16.msra.mxu0 %v3579
        %3608 = vmatprep.subr.bf16.mxu0 0
        %3609 = vmatpush1.bf16.msra.mxu0 %v3578
        %3610 = vmatprep.subr.bf16.mxu0 0
        %3611 = vmatpush2.bf16.msra.mxu0 0
        %3612 = vmatprep.subr.bf16.mxu0 0
        %3613 = vmatpush2.bf16.msra.mxu0 0
        %3614 = vmatprep.subr.bf16.mxu0 0
        %3615 = vmatpush2.bf16.msra.mxu0 0
        %3616 = vmatprep.subr.bf16.mxu0 0
        %3617 = vmatpush2.bf16.msra.mxu0 0
        %3618 = vmatprep.subr.bf16.mxu0 0
        %3619 = vmatpush2.bf16.msra.mxu0 0
        %3620 = vmatprep.subr.bf16.mxu0 0
        %3621 = vmatpush2.bf16.msra.mxu0 0
        %3622 = vmatprep.subr.bf16.mxu0 0
        %3623 = vmatpush2.bf16.msra.mxu0 0
        %3624 = vmatprep.subr.bf16.mxu0 0
        %3625 = vmatpush2.bf16.msra.mxu0 0
        %3626 = vmatprep.mubr.bf16.mxu0 0
        %3627 = vmatmul.mubr.bf16.gmra.mxu0 %v3522
        %v3628 = vpop.f32.mrf.mxu0
        %v3629 = vadd.f32 %v3544, %v3628
        %v3630 = vpop.f32.mrf.mxu0
        %v3631 = vpop.f32.mrf.mxu0
        %v3632 = vadd.f32 %v3544, %v3631
        %v3633 = vpop.f32.mrf.mxu0
        %3634 = vdwg.mxu0
        %v3635 = vmul.f32 %v3629, 0.5
        %v3636 = vmul.f32 %v3632, 0.5
        %v3637 = vmul.f32 %v3629, 0.70710677
        %v3638 = vmul.f32 %v3632, 0.70710677
        %v3639 = verf.f32.pop %v3637
        %v3640 = verf.f32.pop %v3638
        %v3641 = vadd.f32 %v3639, 1.0
        %v3642 = vadd.f32 %v3640, 1.0
        %v3643 = vmul.f32 %v3635, %v3641
        %v3644 = vmul.f32 %v3636, %v3642
        %v3645 = vpack.c.bf16 %v3644, %v3643
        %v3646 = vld [vmem:[#allocation9] sm:$0xf]
        %v3647 = vld [vmem:[#allocation9 + $0x4] sm:$0xf]
        %v3648 = vld [vmem:[#allocation9 + $0x8] sm:$0xf]
        %v3649 = vld [vmem:[#allocation9 + $0xc] sm:$0xf]
        %v3650 = vld [vmem:[#allocation9 + $0x10] sm:$0xf]
        %v3651 = vld [vmem:[#allocation9 + $0x14] sm:$0xf]
        %v3652 = vld [vmem:[#allocation9 + $0x18] sm:$0xf]
        %v3653 = vld [vmem:[#allocation9 + $0x1c] sm:$0xf]
        %v3654 = vld [vmem:[#allocation9 + $0x20] sm:$0xf]
        %v3655 = vld [vmem:[#allocation9 + $0x24] sm:$0xf]
        %v3656 = vld [vmem:[#allocation9 + $0x28] sm:$0xf]
        %v3657 = vld [vmem:[#allocation9 + $0x2c] sm:$0xf]
        %v3658 = vld [vmem:[#allocation9 + $0x30] sm:$0xf]
        %v3659 = vld [vmem:[#allocation9 + $0x34] sm:$0xf]
        %v3660 = vld [vmem:[#allocation9 + $0x38] sm:$0xf]
        %v3661 = vld [vmem:[#allocation9 + $0x3c] sm:$0xf]
        %v3662 = vld [vmem:[%s11] sm:$0x1]
        %v3664 = vlaneseq
        %v3665 = vshrl.u32 %v3664, 7
        %v3666 = vsub.s32 0, %v3665
        %v3667 = vrot.slane %v3662, %v3666
        %v3685 = vunpack.c.l.b16 %v3646
        %v3686 = vunpack.c.l.b16 %v3647
        %v3687 = vunpack.c.l.b16 %v3648
        %v3688 = vunpack.c.l.b16 %v3649
        %v3689 = vunpack.c.l.b16 %v3650
        %v3690 = vunpack.c.l.b16 %v3651
        %v3691 = vunpack.c.l.b16 %v3652
        %v3692 = vunpack.c.l.b16 %v3653
        %v3693 = vunpack.c.l.b16 %v3654
        %v3694 = vunpack.c.l.b16 %v3655
        %v3695 = vunpack.c.l.b16 %v3656
        %v3696 = vunpack.c.l.b16 %v3657
        %v3697 = vunpack.c.l.b16 %v3658
        %v3698 = vunpack.c.l.b16 %v3659
        %v3699 = vunpack.c.l.b16 %v3660
        %v3700 = vunpack.c.l.b16 %v3661
        %v3701 = vpack.c.b16 %v3686, %v3685
        %v3702 = vpack.c.b16 %v3688, %v3687
        %v3703 = vpack.c.b16 %v3690, %v3689
        %v3704 = vpack.c.b16 %v3692, %v3691
        %v3705 = vpack.c.b16 %v3694, %v3693
        %v3706 = vpack.c.b16 %v3696, %v3695
        %v3707 = vpack.c.b16 %v3698, %v3697
        %v3708 = vpack.c.b16 %v3700, %v3699
        %3717 = vmatprep.subr.bf16.mxu0 0
        %3718 = vmatpush1.bf16.msra.mxu0 %v3708
        %3719 = vmatprep.subr.bf16.mxu0 0
        %3720 = vmatpush1.bf16.msra.mxu0 %v3707
        %3721 = vmatprep.subr.bf16.mxu0 0
        %3722 = vmatpush1.bf16.msra.mxu0 %v3706
        %3723 = vmatprep.subr.bf16.mxu0 0
        %3724 = vmatpush1.bf16.msra.mxu0 %v3705
        %3725 = vmatprep.subr.bf16.mxu0 0
        %3726 = vmatpush1.bf16.msra.mxu0 %v3704
        %3727 = vmatprep.subr.bf16.mxu0 0
        %3728 = vmatpush1.bf16.msra.mxu0 %v3703
        %3729 = vmatprep.subr.bf16.mxu0 0
        %3730 = vmatpush1.bf16.msra.mxu0 %v3702
        %3731 = vmatprep.subr.bf16.mxu0 0
        %3732 = vmatpush1.bf16.msra.mxu0 %v3701
        %3733 = vmatprep.subr.bf16.mxu0 0
        %3734 = vmatpush2.bf16.msra.mxu0 0
        %3735 = vmatprep.subr.bf16.mxu0 0
        %3736 = vmatpush2.bf16.msra.mxu0 0
        %3737 = vmatprep.subr.bf16.mxu0 0
        %3738 = vmatpush2.bf16.msra.mxu0 0
        %3739 = vmatprep.subr.bf16.mxu0 0
        %3740 = vmatpush2.bf16.msra.mxu0 0
        %3741 = vmatprep.subr.bf16.mxu0 0
        %3742 = vmatpush2.bf16.msra.mxu0 0
        %3743 = vmatprep.subr.bf16.mxu0 0
        %3744 = vmatpush2.bf16.msra.mxu0 0
        %3745 = vmatprep.subr.bf16.mxu0 0
        %3746 = vmatpush2.bf16.msra.mxu0 0
        %3747 = vmatprep.subr.bf16.mxu0 0
        %3748 = vmatpush2.bf16.msra.mxu0 0
        %3749 = vmatprep.mubr.bf16.mxu0 0
        %3750 = vmatmul.mubr.bf16.gmra.mxu0 %v3645
        %v3751 = vpop.f32.mrf.mxu0
        %v3752 = vadd.f32 %v3667, %v3751
        %v3753 = vpop.f32.mrf.mxu0
        %v3754 = vpop.f32.mrf.mxu0
        %v3755 = vadd.f32 %v3667, %v3754
        %v3756 = vpop.f32.mrf.mxu0
        %3757 = vdwg.mxu0
        %v3758 = vadd.f32 %v3752, %v3755
        %v3759 = vrot.slane %v3758, 4
        %v3760 = vadd.f32 %v3758, %v3759
        %v3761 = vrot.slane %v3760, 2
        %v3762 = vadd.f32 %v3760, %v3761
        %v3763 = vrot.slane %v3762, 1
        %v3764 = vadd.f32 %v3762, %v3763
        %v3765 = vrcp.pop 16.0
        %v3766 = vmul.f32 %v3764, %v3765
        %3767 = vst [vmem:[%s482] sm:$0x1] %v3766
        %p3768 = scmp.lt.s32.totalorder %s26, 1
        %s3769 = scalar_select %p3768, %s26, 1
        %s3770 = scalar_lea.vmem %s12, %s3769
        // Predicated region
        $region89: #{quantum_wavenet_forward.1} parent=67 // pred_check
          %p3771 = pneg %p301
        $region90: #{quantum_wavenet_forward.1} parent=67 // pred_check_branch
          %3773 = sbr.rel (%p3771) target = $region92
        $region91: #{quantum_wavenet_forward.1} parent=67 // pred_region
          _
        $region92: #{quantum_wavenet_forward.1} parent=67 // pred_fallthru
          _
      $region68: #{quantum_wavenet_forward.1} parent=5 // pred_fallthru
        _
      %p3774 = scmp.le.s32.totalorder 2, %s21
      // Predicated region
      $region93: #{quantum_wavenet_forward.1} parent=5 // pred_check
        %p3775 = pneg %p3774
      $region94: #{quantum_wavenet_forward.1} parent=5 // pred_check_branch
        %3777 = sbr.rel (%p3775) target = $region96
      $region95: #{quantum_wavenet_forward.1} parent=5 // pred_region
        %s3778 = ssub.s32 %s21, 2
        // Predicated region
        $region97: #{quantum_wavenet_forward.1} parent=95 // pred_check
          %p3779 = pneg %p307
        $region98: #{quantum_wavenet_forward.1} parent=95 // pred_check_branch
          %3781 = sbr.rel (%p3779) target = $region100
        $region99: #{quantum_wavenet_forward.1} parent=95 // pred_region
          %p3782 = scmp.lt.s32.totalorder %s27, 1
          %s3783 = scalar_select %p3782, %s27, 1
          %s3784 = scalar_lea.vmem %s12, %s3783
        $region100: #{quantum_wavenet_forward.1} parent=95 // pred_fallthru
          _
      $region96: #{quantum_wavenet_forward.1} parent=5 // pred_fallthru
        _
    $region6: #{quantum_wavenet_forward.1} parent=1 // loop_footer
      %s25 = sadd.s32 1, %s21
    $region7: #{quantum_wavenet_forward.1} parent=1 // loop_footer_branch
      %20 = sbr.rel target = $region3
    $region8: #{quantum_wavenet_forward.1} parent=1 // loop_exit
      _
    %3785 = vsyncpa [#allocation3], 1
    %s3786 = scalar_lea.sflag [#allocation3], 1
    %3787 = vsyncpa %s3786, 1
    %3788 = vsyncpa [#allocation5], 1
    %3789 = vsyncpa [#allocation8], 1

</llo_original>
